<compile_context>
chip_gen: v7x
topology: tpu7x:2x2x1
jax: 0.10.0
libtpu: 0.0.40
codegen_flags: <defaults>
</compile_context>

<pallas_src>
import functools
import math

import jax
import jax.numpy as jnp
import numpy as np
from jax import lax
from jax.experimental import pallas as pl
from jax.experimental.pallas import tpu as pltpu

_INV_SQRT2 = 0.7071067811865476
_BN_EPS = 1e-5


def _derive_vmem_limit():
    # ~3/4 of physical VMEM: ~48 MiB on v7x (64 MiB), ~96 MiB on v5e/v6e (128 MiB).
    try:
        cap = getattr(pltpu.get_tpu_info(), "vmem_capacity_bytes", None)
        if cap:
            return int(cap) * 3 // 4
    except Exception:
        pass
    return None  # fall back to the default scoped limit (blocks are sized small)


_VMEM_LIMIT = _derive_vmem_limit()


def _gelu(z):
    # exact GELU (torch nn.GELU default): 0.5*z*(1+erf(z/sqrt(2)))
    return 0.5 * z * (1.0 + lax.erf(z * _INV_SQRT2))


def _divisors_desc(n):
    return [d for d in range(n, 0, -1) if n % d == 0]


def _pick_row_tile(rows, bytes_per_row, other_steps, halo=2,
                   target_bytes=4 << 20, min_total_steps=4):
    """Largest row tile (divisor of `rows`) fitting the byte budget that still
    leaves >= min_total_steps grid steps (megacore / pipelining)."""
    cands = [t for t in _divisors_desc(rows)
             if (t + halo) * bytes_per_row <= target_bytes] or [1]
    for t in cands:
        if other_steps * (rows // t) >= min_total_steps:
            return t
    return cands[-1]


def _pick_tile(rows, bytes_per_row, target_bytes=8 << 20, max_tile=4096,
               min_steps=4):
    cands = [t for t in _divisors_desc(rows)
             if (t % 8 == 0 or t == rows)
             and t <= max_tile and t * bytes_per_row <= target_bytes]
    if not cands:
        cands = [t for t in _divisors_desc(rows)
                 if t * bytes_per_row <= target_bytes] or [1]
    for t in cands:
        if rows // t >= min_steps:
            return t
    return cands[-1]


# ----------------------------- Pallas kernels ------------------------------ #

def _tconv_kernel(xw_ref, w_ref, y_ref, sum_ref, sq_ref, *, w_img, tr):
    """Fused transposed convs (uconv || UpBlock.shortcut), one column parity pw.

    xw_ref : (1, 1, (tr+2)*W, 2*Cin) bf16  width-tap packed, row block w/ halo 2
    w_ref  : (1, 4, 2*Cin, 2*Cout)   bf16  weights, index = 2*ph + dh
    y_ref  : (1, 1, 2*tr*W, 2*Cout)  bf16  rows [0:hw)=ph0, [hw:2hw)=ph1
    sum/sq : (1, 1, 1, 2*Cout)       f32   per-tile partial BN stats (packed)
    """
    hw = tr * w_img
    ts = None
    tq = None
    for ph in range(2):                      # both output-row parities, one block
        acc = jnp.dot(xw_ref[0, 0, pl.ds(ph * w_img, hw), :], w_ref[0, 2 * ph],
                      preferred_element_type=jnp.float32)
        acc = acc + jnp.dot(xw_ref[0, 0, pl.ds((ph + 1) * w_img, hw), :],
                            w_ref[0, 2 * ph + 1],
                            preferred_element_type=jnp.float32)
        y_ref[0, 0, pl.ds(ph * hw, hw), :] = acc.astype(y_ref.dtype)
        s = jnp.sum(acc, axis=0, keepdims=True)
        q = jnp.sum(acc * acc, axis=0, keepdims=True)
        ts = s if ts is None else ts + s
        tq = q if tq is None else tq + q
    sum_ref[0, 0] = ts
    sq_ref[0, 0] = tq


def _conv3x3_kernel(xw_ref, w_ref, y_ref, sum_ref, sq_ref, *, wo, hw, apply_gelu):
    """3x3 conv on a row block: width taps pre-packed, height taps in-kernel.

    xw_ref : (1, (tr+2)*Wo, 3*Cin) bf16  (BN-affined, zero-padded activations)
    w_ref  : (3, 3*Cin, Cout)      bf16  per-height-tap weight matrices
    y_ref  : (1, tr*Wo, Cout)      bf16  raw conv output (bias cancelled by BN)
    sum/sq : (1, 1, Cout)          f32   per-tile partial BN stats
    """
    if apply_gelu:
        # GELU of the previous stage fused here; gelu(0)=0 keeps padding exact.
        a = _gelu(xw_ref[0, :, :].astype(jnp.float32)).astype(jnp.bfloat16)
        taps = [a[kh * wo:kh * wo + hw, :] for kh in range(3)]
    else:
        taps = [xw_ref[0, pl.ds(kh * wo, hw), :] for kh in range(3)]
    acc = jnp.dot(taps[0], w_ref[0], preferred_element_type=jnp.float32)
    acc = acc + jnp.dot(taps[1], w_ref[1], preferred_element_type=jnp.float32)
    acc = acc + jnp.dot(taps[2], w_ref[2], preferred_element_type=jnp.float32)
    y_ref[0] = acc.astype(y_ref.dtype)
    sum_ref[0] = jnp.sum(acc, axis=0, keepdims=True)
    sq_ref[0] = jnp.sum(acc * acc, axis=0, keepdims=True)


def _final_kernel(y3_ref, z1_ref, s2_ref, sc_ref, sh_ref, w_ref, b_ref, o_ref):
    """out = GELU(BN(conv2)) + gelu(z1) @ W_1x1 + tconv_shortcut + biases."""
    z3 = y3_ref[...].astype(jnp.float32) * sc_ref[...] + sh_ref[...]
    u = _gelu(z1_ref[...].astype(jnp.float32)).astype(jnp.bfloat16)
    short1 = jnp.dot(u, w_ref[...], preferred_element_type=jnp.float32)
    o_ref[...] = _gelu(z3) + short1 + s2_ref[...].astype(jnp.float32) + b_ref[...]


# ----------------------------- Pallas wrappers ------------------------------ #

def tconv_pallas(xw2, wmats, nb, tr, w_img, cout):
    rows_in, k2 = xw2.shape[2], xw2.shape[3]
    c2 = 2 * cout
    hw = tr * w_img
    kernel = functools.partial(_tconv_kernel, w_img=w_img, tr=tr)
    x_spec = pl.BlockSpec((1, 1, rows_in, k2), lambda pw, b: (pw, b, 0, 0))
    w_spec = pl.BlockSpec((1, 4, k2, c2), lambda pw, b: (pw, 0, 0, 0))
    y_spec = pl.BlockSpec((1, 1, 2 * hw, c2), lambda pw, b: (pw, b, 0, 0))
    s_spec = pl.BlockSpec((1, 1, 1, c2), lambda pw, b: (pw, b, 0, 0))
    return pl.pallas_call(
        kernel,
        out_shape=(jax.ShapeDtypeStruct((2, nb, 2 * hw, c2), jnp.bfloat16),
                   jax.ShapeDtypeStruct((2, nb, 1, c2), jnp.float32),
                   jax.ShapeDtypeStruct((2, nb, 1, c2), jnp.float32)),
        grid_spec=pltpu.PrefetchScalarGridSpec(
            num_scalar_prefetch=0, grid=(2, nb),
            in_specs=[x_spec, w_spec],
            out_specs=(y_spec, s_spec, s_spec)),
        compiler_params=pltpu.CompilerParams(
            dimension_semantics=("parallel", "parallel"),
            vmem_limit_bytes=_VMEM_LIMIT),
    )(xw2, wmats)


def conv3x3_pallas(xw, wmats, nb, tr, wo, cout, apply_gelu):
    rows_in, k3 = xw.shape[1], xw.shape[2]
    hw = tr * wo
    kernel = functools.partial(_conv3x3_kernel, wo=wo, hw=hw,
                               apply_gelu=apply_gelu)
    return pl.pallas_call(
        kernel,
        out_shape=(jax.ShapeDtypeStruct((nb, hw, cout), jnp.bfloat16),
                   jax.ShapeDtypeStruct((nb, 1, cout), jnp.float32),
                   jax.ShapeDtypeStruct((nb, 1, cout), jnp.float32)),
        grid_spec=pltpu.PrefetchScalarGridSpec(
            num_scalar_prefetch=0, grid=(nb,),
            in_specs=[pl.BlockSpec((1, rows_in, k3), lambda b: (b, 0, 0)),
                      pl.BlockSpec((3, k3, cout), lambda b: (0, 0, 0))],
            out_specs=(pl.BlockSpec((1, hw, cout), lambda b: (b, 0, 0)),
                       pl.BlockSpec((1, 1, cout), lambda b: (b, 0, 0)),
                       pl.BlockSpec((1, 1, cout), lambda b: (b, 0, 0)))),
        compiler_params=pltpu.CompilerParams(
            dimension_semantics=("parallel",),
            vmem_limit_bytes=_VMEM_LIMIT),
    )(xw, wmats)


def final_fuse_pallas(y3, z1, s2, scale, shift, w_sc, bias):
    m, c = y3.shape
    bytes_per_row = c * (2 + 2 + 2 + 4) + 16
    tm = _pick_tile(m, bytes_per_row)
    row = pl.BlockSpec((tm, c), lambda i: (i, 0))
    vec = pl.BlockSpec((1, c), lambda i: (0, 0))
    wsp = pl.BlockSpec(w_sc.shape, lambda i: (0, 0))
    return pl.pallas_call(
        _final_kernel,
        out_shape=jax.ShapeDtypeStruct((m, c), jnp.float32),
        grid_spec=pltpu.PrefetchScalarGridSpec(
            num_scalar_prefetch=0, grid=(m // tm,),
            in_specs=[row, row, row, vec, vec, wsp, vec],
            out_specs=row),
        compiler_params=pltpu.CompilerParams(
            dimension_semantics=("parallel",),
            vmem_limit_bytes=_VMEM_LIMIT),
    )(y3, z1, s2, scale.reshape(1, c), shift.reshape(1, c), w_sc,
      bias.reshape(1, c).astype(jnp.float32))


# ----------------------------- BN statistics -------------------------------- #

def _bn_scale_shift(sum_parts, sq_parts, count, gamma, beta):
    c = sum_parts.shape[-1]
    s = jnp.sum(sum_parts.reshape(-1, c), axis=0)
    q = jnp.sum(sq_parts.reshape(-1, c), axis=0)
    mean = s / count
    # single-pass E[x^2]-E[x]^2 in f32; clamp guards cancellation.
    var = jnp.maximum(q / count - mean * mean, 0.0)
    rstd = lax.rsqrt(var + _BN_EPS)
    scale = gamma * rstd
    shift = beta - mean * scale
    return scale, shift


# ----------------------------- JAX-side layout glue ------------------------- #

def _row_blocks(a, tr, halo):
    """[N, R, W, C] -> [N*NB, (tr+halo)*W, C] overlapping row blocks (halo rows
    duplicated; tr is chosen large enough that the overlap is small)."""
    n, r, w, c = a.shape
    nb = (r - halo) // tr
    blocks = [a[:, i * tr:i * tr + tr + halo] for i in range(nb)]
    out = jnp.stack(blocks, axis=1)                     # [N, NB, tr+halo, W, C]
    return out.reshape(n * nb, (tr + halo) * w, c)


def _tconv_inputs(x_bf16, tr):
    """2-width-tap packed, row-blocked tconv input: [2(pw), N*RB, (tr+2)*W, 2Cin]."""
    n, h, w, cin = x_bf16.shape
    xp = jnp.pad(x_bf16, ((0, 0), (1, 1), (1, 1), (0, 0)))
    per_pw = []
    for pw in (0, 1):
        w2 = jnp.concatenate([xp[:, :, pw:pw + w, :],
                              xp[:, :, pw + 1:pw + 1 + w, :]], axis=-1)
        per_pw.append(_row_blocks(w2, tr, 2))
    return jnp.stack(per_pw, axis=0)


def _tconv_wmats(w_u, w_s):
    """[Cin,Cout,4,4] x2 -> [2(pw), 4(=2*ph+dh), 2*Cin, 2*Cout] bf16 (uconv||shortcut)."""
    def tap(w, ph, pw, dh):
        return jnp.concatenate([w[:, :, 3 - (ph + 2 * dh), 3 - (pw + 2 * dw)]
                                for dw in (0, 1)], axis=0)        # [2Cin, Cout]
    per_pw = []
    for pw in (0, 1):
        mats = [jnp.concatenate([tap(w_u, ph, pw, dh), tap(w_s, ph, pw, dh)],
                                axis=1)
                for ph in (0, 1) for dh in (0, 1)]                # [2Cin, 2Cout]
        per_pw.append(jnp.stack(mats, axis=0))
    return jnp.stack(per_pw, axis=0).astype(jnp.bfloat16)


def _packed_phases_to_image(y_pk, n, rb, tr, w_img, c2):
    """[2(pw), N*RB, 2*tr*W, c2] -> [N, 2H, 2W, c2]."""
    t = y_pk.reshape(2, n, rb, 2, tr, w_img, c2)      # (pw, n, rb, ph, i, j, c)
    t = jnp.transpose(t, (1, 2, 4, 3, 5, 0, 6))       # (n, rb, i, ph, j, pw, c)
    return t.reshape(n, rb * tr * 2, w_img * 2, c2)


def _conv3x3_inputs(img_bf16, tr):
    """[N, Ho, Wo, C] -> [N*RB, (tr+2)*Wo, 3*C] width-im2col'd, row-blocked."""
    n, hh, ww, c = img_bf16.shape
    xp = jnp.pad(img_bf16, ((0, 0), (1, 1), (1, 1), (0, 0)))
    xw = jnp.concatenate([xp[:, :, kw:kw + ww, :] for kw in range(3)], axis=-1)
    return _row_blocks(xw, tr, 2)


def _conv3x3_wmats(w):
    """Conv2d weight [Cout, Cin, 3, 3] -> per-height-tap [3, 3*Cin, Cout]."""
    mats = []
    for kh in range(3):
        rows = [w[:, :, kh, kw].T for kw in range(3)]             # [Cin, Cout]
        mats.append(jnp.concatenate(rows, axis=0))
    return jnp.stack(mats, axis=0).astype(jnp.bfloat16)


# ----------------------------- UpBlock forward ------------------------------ #

def upblock_forward(x_nchw, p):
    x = jnp.transpose(x_nchw, (0, 2, 3, 1)).astype(jnp.bfloat16)   # NHWC bf16
    n, h, w, cin = x.shape
    ho, wo = 2 * h, 2 * w
    cout = p["uconv_w"].shape[1]
    m = n * ho * wo

    # --- stage 1: fused transposed convs (uconv + UpBlock.shortcut), row-tiled
    tr1 = _pick_row_tile(h, w * (2 * cin) * 2, other_steps=2 * n)
    rb1 = h // tr1
    y12, t_sum, t_sq = tconv_pallas(
        _tconv_inputs(x, tr1), _tconv_wmats(p["uconv_w"], p["up_sc_w"]),
        n * rb1, tr1, w, cout)

    sc1, sh1 = _bn_scale_shift(t_sum[..., :cout], t_sq[..., :cout], m,
                               p["uconv_bn_g"], p["uconv_bn_b"])
    img12 = _packed_phases_to_image(y12, n, rb1, tr1, w, 2 * cout)  # [N,Ho,Wo,2C]
    # BN affine of the uconv half (XLA fuses it into the im2col build below);
    # GELU itself happens inside the conv1 / final kernels.
    z1_img = (img12[..., :cout].astype(jnp.float32) * sc1 + sh1).astype(jnp.bfloat16)
    s2_flat = img12[..., cout:].reshape(m, cout)                    # bf16, no bias

    # --- stage 2: ConvBlock.conv1 (3x3), uconv's GELU fused into its input path
    tr2 = _pick_row_tile(ho, wo * (3 * cout) * 2, other_steps=n)
    rb2 = ho // tr2
    y2, c_sum, c_sq = conv3x3_pallas(_conv3x3_inputs(z1_img, tr2),
                                     _conv3x3_wmats(p["conv1_w"]),
                                     n * rb2, tr2, wo, cout, apply_gelu=True)
    sc2, sh2 = _bn_scale_shift(c_sum, c_sq, m, p["conv1_bn_g"], p["conv1_bn_b"])

    # --- stage 3: ConvBlock.conv2, conv1's BN fused into the im2col build,
    #     conv1's GELU fused into this kernel's input path
    z2_img = (y2.reshape(n, ho, wo, cout).astype(jnp.float32) * sc2
              + sh2).astype(jnp.bfloat16)
    y3, c_sum, c_sq = conv3x3_pallas(_conv3x3_inputs(z2_img, tr2),
                                     _conv3x3_wmats(p["conv2_w"]),
                                     n * rb2, tr2, wo, cout, apply_gelu=True)
    sc3, sh3 = _bn_scale_shift(c_sum, c_sq, m, p["conv2_bn_g"], p["conv2_bn_b"])

    # --- stage 4: final fused epilogue:
    #     GELU(BN(conv2)) + gelu(z1) @ W_1x1 + tconv-shortcut + (b_1x1 + b_tsc)
    w_sc = jnp.transpose(p["block_sc_w"][:, :, 0, 0]).astype(jnp.bfloat16)
    bias = (p["block_sc_b"] + p["up_sc_b"]).astype(jnp.float32)
    out = final_fuse_pallas(y3.reshape(m, cout), z1_img.reshape(m, cout),
                            s2_flat, sc3, sh3, w_sc, bias)
    return jnp.transpose(out.reshape(n, ho, wo, cout), (0, 3, 1, 2))   # NCHW


# ----------------------------- params & reference --------------------------- #

def init_params(key, cin, cout):
    ks = jax.random.split(key, 12)

    def u(k, shape, fan_in):
        b = 1.0 / math.sqrt(fan_in)
        return jax.random.uniform(k, shape, jnp.float32, -b, b)

    return {
        "uconv_w": u(ks[0], (cin, cout, 4, 4), cin * 16),
        "uconv_b": u(ks[1], (cout,), cin * 16),
        "uconv_bn_g": jnp.ones((cout,), jnp.float32),
        "uconv_bn_b": jnp.zeros((cout,), jnp.float32),
        "conv1_w": u(ks[2], (cout, cout, 3, 3), cout * 9),
        "conv1_b": u(ks[3], (cout,), cout * 9),
        "conv1_bn_g": jnp.ones((cout,), jnp.float32),
        "conv1_bn_b": jnp.zeros((cout,), jnp.float32),
        "conv2_w": u(ks[4], (cout, cout, 3, 3), cout * 9),
        "conv2_b": u(ks[5], (cout,), cout * 9),
        "conv2_bn_g": jnp.ones((cout,), jnp.float32),
        "conv2_bn_b": jnp.zeros((cout,), jnp.float32),
        "block_sc_w": u(ks[6], (cout, cout, 1, 1), cout),
        "block_sc_b": u(ks[7], (cout,), cout),
        "up_sc_w": u(ks[8], (cin, cout, 4, 4), cin * 16),
        "up_sc_b": u(ks[9], (cout,), cin * 16),
    }


def upblock_reference(x, p):
    def conv2d(x, w, b, pad):
        y = lax.conv_general_dilated(x, w, (1, 1), ((pad, pad), (pad, pad)),
                                     dimension_numbers=("NCHW", "OIHW", "NCHW"))
        return y + b.reshape(1, -1, 1, 1)

    def tconv2d(x, w, b):
        w_eq = jnp.transpose(w[:, :, ::-1, ::-1], (1, 0, 2, 3))
        y = lax.conv_general_dilated(x, w_eq, (1, 1), ((2, 2), (2, 2)),
                                     lhs_dilation=(2, 2),
                                     dimension_numbers=("NCHW", "OIHW", "NCHW"))
        return y + b.reshape(1, -1, 1, 1)

    def bn(x, g, b):
        mean = x.mean(axis=(0, 2, 3), keepdims=True)
        var = ((x - mean) ** 2).mean(axis=(0, 2, 3), keepdims=True)
        return (x - mean) / jnp.sqrt(var + _BN_EPS) * g.reshape(1, -1, 1, 1) \
            + b.reshape(1, -1, 1, 1)

    gelu = lambda z: jax.nn.gelu(z, approximate=False)
    u = gelu(bn(tconv2d(x, p["uconv_w"], p["uconv_b"]),
                p["uconv_bn_g"], p["uconv_bn_b"]))
    c1 = gelu(bn(conv2d(u, p["conv1_w"], p["conv1_b"], 1),
                 p["conv1_bn_g"], p["conv1_bn_b"]))
    c2 = gelu(bn(conv2d(c1, p["conv2_w"], p["conv2_b"], 1),
                 p["conv2_bn_g"], p["conv2_bn_b"]))
    s1 = conv2d(u, p["block_sc_w"], p["block_sc_b"], 0)
    s2 = tconv2d(x, p["up_sc_w"], p["up_sc_b"])
    return c2 + s1 + s2


if __name__ == "__main__":
    key = jax.random.PRNGKey(0)
    kx, kp = jax.random.split(key)
    N, CIN, COUT, H, W = 2, 8, 4, 8, 8          # UpBlock(in_channels=8, out_channels=4)
    x = jax.random.normal(kx, (N, CIN, H, W), jnp.float32)
    params = init_params(kp, CIN, COUT)

    out = jax.jit(upblock_forward)(x, params)
    out = jax.block_until_ready(out)
    assert out.shape == (N, COUT, 2 * H, 2 * W), out.shape

    ref = upblock_reference(x, params)
    # bf16 MXU operands / bf16 intermediates (f32 accumulation & BN stats).
    np.testing.assert_allclose(np.asarray(out), np.asarray(ref), rtol=5e-2, atol=5e-2)
    print("KERNEL_OK")
</pallas_src>

<mosaic_0001>
module attributes {stable_mosaic.version = 11 : i64} {
  func.func @_tconv_kernel(%arg0: i32, %arg1: i32, %arg2: memref<1x1x80x16xbf16, #tpu.memory_space<vmem>>, %arg3: memref<1x4x16x8xbf16, #tpu.memory_space<vmem>>, %arg4: memref<1x1x128x8xbf16, #tpu.memory_space<vmem>>, %arg5: memref<1x1x1x8xf32, #tpu.memory_space<vmem>>, %arg6: memref<1x1x1x8xf32, #tpu.memory_space<vmem>>) attributes {dimension_semantics = [#tpu.dimension_semantics<parallel>, #tpu.dimension_semantics<parallel>], iteration_bounds = array<i64: 2, 2>, scalar_prefetch = 0 : i64, scratch_operands = 0 : i64, tpu.core_type = #tpu.core_type<tc>, window_params = [{transform_indices = @transform_0, window_bounds = array<i64: 1, 1, 80, 16>}, {transform_indices = @transform_1, window_bounds = array<i64: 1, 4, 16, 8>}, {transform_indices = @transform_2, window_bounds = array<i64: 1, 1, 128, 8>}, {transform_indices = @transform_3, window_bounds = array<i64: 1, 1, 1, 8>}, {transform_indices = @transform_4, window_bounds = array<i64: 1, 1, 1, 8>}]} {
    %c0 = arith.constant 0 : index
    %c0_0 = arith.constant 0 : index
    %c0_1 = arith.constant 0 : index
    %c0_2 = arith.constant 0 : index
    %0 = vector.load %arg2[%c0, %c0_0, %c0_1, %c0_2] : memref<1x1x80x16xbf16, #tpu.memory_space<vmem>>, vector<1x1x64x16xbf16>
    %1 = vector.shape_cast %0 : vector<1x1x64x16xbf16> to vector<64x16xbf16>
    %c0_3 = arith.constant 0 : index
    %c0_4 = arith.constant 0 : index
    %c0_5 = arith.constant 0 : index
    %c0_6 = arith.constant 0 : index
    %2 = vector.load %arg3[%c0_3, %c0_4, %c0_5, %c0_6] : memref<1x4x16x8xbf16, #tpu.memory_space<vmem>>, vector<1x1x16x8xbf16>
    %3 = vector.shape_cast %2 : vector<1x1x16x8xbf16> to vector<16x8xbf16>
    %cst = arith.constant dense<0.000000e+00> : vector<64x8xf32>
    %4 = tpu.matmul %1, %3, %cst {dimension_numbers = #tpu.dot_dimension_numbers<[1], [0], [0], [1], [0, 0, 1, 1], [], []>} : vector<64x16xbf16>, vector<16x8xbf16>, vector<64x8xf32> -> vector<64x8xf32>
    %c0_7 = arith.constant 0 : index
    %c0_8 = arith.constant 0 : index
    %c8 = arith.constant 8 : index
    %c0_9 = arith.constant 0 : index
    %5 = vector.load %arg2[%c0_7, %c0_8, %c8, %c0_9] : memref<1x1x80x16xbf16, #tpu.memory_space<vmem>>, vector<1x1x64x16xbf16>
    %6 = vector.shape_cast %5 : vector<1x1x64x16xbf16> to vector<64x16xbf16>
    %c0_10 = arith.constant 0 : index
    %c1 = arith.constant 1 : index
    %c0_11 = arith.constant 0 : index
    %c0_12 = arith.constant 0 : index
    %7 = vector.load %arg3[%c0_10, %c1, %c0_11, %c0_12] : memref<1x4x16x8xbf16, #tpu.memory_space<vmem>>, vector<1x1x16x8xbf16>
    %8 = vector.shape_cast %7 : vector<1x1x16x8xbf16> to vector<16x8xbf16>
    %cst_13 = arith.constant dense<0.000000e+00> : vector<64x8xf32>
    %9 = tpu.matmul %6, %8, %cst_13 {dimension_numbers = #tpu.dot_dimension_numbers<[1], [0], [0], [1], [0, 0, 1, 1], [], []>} : vector<64x16xbf16>, vector<16x8xbf16>, vector<64x8xf32> -> vector<64x8xf32>
    %10 = arith.addf %4, %9 : vector<64x8xf32>
    %11 = arith.truncf %10 : vector<64x8xf32> to vector<64x8xbf16>
    %c0_14 = arith.constant 0 : index
    %c0_15 = arith.constant 0 : index
    %c0_16 = arith.constant 0 : index
    %c0_17 = arith.constant 0 : index
    %12 = vector.load %arg4[%c0_14, %c0_15, %c0_16, %c0_17] : memref<1x1x128x8xbf16, #tpu.memory_space<vmem>>, vector<1x1x64x8xbf16>
    %13 = vector.shape_cast %12 : vector<1x1x64x8xbf16> to vector<64x8xbf16>
    %14 = vector.shape_cast %11 : vector<64x8xbf16> to vector<1x1x64x8xbf16>
    tpu.vector_store %arg4[%c0_14, %c0_15, %c0_16, %c0_17], %14 {strides = array<i32>} : memref<1x1x128x8xbf16, #tpu.memory_space<vmem>>, vector<1x1x64x8xbf16>,
    %cst_18 = arith.constant dense<0.000000e+00> : vector<8xf32>
    %15 = vector.multi_reduction <add>, %10, %cst_18 [0] : vector<64x8xf32> to vector<8xf32>
    %16 = vector.shape_cast %15 : vector<8xf32> to vector<1x8xf32>
    %17 = arith.mulf %10, %10 : vector<64x8xf32>
    %cst_19 = arith.constant dense<0.000000e+00> : vector<8xf32>
    %18 = vector.multi_reduction <add>, %17, %cst_19 [0] : vector<64x8xf32> to vector<8xf32>
    %19 = vector.shape_cast %18 : vector<8xf32> to vector<1x8xf32>
    %c0_20 = arith.constant 0 : index
    %c0_21 = arith.constant 0 : index
    %c8_22 = arith.constant 8 : index
    %c0_23 = arith.constant 0 : index
    %20 = vector.load %arg2[%c0_20, %c0_21, %c8_22, %c0_23] : memref<1x1x80x16xbf16, #tpu.memory_space<vmem>>, vector<1x1x64x16xbf16>
    %21 = vector.shape_cast %20 : vector<1x1x64x16xbf16> to vector<64x16xbf16>
    %c0_24 = arith.constant 0 : index
    %c2 = arith.constant 2 : index
    %c0_25 = arith.constant 0 : index
    %c0_26 = arith.constant 0 : index
    %22 = vector.load %arg3[%c0_24, %c2, %c0_25, %c0_26] : memref<1x4x16x8xbf16, #tpu.memory_space<vmem>>, vector<1x1x16x8xbf16>
    %23 = vector.shape_cast %22 : vector<1x1x16x8xbf16> to vector<16x8xbf16>
    %cst_27 = arith.constant dense<0.000000e+00> : vector<64x8xf32>
    %24 = tpu.matmul %21, %23, %cst_27 {dimension_numbers = #tpu.dot_dimension_numbers<[1], [0], [0], [1], [0, 0, 1, 1], [], []>} : vector<64x16xbf16>, vector<16x8xbf16>, vector<64x8xf32> -> vector<64x8xf32>
    %c0_28 = arith.constant 0 : index
    %c0_29 = arith.constant 0 : index
    %c16 = arith.constant 16 : index
    %c0_30 = arith.constant 0 : index
    %25 = vector.load %arg2[%c0_28, %c0_29, %c16, %c0_30] : memref<1x1x80x16xbf16, #tpu.memory_space<vmem>>, vector<1x1x64x16xbf16>
    %26 = vector.shape_cast %25 : vector<1x1x64x16xbf16> to vector<64x16xbf16>
    %c0_31 = arith.constant 0 : index
    %c3 = arith.constant 3 : index
    %c0_32 = arith.constant 0 : index
    %c0_33 = arith.constant 0 : index
    %27 = vector.load %arg3[%c0_31, %c3, %c0_32, %c0_33] : memref<1x4x16x8xbf16, #tpu.memory_space<vmem>>, vector<1x1x16x8xbf16>
    %28 = vector.shape_cast %27 : vector<1x1x16x8xbf16> to vector<16x8xbf16>
    %cst_34 = arith.constant dense<0.000000e+00> : vector<64x8xf32>
    %29 = tpu.matmul %26, %28, %cst_34 {dimension_numbers = #tpu.dot_dimension_numbers<[1], [0], [0], [1], [0, 0, 1, 1], [], []>} : vector<64x16xbf16>, vector<16x8xbf16>, vector<64x8xf32> -> vector<64x8xf32>
    %30 = arith.addf %24, %29 : vector<64x8xf32>
    %31 = arith.truncf %30 : vector<64x8xf32> to vector<64x8xbf16>
    %c0_35 = arith.constant 0 : index
    %c0_36 = arith.constant 0 : index
    %c64 = arith.constant 64 : index
    %c0_37 = arith.constant 0 : index
    %32 = vector.load %arg4[%c0_35, %c0_36, %c64, %c0_37] : memref<1x1x128x8xbf16, #tpu.memory_space<vmem>>, vector<1x1x64x8xbf16>
    %33 = vector.shape_cast %32 : vector<1x1x64x8xbf16> to vector<64x8xbf16>
    %34 = vector.shape_cast %31 : vector<64x8xbf16> to vector<1x1x64x8xbf16>
    tpu.vector_store %arg4[%c0_35, %c0_36, %c64, %c0_37], %34 {strides = array<i32>} : memref<1x1x128x8xbf16, #tpu.memory_space<vmem>>, vector<1x1x64x8xbf16>,
    %cst_38 = arith.constant dense<0.000000e+00> : vector<8xf32>
    %35 = vector.multi_reduction <add>, %30, %cst_38 [0] : vector<64x8xf32> to vector<8xf32>
    %36 = vector.shape_cast %35 : vector<8xf32> to vector<1x8xf32>
    %37 = arith.mulf %30, %30 : vector<64x8xf32>
    %cst_39 = arith.constant dense<0.000000e+00> : vector<8xf32>
    %38 = vector.multi_reduction <add>, %37, %cst_39 [0] : vector<64x8xf32> to vector<8xf32>
    %39 = vector.shape_cast %38 : vector<8xf32> to vector<1x8xf32>
    %40 = arith.addf %16, %36 : vector<1x8xf32>
    %41 = arith.addf %19, %39 : vector<1x8xf32>
    %c0_40 = arith.constant 0 : index
    %c0_41 = arith.constant 0 : index
    %c0_42 = arith.constant 0 : index
    %c0_43 = arith.constant 0 : index
    %42 = vector.load %arg5[%c0_40, %c0_41, %c0_42, %c0_43] : memref<1x1x1x8xf32, #tpu.memory_space<vmem>>, vector<1x1x1x8xf32>
    %43 = vector.shape_cast %42 : vector<1x1x1x8xf32> to vector<1x8xf32>
    %44 = vector.shape_cast %40 : vector<1x8xf32> to vector<1x1x1x8xf32>
    tpu.vector_store %arg5[%c0_40, %c0_41, %c0_42, %c0_43], %44 {strides = array<i32>} : memref<1x1x1x8xf32, #tpu.memory_space<vmem>>, vector<1x1x1x8xf32>,
    %c0_44 = arith.constant 0 : index
    %c0_45 = arith.constant 0 : index
    %c0_46 = arith.constant 0 : index
    %c0_47 = arith.constant 0 : index
    %45 = vector.load %arg6[%c0_44, %c0_45, %c0_46, %c0_47] : memref<1x1x1x8xf32, #tpu.memory_space<vmem>>, vector<1x1x1x8xf32>
    %46 = vector.shape_cast %45 : vector<1x1x1x8xf32> to vector<1x8xf32>
    %47 = vector.shape_cast %41 : vector<1x8xf32> to vector<1x1x1x8xf32>
    tpu.vector_store %arg6[%c0_44, %c0_45, %c0_46, %c0_47], %47 {strides = array<i32>} : memref<1x1x1x8xf32, #tpu.memory_space<vmem>>, vector<1x1x1x8xf32>,
    return
  }
  func.func @transform_0(%arg0: i32, %arg1: i32) -> (i32, i32, i32, i32) {
    %c0_i32 = arith.constant 0 : i32
    %c0_i32_0 = arith.constant 0 : i32
    %c0_i32_1 = arith.constant 0 : i32
    return %arg0, %arg1, %c0_i32, %c0_i32_0 : i32, i32, i32, i32
  }
  func.func @transform_1(%arg0: i32, %arg1: i32) -> (i32, i32, i32, i32) {
    %c0_i32 = arith.constant 0 : i32
    %c0_i32_0 = arith.constant 0 : i32
    %c0_i32_1 = arith.constant 0 : i32
    %c0_i32_2 = arith.constant 0 : i32
    return %arg0, %c0_i32, %c0_i32_0, %c0_i32_1 : i32, i32, i32, i32
  }
  func.func @transform_2(%arg0: i32, %arg1: i32) -> (i32, i32, i32, i32) {
    %c0_i32 = arith.constant 0 : i32
    %c0_i32_0 = arith.constant 0 : i32
    %c0_i32_1 = arith.constant 0 : i32
    return %arg0, %arg1, %c0_i32, %c0_i32_0 : i32, i32, i32, i32
  }
  func.func @transform_3(%arg0: i32, %arg1: i32) -> (i32, i32, i32, i32) {
    %c0_i32 = arith.constant 0 : i32
    %c0_i32_0 = arith.constant 0 : i32
    %c0_i32_1 = arith.constant 0 : i32
    return %arg0, %arg1, %c0_i32, %c0_i32_0 : i32, i32, i32, i32
  }
  func.func @transform_4(%arg0: i32, %arg1: i32) -> (i32, i32, i32, i32) {
    %c0_i32 = arith.constant 0 : i32
    %c0_i32_0 = arith.constant 0 : i32
    %c0_i32_1 = arith.constant 0 : i32
    return %arg0, %arg1, %c0_i32, %c0_i32_0 : i32, i32, i32, i32
  }
}

module attributes {stable_mosaic.version = 11 : i64} {
  func.func @_conv3x3_kernel(%arg0: i32, %arg1: memref<1x160x12xbf16, #tpu.memory_space<vmem>>, %arg2: memref<3x12x4xbf16, #tpu.memory_space<vmem>>, %arg3: memref<1x128x4xbf16, #tpu.memory_space<vmem>>, %arg4: memref<1x1x4xf32, #tpu.memory_space<vmem>>, %arg5: memref<1x1x4xf32, #tpu.memory_space<vmem>>) attributes {dimension_semantics = [#tpu.dimension_semantics<parallel>], iteration_bounds = array<i64: 4>, scalar_prefetch = 0 : i64, scratch_operands = 0 : i64, tpu.core_type = #tpu.core_type<tc>, window_params = [{transform_indices = @transform_0, window_bounds = array<i64: 1, 160, 12>}, {pipeline_mode = #tpu.pipeline_mode<synchronous>, transform_indices = @transform_1, window_bounds = array<i64: 3, 12, 4>}, {transform_indices = @transform_2, window_bounds = array<i64: 1, 128, 4>}, {transform_indices = @transform_3, window_bounds = array<i64: 1, 1, 4>}, {transform_indices = @transform_4, window_bounds = array<i64: 1, 1, 4>}]} {
    %c0 = arith.constant 0 : index
    %c0_0 = arith.constant 0 : index
    %c0_1 = arith.constant 0 : index
    %0 = vector.load %arg1[%c0, %c0_0, %c0_1] : memref<1x160x12xbf16, #tpu.memory_space<vmem>>, vector<1x160x12xbf16>
    %1 = vector.shape_cast %0 : vector<1x160x12xbf16> to vector<160x12xbf16>
    %2 = arith.extf %1 : vector<160x12xbf16> to vector<160x12xf32>
    %cst = arith.constant 5.000000e-01 : f32
    %3 = vector.broadcast %cst : f32 to vector<160x12xf32>
    %4 = arith.mulf %3, %2 : vector<160x12xf32>
    %cst_2 = arith.constant 0.707106769 : f32
    %5 = vector.broadcast %cst_2 : f32 to vector<160x12xf32>
    %6 = arith.mulf %2, %5 : vector<160x12xf32>
    %7 = math.erf %6 : vector<160x12xf32>
    %cst_3 = arith.constant 1.000000e+00 : f32
    %8 = vector.broadcast %cst_3 : f32 to vector<160x12xf32>
    %9 = arith.addf %8, %7 : vector<160x12xf32>
    %10 = arith.mulf %4, %9 : vector<160x12xf32>
    %11 = arith.truncf %10 : vector<160x12xf32> to vector<160x12xbf16>
    %12 = vector.extract_strided_slice %11 {offsets = [0, 0], sizes = [128, 12], strides = [1, 1]} : vector<160x12xbf16> to vector<128x12xbf16>
    %13 = vector.extract_strided_slice %11 {offsets = [16, 0], sizes = [128, 12], strides = [1, 1]} : vector<160x12xbf16> to vector<128x12xbf16>
    %14 = vector.extract_strided_slice %11 {offsets = [32, 0], sizes = [128, 12], strides = [1, 1]} : vector<160x12xbf16> to vector<128x12xbf16>
    %c0_4 = arith.constant 0 : index
    %c0_5 = arith.constant 0 : index
    %c0_6 = arith.constant 0 : index
    %15 = vector.load %arg2[%c0_4, %c0_5, %c0_6] : memref<3x12x4xbf16, #tpu.memory_space<vmem>>, vector<1x12x4xbf16>
    %16 = vector.shape_cast %15 : vector<1x12x4xbf16> to vector<12x4xbf16>
    %cst_7 = arith.constant dense<0.000000e+00> : vector<128x4xf32>
    %17 = tpu.matmul %12, %16, %cst_7 {dimension_numbers = #tpu.dot_dimension_numbers<[1], [0], [0], [1], [0, 0, 1, 1], [], []>} : vector<128x12xbf16>, vector<12x4xbf16>, vector<128x4xf32> -> vector<128x4xf32>
    %c1 = arith.constant 1 : index
    %c0_8 = arith.constant 0 : index
    %c0_9 = arith.constant 0 : index
    %18 = vector.load %arg2[%c1, %c0_8, %c0_9] : memref<3x12x4xbf16, #tpu.memory_space<vmem>>, vector<1x12x4xbf16>
    %19 = vector.shape_cast %18 : vector<1x12x4xbf16> to vector<12x4xbf16>
    %cst_10 = arith.constant dense<0.000000e+00> : vector<128x4xf32>
    %20 = tpu.matmul %13, %19, %cst_10 {dimension_numbers = #tpu.dot_dimension_numbers<[1], [0], [0], [1], [0, 0, 1, 1], [], []>} : vector<128x12xbf16>, vector<12x4xbf16>, vector<128x4xf32> -> vector<128x4xf32>
    %21 = arith.addf %17, %20 : vector<128x4xf32>
    %c2 = arith.constant 2 : index
    %c0_11 = arith.constant 0 : index
    %c0_12 = arith.constant 0 : index
    %22 = vector.load %arg2[%c2, %c0_11, %c0_12] : memref<3x12x4xbf16, #tpu.memory_space<vmem>>, vector<1x12x4xbf16>
    %23 = vector.shape_cast %22 : vector<1x12x4xbf16> to vector<12x4xbf16>
    %cst_13 = arith.constant dense<0.000000e+00> : vector<128x4xf32>
    %24 = tpu.matmul %14, %23, %cst_13 {dimension_numbers = #tpu.dot_dimension_numbers<[1], [0], [0], [1], [0, 0, 1, 1], [], []>} : vector<128x12xbf16>, vector<12x4xbf16>, vector<128x4xf32> -> vector<128x4xf32>
    %25 = arith.addf %21, %24 : vector<128x4xf32>
    %26 = arith.truncf %25 : vector<128x4xf32> to vector<128x4xbf16>
    %c0_14 = arith.constant 0 : index
    %c0_15 = arith.constant 0 : index
    %c0_16 = arith.constant 0 : index
    %27 = vector.load %arg3[%c0_14, %c0_15, %c0_16] : memref<1x128x4xbf16, #tpu.memory_space<vmem>>, vector<1x128x4xbf16>
    %28 = vector.shape_cast %27 : vector<1x128x4xbf16> to vector<128x4xbf16>
    %29 = vector.shape_cast %26 : vector<128x4xbf16> to vector<1x128x4xbf16>
    tpu.vector_store %arg3[%c0_14, %c0_15, %c0_16], %29 {strides = array<i32>} : memref<1x128x4xbf16, #tpu.memory_space<vmem>>, vector<1x128x4xbf16>,
    %cst_17 = arith.constant dense<0.000000e+00> : vector<4xf32>
    %30 = vector.multi_reduction <add>, %25, %cst_17 [0] : vector<128x4xf32> to vector<4xf32>
    %31 = vector.shape_cast %30 : vector<4xf32> to vector<1x4xf32>
    %c0_18 = arith.constant 0 : index
    %c0_19 = arith.constant 0 : index
    %c0_20 = arith.constant 0 : index
    %32 = vector.load %arg4[%c0_18, %c0_19, %c0_20] : memref<1x1x4xf32, #tpu.memory_space<vmem>>, vector<1x1x4xf32>
    %33 = vector.shape_cast %32 : vector<1x1x4xf32> to vector<1x4xf32>
    %34 = vector.shape_cast %31 : vector<1x4xf32> to vector<1x1x4xf32>
    tpu.vector_store %arg4[%c0_18, %c0_19, %c0_20], %34 {strides = array<i32>} : memref<1x1x4xf32, #tpu.memory_space<vmem>>, vector<1x1x4xf32>,
    %35 = arith.mulf %25, %25 : vector<128x4xf32>
    %cst_21 = arith.constant dense<0.000000e+00> : vector<4xf32>
    %36 = vector.multi_reduction <add>, %35, %cst_21 [0] : vector<128x4xf32> to vector<4xf32>
    %37 = vector.shape_cast %36 : vector<4xf32> to vector<1x4xf32>
    %c0_22 = arith.constant 0 : index
    %c0_23 = arith.constant 0 : index
    %c0_24 = arith.constant 0 : index
    %38 = vector.load %arg5[%c0_22, %c0_23, %c0_24] : memref<1x1x4xf32, #tpu.memory_space<vmem>>, vector<1x1x4xf32>
    %39 = vector.shape_cast %38 : vector<1x1x4xf32> to vector<1x4xf32>
    %40 = vector.shape_cast %37 : vector<1x4xf32> to vector<1x1x4xf32>
    tpu.vector_store %arg5[%c0_22, %c0_23, %c0_24], %40 {strides = array<i32>} : memref<1x1x4xf32, #tpu.memory_space<vmem>>, vector<1x1x4xf32>,
    return
  }
  func.func @transform_0(%arg0: i32) -> (i32, i32, i32) {
    %c0_i32 = arith.constant 0 : i32
    %c0_i32_0 = arith.constant 0 : i32
    %c0_i32_1 = arith.constant 0 : i32
    return %arg0, %c0_i32, %c0_i32_0 : i32, i32, i32
  }
  func.func @transform_1(%arg0: i32) -> (i32, i32, i32) {
    %c0_i32 = arith.constant 0 : i32
    %c0_i32_0 = arith.constant 0 : i32
    %c0_i32_1 = arith.constant 0 : i32
    %c0_i32_2 = arith.constant 0 : i32
    return %c0_i32, %c0_i32_0, %c0_i32_1 : i32, i32, i32
  }
  func.func @transform_2(%arg0: i32) -> (i32, i32, i32) {
    %c0_i32 = arith.constant 0 : i32
    %c0_i32_0 = arith.constant 0 : i32
    %c0_i32_1 = arith.constant 0 : i32
    return %arg0, %c0_i32, %c0_i32_0 : i32, i32, i32
  }
  func.func @transform_3(%arg0: i32) -> (i32, i32, i32) {
    %c0_i32 = arith.constant 0 : i32
    %c0_i32_0 = arith.constant 0 : i32
    %c0_i32_1 = arith.constant 0 : i32
    return %arg0, %c0_i32, %c0_i32_0 : i32, i32, i32
  }
  func.func @transform_4(%arg0: i32) -> (i32, i32, i32) {
    %c0_i32 = arith.constant 0 : i32
    %c0_i32_0 = arith.constant 0 : i32
    %c0_i32_1 = arith.constant 0 : i32
    return %arg0, %c0_i32, %c0_i32_0 : i32, i32, i32
  }
}

module attributes {stable_mosaic.version = 11 : i64} {
  func.func @_final_kernel(%arg0: i32, %arg1: memref<128x4xbf16, #tpu.memory_space<vmem>>, %arg2: memref<128x4xbf16, #tpu.memory_space<vmem>>, %arg3: memref<128x4xbf16, #tpu.memory_space<vmem>>, %arg4: memref<1x4xf32, #tpu.memory_space<vmem>>, %arg5: memref<1x4xf32, #tpu.memory_space<vmem>>, %arg6: memref<4x4xbf16, #tpu.memory_space<vmem>>, %arg7: memref<1x4xf32, #tpu.memory_space<vmem>>, %arg8: memref<128x4xf32, #tpu.memory_space<vmem>>) attributes {dimension_semantics = [#tpu.dimension_semantics<parallel>], iteration_bounds = array<i64: 4>, scalar_prefetch = 0 : i64, scratch_operands = 0 : i64, tpu.core_type = #tpu.core_type<tc>, window_params = [{transform_indices = @transform_0, window_bounds = array<i64: 128, 4>}, {transform_indices = @transform_1, window_bounds = array<i64: 128, 4>}, {transform_indices = @transform_2, window_bounds = array<i64: 128, 4>}, {pipeline_mode = #tpu.pipeline_mode<synchronous>, transform_indices = @transform_3, window_bounds = array<i64: 1, 4>}, {pipeline_mode = #tpu.pipeline_mode<synchronous>, transform_indices = @transform_4, window_bounds = array<i64: 1, 4>}, {pipeline_mode = #tpu.pipeline_mode<synchronous>, transform_indices = @transform_5, window_bounds = array<i64: 4, 4>}, {pipeline_mode = #tpu.pipeline_mode<synchronous>, transform_indices = @transform_6, window_bounds = array<i64: 1, 4>}, {transform_indices = @transform_7, window_bounds = array<i64: 128, 4>}]} {
    %c0 = arith.constant 0 : index
    %c0_0 = arith.constant 0 : index
    %0 = vector.load %arg1[%c0, %c0_0] : memref<128x4xbf16, #tpu.memory_space<vmem>>, vector<128x4xbf16>
    %1 = arith.extf %0 : vector<128x4xbf16> to vector<128x4xf32>
    %c0_1 = arith.constant 0 : index
    %c0_2 = arith.constant 0 : index
    %2 = vector.load %arg4[%c0_1, %c0_2] : memref<1x4xf32, #tpu.memory_space<vmem>>, vector<1x4xf32>
    %3 = vector.broadcast %2 : vector<1x4xf32> to vector<128x4xf32>
    %4 = arith.mulf %1, %3 : vector<128x4xf32>
    %c0_3 = arith.constant 0 : index
    %c0_4 = arith.constant 0 : index
    %5 = vector.load %arg5[%c0_3, %c0_4] : memref<1x4xf32, #tpu.memory_space<vmem>>, vector<1x4xf32>
    %6 = vector.broadcast %5 : vector<1x4xf32> to vector<128x4xf32>
    %7 = arith.addf %4, %6 : vector<128x4xf32>
    %c0_5 = arith.constant 0 : index
    %c0_6 = arith.constant 0 : index
    %8 = vector.load %arg2[%c0_5, %c0_6] : memref<128x4xbf16, #tpu.memory_space<vmem>>, vector<128x4xbf16>
    %9 = arith.extf %8 : vector<128x4xbf16> to vector<128x4xf32>
    %cst = arith.constant 5.000000e-01 : f32
    %10 = vector.broadcast %cst : f32 to vector<128x4xf32>
    %11 = arith.mulf %10, %9 : vector<128x4xf32>
    %cst_7 = arith.constant 0.707106769 : f32
    %12 = vector.broadcast %cst_7 : f32 to vector<128x4xf32>
    %13 = arith.mulf %9, %12 : vector<128x4xf32>
    %14 = math.erf %13 : vector<128x4xf32>
    %cst_8 = arith.constant 1.000000e+00 : f32
    %15 = vector.broadcast %cst_8 : f32 to vector<128x4xf32>
    %16 = arith.addf %15, %14 : vector<128x4xf32>
    %17 = arith.mulf %11, %16 : vector<128x4xf32>
    %18 = arith.truncf %17 : vector<128x4xf32> to vector<128x4xbf16>
    %c0_9 = arith.constant 0 : index
    %c0_10 = arith.constant 0 : index
    %19 = vector.load %arg6[%c0_9, %c0_10] : memref<4x4xbf16, #tpu.memory_space<vmem>>, vector<4x4xbf16>
    %cst_11 = arith.constant dense<0.000000e+00> : vector<128x4xf32>
    %20 = tpu.matmul %18, %19, %cst_11 {dimension_numbers = #tpu.dot_dimension_numbers<[1], [0], [0], [1], [0, 0, 1, 1], [], []>} : vector<128x4xbf16>, vector<4x4xbf16>, vector<128x4xf32> -> vector<128x4xf32>
    %cst_12 = arith.constant 5.000000e-01 : f32
    %21 = vector.broadcast %cst_12 : f32 to vector<128x4xf32>
    %22 = arith.mulf %21, %7 : vector<128x4xf32>
    %cst_13 = arith.constant 0.707106769 : f32
    %23 = vector.broadcast %cst_13 : f32 to vector<128x4xf32>
    %24 = arith.mulf %7, %23 : vector<128x4xf32>
    %25 = math.erf %24 : vector<128x4xf32>
    %cst_14 = arith.constant 1.000000e+00 : f32
    %26 = vector.broadcast %cst_14 : f32 to vector<128x4xf32>
    %27 = arith.addf %26, %25 : vector<128x4xf32>
    %28 = arith.mulf %22, %27 : vector<128x4xf32>
    %29 = arith.addf %28, %20 : vector<128x4xf32>
    %c0_15 = arith.constant 0 : index
    %c0_16 = arith.constant 0 : index
    %30 = vector.load %arg3[%c0_15, %c0_16] : memref<128x4xbf16, #tpu.memory_space<vmem>>, vector<128x4xbf16>
    %31 = arith.extf %30 : vector<128x4xbf16> to vector<128x4xf32>
    %32 = arith.addf %29, %31 : vector<128x4xf32>
    %c0_17 = arith.constant 0 : index
    %c0_18 = arith.constant 0 : index
    %33 = vector.load %arg7[%c0_17, %c0_18] : memref<1x4xf32, #tpu.memory_space<vmem>>, vector<1x4xf32>
    %34 = vector.broadcast %33 : vector<1x4xf32> to vector<128x4xf32>
    %35 = arith.addf %32, %34 : vector<128x4xf32>
    %c0_19 = arith.constant 0 : index
    %c0_20 = arith.constant 0 : index
    %36 = vector.load %arg8[%c0_19, %c0_20] : memref<128x4xf32, #tpu.memory_space<vmem>>, vector<128x4xf32>
    tpu.vector_store %arg8[%c0_19, %c0_20], %35 {strides = array<i32>} : memref<128x4xf32, #tpu.memory_space<vmem>>, vector<128x4xf32>,
    return
  }
  func.func @transform_0(%arg0: i32) -> (i32, i32) {
    %c0_i32 = arith.constant 0 : i32
    %c0_i32_0 = arith.constant 0 : i32
    return %arg0, %c0_i32 : i32, i32
  }
  func.func @transform_1(%arg0: i32) -> (i32, i32) {
    %c0_i32 = arith.constant 0 : i32
    %c0_i32_0 = arith.constant 0 : i32
    return %arg0, %c0_i32 : i32, i32
  }
  func.func @transform_2(%arg0: i32) -> (i32, i32) {
    %c0_i32 = arith.constant 0 : i32
    %c0_i32_0 = arith.constant 0 : i32
    return %arg0, %c0_i32 : i32, i32
  }
  func.func @transform_3(%arg0: i32) -> (i32, i32) {
    %c0_i32 = arith.constant 0 : i32
    %c0_i32_0 = arith.constant 0 : i32
    %c0_i32_1 = arith.constant 0 : i32
    return %c0_i32, %c0_i32_0 : i32, i32
  }
  func.func @transform_4(%arg0: i32) -> (i32, i32) {
    %c0_i32 = arith.constant 0 : i32
    %c0_i32_0 = arith.constant 0 : i32
    %c0_i32_1 = arith.constant 0 : i32
    return %c0_i32, %c0_i32_0 : i32, i32
  }
  func.func @transform_5(%arg0: i32) -> (i32, i32) {
    %c0_i32 = arith.constant 0 : i32
    %c0_i32_0 = arith.constant 0 : i32
    %c0_i32_1 = arith.constant 0 : i32
    return %c0_i32, %c0_i32_0 : i32, i32
  }
  func.func @transform_6(%arg0: i32) -> (i32, i32) {
    %c0_i32 = arith.constant 0 : i32
    %c0_i32_0 = arith.constant 0 : i32
    %c0_i32_1 = arith.constant 0 : i32
    return %c0_i32, %c0_i32_0 : i32, i32
  }
  func.func @transform_7(%arg0: i32) -> (i32, i32) {
    %c0_i32 = arith.constant 0 : i32
    %c0_i32_0 = arith.constant 0 : i32
    return %arg0, %c0_i32 : i32, i32
  }
}

</mosaic_0001>

<llo_original>
// kernel: upblock_forward.4
$region0: #{upblock_forward.4}
  #allocation0 [shape = 'u32[]', space=smem, size = 0x4, offset = 0x4, fixed_abs, tag = 'smem constant byte address 0x4 - core index']
  #allocation1 [shape = 'u32[144,128]{1,0:T(1,128)}', space=vmem, size = 0x12000, scoped, tag = 'internal scratch']
  %s0 = inlined_call_operand.vmem [shape: bf16[2,2,80,16], index: 0, kind: input, shape index: {}]
  %s1 = inlined_call_operand.vmem [shape: bf16[2,4,16,8], index: 1, kind: input, shape index: {}]
  %s2 = inlined_call_operand.vmem [shape: bf16[2,2,128,8], index: 2, kind: output, shape index: {0}]
  %s3 = inlined_call_operand.vmem [shape: f32[2,2,1,8], index: 3, kind: output, shape index: {1}]
  %s4 = inlined_call_operand.vmem [shape: f32[2,2,1,8], index: 4, kind: output, shape index: {2}]
  %5 = xla_tuple %s2, %s3, %s4
  %s6 = sld [smem:[#allocation0]]
  $region57: #{upblock_forward.4} parent=0
    _
  %s8 = ssub.s32 1, %s6
  %s9 = scalar_select 0, %s8, %s6
  loop: start=0, step=1, limit=6
  $region2: #{upblock_forward.4} parent=0 // loop_pre_header
    _
  $region3: #{upblock_forward.4} parent=0 // loop_header
    %s11 = sphi 0, %s15
    %p12 = scmp.ge.s32.totalorder %s11, 6
    %s18 = sphi 0, %s30
    %s19 = sphi 0, %s26
    %s20 = sphi 0, %s18
    %s21 = sphi 0, %s19
    %s22 = sphi 0, %s20
    %s23 = sphi 0, %s21
    %s35 = sphi 0, %s37
    %s38 = sphi 0, %s35
    %s39 = sphi 0, %s38
    %s55 = sphi 0, %s39
    %s61 = sphi 0, %s63
    %s64 = sphi 0, %s61
    %s65 = sphi 0, %s64
    %s81 = sphi 0, %s65
    %s89 = sphi 0, %s91
    %s92 = sphi 0, %s89
    %s93 = sphi 0, %s92
    %s109 = sphi 0, %s93
    %s117 = sphi 0, %s119
    %s120 = sphi 0, %s117
    %s121 = sphi 0, %s120
    %s137 = sphi 0, %s121
    %s145 = sphi 0, %s147
    %s148 = sphi 0, %s145
    %s149 = sphi 0, %s148
    %s165 = sphi 0, %s149
  $region4: #{upblock_forward.4} parent=0 // loop_header_branch
    %14 = sbr.rel (%p12) target = $region8
  $region5: #{upblock_forward.4} parent=0 // loop_body
    %s16 = ssub.s32 %s11, 1
    %s17 = ssub.s32 %s11, 2
    %s24 = sadd.s32 1, %s19
    %p25 = scmp.ge.s32.totalorder %s24, 2
    %s26 = scalar_select %p25, 0, %s24
    %s27 = sadd.s32 1, %s18
    %s28 = scalar_select %p25, %s27, %s18
    %p29 = scmp.ge.s32.totalorder %s28, 2
    %s30 = scalar_select %p29, 0, %s28
    %s31 = ssub.s32 %s18, %s30
    %s32 = ssub.s32 %s19, %s26
    %s33 = sor.u32 %s31, %s32
    %p34 = scmp.eq.s32.totalorder %s33, 0
    %s36 = sadd.s32 %s35, 1
    %s37 = scalar_select %p34, %s35, %s36
    %p40 = pneg %p34
    %p41 = scmp.eq.s32.totalorder %s11, 3
    %p42 = por %p40, %p41
    %p43 = scmp.ne.s32.totalorder %s35, %s38
    %p44 = scmp.eq.s32.totalorder %s11, 0
    %p45 = por %p43, %p44
    %p46 = scmp.ne.s32.totalorder %s35, %s38
    %p47 = scmp.eq.s32.totalorder %s16, 3
    %p48 = por %p46, %p47
    %p49 = scmp.ne.s32.totalorder %s38, %s39
    %p50 = scmp.eq.s32.totalorder %s16, 0
    %p51 = por %p49, %p50
    %p52 = scmp.ne.s32.totalorder %s38, %s39
    %p53 = scmp.eq.s32.totalorder %s17, 3
    %p54 = por %p52, %p53
    %p56 = scmp.ne.s32.totalorder %s39, %s55
    %p57 = scmp.eq.s32.totalorder %s17, 0
    %p58 = por %p56, %p57
    %s59 = ssub.s32 %s18, %s30
    %p60 = scmp.eq.s32.totalorder %s59, 0
    %s62 = sadd.s32 %s61, 1
    %s63 = scalar_select %p60, %s61, %s62
    %p66 = pneg %p60
    %p67 = scmp.eq.s32.totalorder %s11, 3
    %p68 = por %p66, %p67
    %p69 = scmp.ne.s32.totalorder %s61, %s64
    %p70 = scmp.eq.s32.totalorder %s11, 0
    %p71 = por %p69, %p70
    %p72 = scmp.ne.s32.totalorder %s61, %s64
    %p73 = scmp.eq.s32.totalorder %s16, 3
    %p74 = por %p72, %p73
    %p75 = scmp.ne.s32.totalorder %s64, %s65
    %p76 = scmp.eq.s32.totalorder %s16, 0
    %p77 = por %p75, %p76
    %p78 = scmp.ne.s32.totalorder %s64, %s65
    %p79 = scmp.eq.s32.totalorder %s17, 3
    %p80 = por %p78, %p79
    %p82 = scmp.ne.s32.totalorder %s65, %s81
    %p83 = scmp.eq.s32.totalorder %s17, 0
    %p84 = por %p82, %p83
    %s85 = ssub.s32 %s18, %s30
    %s86 = ssub.s32 %s19, %s26
    %s87 = sor.u32 %s85, %s86
    %p88 = scmp.eq.s32.totalorder %s87, 0
    %s90 = sadd.s32 %s89, 1
    %s91 = scalar_select %p88, %s89, %s90
    %p94 = pneg %p88
    %p95 = scmp.eq.s32.totalorder %s11, 3
    %p96 = por %p94, %p95
    %p97 = scmp.ne.s32.totalorder %s89, %s92
    %p98 = scmp.eq.s32.totalorder %s11, 0
    %p99 = por %p97, %p98
    %p100 = scmp.ne.s32.totalorder %s89, %s92
    %p101 = scmp.eq.s32.totalorder %s16, 3
    %p102 = por %p100, %p101
    %p103 = scmp.ne.s32.totalorder %s92, %s93
    %p104 = scmp.eq.s32.totalorder %s16, 0
    %p105 = por %p103, %p104
    %p106 = scmp.ne.s32.totalorder %s92, %s93
    %p107 = scmp.eq.s32.totalorder %s17, 3
    %p108 = por %p106, %p107
    %p110 = scmp.ne.s32.totalorder %s93, %s109
    %p111 = scmp.eq.s32.totalorder %s17, 0
    %p112 = por %p110, %p111
    %s113 = ssub.s32 %s18, %s30
    %s114 = ssub.s32 %s19, %s26
    %s115 = sor.u32 %s113, %s114
    %p116 = scmp.eq.s32.totalorder %s115, 0
    %s118 = sadd.s32 %s117, 1
    %s119 = scalar_select %p116, %s117, %s118
    %p122 = pneg %p116
    %p123 = scmp.eq.s32.totalorder %s11, 3
    %p124 = por %p122, %p123
    %p125 = scmp.ne.s32.totalorder %s117, %s120
    %p126 = scmp.eq.s32.totalorder %s11, 0
    %p127 = por %p125, %p126
    %p128 = scmp.ne.s32.totalorder %s117, %s120
    %p129 = scmp.eq.s32.totalorder %s16, 3
    %p130 = por %p128, %p129
    %p131 = scmp.ne.s32.totalorder %s120, %s121
    %p132 = scmp.eq.s32.totalorder %s16, 0
    %p133 = por %p131, %p132
    %p134 = scmp.ne.s32.totalorder %s120, %s121
    %p135 = scmp.eq.s32.totalorder %s17, 3
    %p136 = por %p134, %p135
    %p138 = scmp.ne.s32.totalorder %s121, %s137
    %p139 = scmp.eq.s32.totalorder %s17, 0
    %p140 = por %p138, %p139
    %s141 = ssub.s32 %s18, %s30
    %s142 = ssub.s32 %s19, %s26
    %s143 = sor.u32 %s141, %s142
    %p144 = scmp.eq.s32.totalorder %s143, 0
    %s146 = sadd.s32 %s145, 1
    %s147 = scalar_select %p144, %s145, %s146
    %p150 = pneg %p144
    %p151 = scmp.eq.s32.totalorder %s11, 3
    %p152 = por %p150, %p151
    %p153 = scmp.ne.s32.totalorder %s145, %s148
    %p154 = scmp.eq.s32.totalorder %s11, 0
    %p155 = por %p153, %p154
    %p156 = scmp.ne.s32.totalorder %s145, %s148
    %p157 = scmp.eq.s32.totalorder %s16, 3
    %p158 = por %p156, %p157
    %p159 = scmp.ne.s32.totalorder %s148, %s149
    %p160 = scmp.eq.s32.totalorder %s16, 0
    %p161 = por %p159, %p160
    %p162 = scmp.ne.s32.totalorder %s148, %s149
    %p163 = scmp.eq.s32.totalorder %s17, 3
    %p164 = por %p162, %p163
    %p166 = scmp.ne.s32.totalorder %s149, %s165
    %p167 = scmp.eq.s32.totalorder %s17, 0
    %p168 = por %p166, %p167
    %p169 = scmp.le.s32.totalorder 1, %s11
    %p170 = scmp.lt.s32.totalorder %s11, 5
    %p171 = pnand %p169, %p170
    %p172 = pneg %p171
    // Predicated region
    $region9: #{upblock_forward.4} parent=5 // pred_check
      _
    $region10: #{upblock_forward.4} parent=5 // pred_check_branch
      %174 = sbr.rel (%p171) target = $region12
    $region11: #{upblock_forward.4} parent=5 // pred_region
      %s175 = ssub.s32 %s11, 1
    $region12: #{upblock_forward.4} parent=5 // pred_fallthru
      _
    %p176 = scmp.lt.s32.totalorder %s11, 4
    // Predicated region
    $region13: #{upblock_forward.4} parent=5 // pred_check
      %p177 = pneg %p176
    $region14: #{upblock_forward.4} parent=5 // pred_check_branch
      %179 = sbr.rel (%p177) target = $region16
    $region15: #{upblock_forward.4} parent=5 // pred_region
      // Predicated region
      $region17: #{upblock_forward.4} parent=15 // pred_check
        %p180 = pneg %p45
      $region18: #{upblock_forward.4} parent=15 // pred_check_branch
        %182 = sbr.rel (%p180) target = $region20
      $region19: #{upblock_forward.4} parent=15 // pred_region
        %p183 = scmp.lt.s32.totalorder %s18, 1
        %s184 = scalar_select %p183, %s18, 1
        %p185 = scmp.lt.s32.totalorder %s19, 1
        %s186 = scalar_select %p185, %s19, 1
        %s187 = smul.addr %s186, 10
        %s188 = smul.addr %s184, 20
        %s189 = sadd.s32 %s187, %s188
        %s190 = smul.addr %s189, 4
        %s191 = scalar_lea.vmem %s0, %s190
      $region20: #{upblock_forward.4} parent=15 // pred_fallthru
        _
      // Predicated region
      $region21: #{upblock_forward.4} parent=15 // pred_check
        %p192 = pneg %p71
      $region22: #{upblock_forward.4} parent=15 // pred_check_branch
        %194 = sbr.rel (%p192) target = $region24
      $region23: #{upblock_forward.4} parent=15 // pred_region
        %p195 = scmp.lt.s32.totalorder %s18, 1
        %s196 = scalar_select %p195, %s18, 1
        %s197 = smul.addr %s196, 8
        %s198 = smul.addr %s197, 4
        %s199 = scalar_lea.vmem %s1, %s198
      $region24: #{upblock_forward.4} parent=15 // pred_fallthru
        _
    $region16: #{upblock_forward.4} parent=5 // pred_fallthru
      _
    %p200 = scmp.le.s32.totalorder 1, %s11
    %p201 = scmp.lt.s32.totalorder %s11, 5
    %p202 = pnand %p200, %p201
    %p203 = pneg %p202
    // Predicated region
    $region25: #{upblock_forward.4} parent=5 // pred_check
      _
    $region26: #{upblock_forward.4} parent=5 // pred_check_branch
      %205 = sbr.rel (%p202) target = $region28
    $region27: #{upblock_forward.4} parent=5 // pred_region
      %s206 = ssub.s32 %s11, 1
      %p207 = scmp.lt.s32.totalorder %s20, 1
      %s208 = scalar_select %p207, %s20, 1
      %p209 = scmp.lt.s32.totalorder %s21, 1
      %s210 = scalar_select %p209, %s21, 1
      %s211 = smul.addr %s210, 10
      %s212 = smul.addr %s208, 20
      %s213 = sadd.s32 %s211, %s212
      %s214 = smul.addr %s213, 4
      %s215 = scalar_lea.vmem %s0, %s214
      %p216 = pneg %p51
      %p217 = pneg %p48
      %p218 = scmp.lt.s32.totalorder %s20, 1
      %s219 = scalar_select %p218, %s20, 1
      %s220 = smul.addr %s219, 8
      %s221 = smul.addr %s220, 4
      %s222 = scalar_lea.vmem %s1, %s221
      %p223 = pneg %p77
      %p224 = pneg %p74
      %p225 = pneg %p105
      %p226 = pneg %p102
      %p227 = scmp.lt.s32.totalorder %s20, 1
      %s228 = scalar_select %p227, %s20, 1
      %p229 = scmp.lt.s32.totalorder %s21, 1
      %s230 = scalar_select %p229, %s21, 1
      %s231 = smul.addr %s230, 16
      %s232 = smul.addr %s228, 32
      %s233 = sadd.s32 %s231, %s232
      %s234 = smul.addr %s233, 4
      %s235 = scalar_lea.vmem %s2, %s234
      %p236 = pneg %p133
      %p237 = pneg %p130
      %p238 = scmp.lt.s32.totalorder %s20, 1
      %s239 = scalar_select %p238, %s20, 1
      %p240 = scmp.lt.s32.totalorder %s21, 1
      %s241 = scalar_select %p240, %s21, 1
      %s242 = smul.addr %s239, 2
      %s243 = sadd.s32 %s241, %s242
      %s244 = scalar_lea.vmem %s3, %s243
      %p245 = pneg %p161
      %p246 = pneg %p158
      %p247 = scmp.lt.s32.totalorder %s20, 1
      %s248 = scalar_select %p247, %s20, 1
      %p249 = scmp.lt.s32.totalorder %s21, 1
      %s250 = scalar_select %p249, %s21, 1
      %s251 = smul.addr %s248, 2
      %s252 = sadd.s32 %s250, %s251
      %s253 = scalar_lea.vmem %s4, %s252
      %p254 = scmp.lt.s32.totalorder %s20, 1
      %s255 = scalar_select %p254, %s20, 1
      %p256 = scmp.lt.s32.totalorder %s21, 1
      %s257 = scalar_select %p256, %s21, 1
      %s258 = smul.addr %s257, 10
      %s259 = smul.addr %s255, 20
      %s260 = sadd.s32 %s258, %s259
      %s261 = smul.addr %s260, 4
      %s262 = scalar_lea.vmem %s0, %s261
      %p263 = scmp.lt.s32.totalorder %s20, 1
      %s264 = scalar_select %p263, %s20, 1
      %s265 = smul.addr %s264, 8
      %s266 = smul.addr %s265, 4
      %s267 = scalar_lea.vmem %s1, %s266
      %p268 = scmp.lt.s32.totalorder %s20, 1
      %s269 = scalar_select %p268, %s20, 1
      %p270 = scmp.lt.s32.totalorder %s21, 1
      %s271 = scalar_select %p270, %s21, 1
      %s272 = smul.addr %s271, 16
      %s273 = smul.addr %s269, 32
      %s274 = sadd.s32 %s272, %s273
      %s275 = smul.addr %s274, 4
      %s276 = scalar_lea.vmem %s2, %s275
      %p277 = scmp.lt.s32.totalorder %s20, 1
      %s278 = scalar_select %p277, %s20, 1
      %p279 = scmp.lt.s32.totalorder %s21, 1
      %s280 = scalar_select %p279, %s21, 1
      %s281 = smul.addr %s278, 2
      %s282 = sadd.s32 %s280, %s281
      %s283 = scalar_lea.vmem %s3, %s282
      %p284 = scmp.lt.s32.totalorder %s20, 1
      %s285 = scalar_select %p284, %s20, 1
      %p286 = scmp.lt.s32.totalorder %s21, 1
      %s287 = scalar_select %p286, %s21, 1
      %s288 = smul.addr %s285, 2
      %s289 = sadd.s32 %s287, %s288
      %s290 = scalar_lea.vmem %s4, %s289
      %v292 = vld [vmem:[%s262] sm:$0xf]
      %v293 = vld [vmem:[%s262 + $0x4] sm:$0xf]
      %v294 = vld [vmem:[%s262 + $0x8] sm:$0xf]
      %v295 = vld [vmem:[%s262 + $0xc] sm:$0xf]
      %v296 = vld [vmem:[%s262 + $0x10] sm:$0xf]
      %v297 = vld [vmem:[%s262 + $0x14] sm:$0xf]
      %v298 = vld [vmem:[%s262 + $0x18] sm:$0xf]
      %v299 = vld [vmem:[%s262 + $0x1c] sm:$0xf]
      %v300 = vld [vmem:[%s267] sm:$0xf]
      %v301 = vld [vmem:[%s267 + $0x4] sm:$0xf]
      %v302 = vld [vmem:[%s262 + $0x20] sm:$0xf]
      %s303 = scalar_lea.vmem %s267, 8
      %v304 = vld [vmem:[%s303] sm:$0xf]
      %v305 = vld [vmem:[%s303 + $0x4] sm:$0xf]
      %v314 = vunpack.c.l.b16 %v293
      %v315 = vunpack.c.l.b16 %v294
      %v316 = vunpack.c.l.b16 %v295
      %v317 = vunpack.c.l.b16 %v296
      %v318 = vunpack.c.l.b16 %v297
      %v319 = vunpack.c.l.b16 %v298
      %v320 = vunpack.c.l.b16 %v299
      %v321 = vunpack.c.l.b16 %v302
      %v322 = vpack.c.b16 %v315, %v314
      %v323 = vpack.c.b16 %v317, %v316
      %v324 = vpack.c.b16 %v319, %v318
      %v325 = vpack.c.b16 %v321, %v320
      %v328 = vunpack.c.l.b16 %v304
      %v329 = vunpack.c.l.b16 %v305
      %v330 = vpack.c.b16 %v329, %v328
      %vm332 = vcmask 130048
      %v334 = vsel %vm332, %v322, 0
      %v337 = vsel %vm332, %v323, 0
      %v340 = vsel %vm332, %v324, 0
      %v343 = vsel %vm332, %v325, 0
      %345 = vmatprep.subr.bf16.mxu0 0
      %346 = vmatpush1.bf16.msra.mxu0 %v330
      %347 = vmatprep.subr.bf16.mxu0 0
      %348 = vmatpush1.bf16.msra.mxu0 0
      %349 = vmatprep.subr.bf16.mxu0 0
      %350 = vmatpush1.bf16.msra.mxu0 0
      %351 = vmatprep.subr.bf16.mxu0 0
      %352 = vmatpush1.bf16.msra.mxu0 0
      %353 = vmatprep.subr.bf16.mxu0 0
      %354 = vmatpush1.bf16.msra.mxu0 0
      %355 = vmatprep.subr.bf16.mxu0 0
      %356 = vmatpush1.bf16.msra.mxu0 0
      %357 = vmatprep.subr.bf16.mxu0 0
      %358 = vmatpush1.bf16.msra.mxu0 0
      %359 = vmatprep.subr.bf16.mxu0 0
      %360 = vmatpush1.bf16.msra.mxu0 0
      %361 = vmatprep.subr.bf16.mxu0 0
      %362 = vmatpush1.bf16.msra.mxu0 0
      %363 = vmatprep.subr.bf16.mxu0 0
      %364 = vmatpush1.bf16.msra.mxu0 0
      %365 = vmatprep.subr.bf16.mxu0 0
      %366 = vmatpush1.bf16.msra.mxu0 0
      %367 = vmatprep.subr.bf16.mxu0 0
      %368 = vmatpush1.bf16.msra.mxu0 0
      %369 = vmatprep.subr.bf16.mxu0 0
      %370 = vmatpush1.bf16.msra.mxu0 0
      %371 = vmatprep.subr.bf16.mxu0 0
      %372 = vmatpush1.bf16.msra.mxu0 0
      %373 = vmatprep.subr.bf16.mxu0 0
      %374 = vmatpush1.bf16.msra.mxu0 0
      %375 = vmatprep.subr.bf16.mxu0 0
      %376 = vmatpush1.bf16.msra.mxu0 0
      %377 = vmatprep.mubr.bf16.mxu0 0
      %378 = vmatmul.mubr.bf16.gmra.mrb[0].mxu0 %v334
      %v379 = vpop.f32.mrb[0].mxu0
      %v380 = vadd.f32 0.0, %v379
      %v381 = vpop.f32.mrb[0].mxu0
      %v382 = vpop.f32.mrb[0].mxu0
      %v383 = vadd.f32 0.0, %v382
      %v384 = vpop.f32.mrb[0].mxu0
      %385 = vmatprep.mubr.bf16.mxu0 0
      %386 = vmatmul.mubr.bf16.gmra.mrb[0].mxu0 %v337
      %v387 = vpop.f32.mrb[0].mxu0
      %v388 = vadd.f32 0.0, %v387
      %v389 = vpop.f32.mrb[0].mxu0
      %v390 = vpop.f32.mrb[0].mxu0
      %v391 = vadd.f32 0.0, %v390
      %v392 = vpop.f32.mrb[0].mxu0
      %393 = vmatprep.mubr.bf16.mxu0 0
      %394 = vmatmul.mubr.bf16.gmra.mrb[0].mxu0 %v340
      %v395 = vpop.f32.mrb[0].mxu0
      %v396 = vadd.f32 0.0, %v395
      %v397 = vpop.f32.mrb[0].mxu0
      %v398 = vpop.f32.mrb[0].mxu0
      %v399 = vadd.f32 0.0, %v398
      %v400 = vpop.f32.mrb[0].mxu0
      %401 = vmatprep.mubr.bf16.mxu0 0
      %402 = vmatmul.mubr.bf16.gmra.mrb[0].mxu0 %v343
      %v403 = vpop.f32.mrb[0].mxu0
      %v404 = vadd.f32 0.0, %v403
      %v405 = vpop.f32.mrb[0].mxu0
      %v406 = vpop.f32.mrb[0].mxu0
      %v407 = vadd.f32 0.0, %v406
      %v408 = vpop.f32.mrb[0].mxu0
      %409 = vdwg.mxu0
      %v411 = vunpack.c.l.b16 %v292
      %v412 = vpack.c.b16 %v314, %v411
      %v413 = vpack.c.b16 %v316, %v315
      %v414 = vpack.c.b16 %v318, %v317
      %v415 = vpack.c.b16 %v320, %v319
      %v418 = vunpack.c.l.b16 %v300
      %v419 = vunpack.c.l.b16 %v301
      %v420 = vpack.c.b16 %v419, %v418
      %v423 = vsel %vm332, %v412, 0
      %v426 = vsel %vm332, %v413, 0
      %v429 = vsel %vm332, %v414, 0
      %v432 = vsel %vm332, %v415, 0
      %434 = vmatprep.subr.bf16.mxu0 0
      %435 = vmatpush1.bf16.msra.mxu0 %v420
      %436 = vmatprep.subr.bf16.mxu0 0
      %437 = vmatpush1.bf16.msra.mxu0 0
      %438 = vmatprep.subr.bf16.mxu0 0
      %439 = vmatpush1.bf16.msra.mxu0 0
      %440 = vmatprep.subr.bf16.mxu0 0
      %441 = vmatpush1.bf16.msra.mxu0 0
      %442 = vmatprep.subr.bf16.mxu0 0
      %443 = vmatpush1.bf16.msra.mxu0 0
      %444 = vmatprep.subr.bf16.mxu0 0
      %445 = vmatpush1.bf16.msra.mxu0 0
      %446 = vmatprep.subr.bf16.mxu0 0
      %447 = vmatpush1.bf16.msra.mxu0 0
      %448 = vmatprep.subr.bf16.mxu0 0
      %449 = vmatpush1.bf16.msra.mxu0 0
      %450 = vmatprep.subr.bf16.mxu0 0
      %451 = vmatpush1.bf16.msra.mxu0 0
      %452 = vmatprep.subr.bf16.mxu0 0
      %453 = vmatpush1.bf16.msra.mxu0 0
      %454 = vmatprep.subr.bf16.mxu0 0
      %455 = vmatpush1.bf16.msra.mxu0 0
      %456 = vmatprep.subr.bf16.mxu0 0
      %457 = vmatpush1.bf16.msra.mxu0 0
      %458 = vmatprep.subr.bf16.mxu0 0
      %459 = vmatpush1.bf16.msra.mxu0 0
      %460 = vmatprep.subr.bf16.mxu0 0
      %461 = vmatpush1.bf16.msra.mxu0 0
      %462 = vmatprep.subr.bf16.mxu0 0
      %463 = vmatpush1.bf16.msra.mxu0 0
      %464 = vmatprep.subr.bf16.mxu0 0
      %465 = vmatpush1.bf16.msra.mxu0 0
      %466 = vmatprep.mubr.bf16.mxu0 0
      %467 = vmatmul.mubr.bf16.gmra.mrb[0].mxu0 %v423
      %v468 = vpop.f32.mrb[0].mxu0
      %v469 = vadd.f32 %v380, %v468
      %v470 = vpop.f32.mrb[0].mxu0
      %v471 = vpop.f32.mrb[0].mxu0
      %v472 = vadd.f32 %v383, %v471
      %v473 = vpop.f32.mrb[0].mxu0
      %474 = vmatprep.mubr.bf16.mxu0 0
      %475 = vmatmul.mubr.bf16.gmra.mrb[0].mxu0 %v426
      %v476 = vpop.f32.mrb[0].mxu0
      %v477 = vadd.f32 %v388, %v476
      %v478 = vpop.f32.mrb[0].mxu0
      %v479 = vpop.f32.mrb[0].mxu0
      %v480 = vadd.f32 %v391, %v479
      %v481 = vpop.f32.mrb[0].mxu0
      %482 = vmatprep.mubr.bf16.mxu0 0
      %483 = vmatmul.mubr.bf16.gmra.mrb[0].mxu0 %v429
      %v484 = vpop.f32.mrb[0].mxu0
      %v485 = vadd.f32 %v396, %v484
      %v486 = vpop.f32.mrb[0].mxu0
      %v487 = vpop.f32.mrb[0].mxu0
      %v488 = vadd.f32 %v399, %v487
      %v489 = vpop.f32.mrb[0].mxu0
      %490 = vmatprep.mubr.bf16.mxu0 0
      %491 = vmatmul.mubr.bf16.gmra.mrb[0].mxu0 %v432
      %v492 = vpop.f32.mrb[0].mxu0
      %v493 = vadd.f32 %v404, %v492
      %v494 = vpop.f32.mrb[0].mxu0
      %v495 = vpop.f32.mrb[0].mxu0
      %v496 = vadd.f32 %v407, %v495
      %v497 = vpop.f32.mrb[0].mxu0
      %498 = vdwg.mxu0
      %v499 = vpack.c.bf16 %v472, %v469
      %v500 = vpack.c.bf16 %v480, %v477
      %v501 = vpack.c.bf16 %v488, %v485
      %v502 = vpack.c.bf16 %v496, %v493
      %v507 = vunpack.c.l.b16 %v499
      %v508 = vunpack.c.h.b16 %v499
      %v509 = vunpack.c.l.b16 %v500
      %v510 = vunpack.c.h.b16 %v500
      %v511 = vunpack.c.l.b16 %v501
      %v512 = vunpack.c.h.b16 %v501
      %v513 = vunpack.c.l.b16 %v502
      %v514 = vunpack.c.h.b16 %v502
      %v515 = vpack.c.b16 %v507, %v507
      %v516 = vpack.c.b16 %v508, %v508
      %v517 = vpack.c.b16 %v509, %v509
      %v518 = vpack.c.b16 %v510, %v510
      %v519 = vpack.c.b16 %v511, %v511
      %v520 = vpack.c.b16 %v512, %v512
      %v521 = vpack.c.b16 %v513, %v513
      %v522 = vpack.c.b16 %v514, %v514
      %vm531 = vcmask 60416
      %532 = vst.msk [vmem:[%s276] sm:$0xf] %vm531, %v515
      %533 = vst.msk [vmem:[%s276 + $0x4] sm:$0xf] %vm531, %v516
      %534 = vst.msk [vmem:[%s276 + $0x8] sm:$0xf] %vm531, %v517
      %535 = vst.msk [vmem:[%s276 + $0xc] sm:$0xf] %vm531, %v518
      %536 = vst.msk [vmem:[%s276 + $0x10] sm:$0xf] %vm531, %v519
      %537 = vst.msk [vmem:[%s276 + $0x14] sm:$0xf] %vm531, %v520
      %538 = vst.msk [vmem:[%s276 + $0x18] sm:$0xf] %vm531, %v521
      %539 = vst.msk [vmem:[%s276 + $0x1c] sm:$0xf] %vm531, %v522
      %vm540 = vcmask 64512
      %v541 = vsel %vm540, %v469, 0.0
      %v542 = vsel %vm540, %v472, 0.0
      %v543 = vadd.f32 %v541, %v542
      %v544 = vsel %vm540, %v477, 0.0
      %v545 = vadd.f32 %v543, %v544
      %v546 = vsel %vm540, %v480, 0.0
      %v547 = vadd.f32 %v545, %v546
      %v548 = vsel %vm540, %v485, 0.0
      %v549 = vadd.f32 %v547, %v548
      %v550 = vsel %vm540, %v488, 0.0
      %v551 = vadd.f32 %v549, %v550
      %v552 = vsel %vm540, %v493, 0.0
      %v553 = vadd.f32 %v551, %v552
      %v554 = vsel %vm540, %v496, 0.0
      %v555 = vadd.f32 %v553, %v554
      %v556 = vrot.slane %v555, 4
      %v557 = vadd.f32 %v555, %v556
      %v558 = vrot.slane %v557, 2
      %v559 = vadd.f32 %v557, %v558
      %v560 = vrot.slane %v559, 1
      %v561 = vadd.f32 %v559, %v560
      %v562 = vmul.f32 %v469, %v469
      %v563 = vmul.f32 %v472, %v472
      %v564 = vmul.f32 %v477, %v477
      %v565 = vmul.f32 %v480, %v480
      %v566 = vmul.f32 %v485, %v485
      %v567 = vmul.f32 %v488, %v488
      %v568 = vmul.f32 %v493, %v493
      %v569 = vmul.f32 %v496, %v496
      %v570 = vsel %vm540, %v562, 0.0
      %v571 = vsel %vm540, %v563, 0.0
      %v572 = vadd.f32 %v570, %v571
      %v573 = vsel %vm540, %v564, 0.0
      %v574 = vadd.f32 %v572, %v573
      %v575 = vsel %vm540, %v565, 0.0
      %v576 = vadd.f32 %v574, %v575
      %v577 = vsel %vm540, %v566, 0.0
      %v578 = vadd.f32 %v576, %v577
      %v579 = vsel %vm540, %v567, 0.0
      %v580 = vadd.f32 %v578, %v579
      %v581 = vsel %vm540, %v568, 0.0
      %v582 = vadd.f32 %v580, %v581
      %v583 = vsel %vm540, %v569, 0.0
      %v584 = vadd.f32 %v582, %v583
      %v585 = vrot.slane %v584, 4
      %v586 = vadd.f32 %v584, %v585
      %v587 = vrot.slane %v586, 2
      %v588 = vadd.f32 %v586, %v587
      %v589 = vrot.slane %v588, 1
      %v590 = vadd.f32 %v588, %v589
      %v591 = vld [vmem:[%s262 + $0x4] sm:$0xf]
      %v592 = vld [vmem:[%s262 + $0x8] sm:$0xf]
      %v593 = vld [vmem:[%s262 + $0xc] sm:$0xf]
      %v594 = vld [vmem:[%s262 + $0x10] sm:$0xf]
      %v595 = vld [vmem:[%s262 + $0x14] sm:$0xf]
      %v596 = vld [vmem:[%s262 + $0x18] sm:$0xf]
      %v597 = vld [vmem:[%s262 + $0x1c] sm:$0xf]
      %v598 = vld [vmem:[%s262 + $0x20] sm:$0xf]
      %s599 = scalar_lea.vmem %s267, 16
      %v600 = vld [vmem:[%s599] sm:$0xf]
      %v601 = vld [vmem:[%s599 + $0x4] sm:$0xf]
      %v602 = vld [vmem:[%s262 + $0x24] sm:$0xf]
      %s603 = scalar_lea.vmem %s267, 24
      %v604 = vld [vmem:[%s603] sm:$0xf]
      %v605 = vld [vmem:[%s603 + $0x4] sm:$0xf]
      %v614 = vunpack.c.l.b16 %v592
      %v615 = vunpack.c.l.b16 %v593
      %v616 = vunpack.c.l.b16 %v594
      %v617 = vunpack.c.l.b16 %v595
      %v618 = vunpack.c.l.b16 %v596
      %v619 = vunpack.c.l.b16 %v597
      %v620 = vunpack.c.l.b16 %v598
      %v621 = vunpack.c.l.b16 %v602
      %v622 = vpack.c.b16 %v615, %v614
      %v623 = vpack.c.b16 %v617, %v616
      %v624 = vpack.c.b16 %v619, %v618
      %v625 = vpack.c.b16 %v621, %v620
      %v628 = vunpack.c.l.b16 %v604
      %v629 = vunpack.c.l.b16 %v605
      %v630 = vpack.c.b16 %v629, %v628
      %v633 = vsel %vm332, %v622, 0
      %v636 = vsel %vm332, %v623, 0
      %v639 = vsel %vm332, %v624, 0
      %v642 = vsel %vm332, %v625, 0
      %644 = vmatprep.subr.bf16.mxu0 0
      %645 = vmatpush1.bf16.msra.mxu0 %v630
      %646 = vmatprep.subr.bf16.mxu0 0
      %647 = vmatpush1.bf16.msra.mxu0 0
      %648 = vmatprep.subr.bf16.mxu0 0
      %649 = vmatpush1.bf16.msra.mxu0 0
      %650 = vmatprep.subr.bf16.mxu0 0
      %651 = vmatpush1.bf16.msra.mxu0 0
      %652 = vmatprep.subr.bf16.mxu0 0
      %653 = vmatpush1.bf16.msra.mxu0 0
      %654 = vmatprep.subr.bf16.mxu0 0
      %655 = vmatpush1.bf16.msra.mxu0 0
      %656 = vmatprep.subr.bf16.mxu0 0
      %657 = vmatpush1.bf16.msra.mxu0 0
      %658 = vmatprep.subr.bf16.mxu0 0
      %659 = vmatpush1.bf16.msra.mxu0 0
      %660 = vmatprep.subr.bf16.mxu0 0
      %661 = vmatpush1.bf16.msra.mxu0 0
      %662 = vmatprep.subr.bf16.mxu0 0
      %663 = vmatpush1.bf16.msra.mxu0 0
      %664 = vmatprep.subr.bf16.mxu0 0
      %665 = vmatpush1.bf16.msra.mxu0 0
      %666 = vmatprep.subr.bf16.mxu0 0
      %667 = vmatpush1.bf16.msra.mxu0 0
      %668 = vmatprep.subr.bf16.mxu0 0
      %669 = vmatpush1.bf16.msra.mxu0 0
      %670 = vmatprep.subr.bf16.mxu0 0
      %671 = vmatpush1.bf16.msra.mxu0 0
      %672 = vmatprep.subr.bf16.mxu0 0
      %673 = vmatpush1.bf16.msra.mxu0 0
      %674 = vmatprep.subr.bf16.mxu0 0
      %675 = vmatpush1.bf16.msra.mxu0 0
      %676 = vmatprep.mubr.bf16.mxu0 0
      %677 = vmatmul.mubr.bf16.gmra.mrb[0].mxu0 %v633
      %v678 = vpop.f32.mrb[0].mxu0
      %v679 = vadd.f32 0.0, %v678
      %v680 = vpop.f32.mrb[0].mxu0
      %v681 = vpop.f32.mrb[0].mxu0
      %v682 = vadd.f32 0.0, %v681
      %v683 = vpop.f32.mrb[0].mxu0
      %684 = vmatprep.mubr.bf16.mxu0 0
      %685 = vmatmul.mubr.bf16.gmra.mrb[0].mxu0 %v636
      %v686 = vpop.f32.mrb[0].mxu0
      %v687 = vadd.f32 0.0, %v686
      %v688 = vpop.f32.mrb[0].mxu0
      %v689 = vpop.f32.mrb[0].mxu0
      %v690 = vadd.f32 0.0, %v689
      %v691 = vpop.f32.mrb[0].mxu0
      %692 = vmatprep.mubr.bf16.mxu0 0
      %693 = vmatmul.mubr.bf16.gmra.mrb[0].mxu0 %v639
      %v694 = vpop.f32.mrb[0].mxu0
      %v695 = vadd.f32 0.0, %v694
      %v696 = vpop.f32.mrb[0].mxu0
      %v697 = vpop.f32.mrb[0].mxu0
      %v698 = vadd.f32 0.0, %v697
      %v699 = vpop.f32.mrb[0].mxu0
      %700 = vmatprep.mubr.bf16.mxu0 0
      %701 = vmatmul.mubr.bf16.gmra.mrb[0].mxu0 %v642
      %v702 = vpop.f32.mrb[0].mxu0
      %v703 = vadd.f32 0.0, %v702
      %v704 = vpop.f32.mrb[0].mxu0
      %v705 = vpop.f32.mrb[0].mxu0
      %v706 = vadd.f32 0.0, %v705
      %v707 = vpop.f32.mrb[0].mxu0
      %708 = vdwg.mxu0
      %v710 = vunpack.c.l.b16 %v591
      %v711 = vpack.c.b16 %v614, %v710
      %v712 = vpack.c.b16 %v616, %v615
      %v713 = vpack.c.b16 %v618, %v617
      %v714 = vpack.c.b16 %v620, %v619
      %v717 = vunpack.c.l.b16 %v600
      %v718 = vunpack.c.l.b16 %v601
      %v719 = vpack.c.b16 %v718, %v717
      %v722 = vsel %vm332, %v711, 0
      %v725 = vsel %vm332, %v712, 0
      %v728 = vsel %vm332, %v713, 0
      %v731 = vsel %vm332, %v714, 0
      %733 = vmatprep.subr.bf16.mxu0 0
      %734 = vmatpush1.bf16.msra.mxu0 %v719
      %735 = vmatprep.subr.bf16.mxu0 0
      %736 = vmatpush1.bf16.msra.mxu0 0
      %737 = vmatprep.subr.bf16.mxu0 0
      %738 = vmatpush1.bf16.msra.mxu0 0
      %739 = vmatprep.subr.bf16.mxu0 0
      %740 = vmatpush1.bf16.msra.mxu0 0
      %741 = vmatprep.subr.bf16.mxu0 0
      %742 = vmatpush1.bf16.msra.mxu0 0
      %743 = vmatprep.subr.bf16.mxu0 0
      %744 = vmatpush1.bf16.msra.mxu0 0
      %745 = vmatprep.subr.bf16.mxu0 0
      %746 = vmatpush1.bf16.msra.mxu0 0
      %747 = vmatprep.subr.bf16.mxu0 0
      %748 = vmatpush1.bf16.msra.mxu0 0
      %749 = vmatprep.subr.bf16.mxu0 0
      %750 = vmatpush1.bf16.msra.mxu0 0
      %751 = vmatprep.subr.bf16.mxu0 0
      %752 = vmatpush1.bf16.msra.mxu0 0
      %753 = vmatprep.subr.bf16.mxu0 0
      %754 = vmatpush1.bf16.msra.mxu0 0
      %755 = vmatprep.subr.bf16.mxu0 0
      %756 = vmatpush1.bf16.msra.mxu0 0
      %757 = vmatprep.subr.bf16.mxu0 0
      %758 = vmatpush1.bf16.msra.mxu0 0
      %759 = vmatprep.subr.bf16.mxu0 0
      %760 = vmatpush1.bf16.msra.mxu0 0
      %761 = vmatprep.subr.bf16.mxu0 0
      %762 = vmatpush1.bf16.msra.mxu0 0
      %763 = vmatprep.subr.bf16.mxu0 0
      %764 = vmatpush1.bf16.msra.mxu0 0
      %765 = vmatprep.mubr.bf16.mxu0 0
      %766 = vmatmul.mubr.bf16.gmra.mrb[0].mxu0 %v722
      %v767 = vpop.f32.mrb[0].mxu0
      %v768 = vadd.f32 %v679, %v767
      %v769 = vpop.f32.mrb[0].mxu0
      %v770 = vpop.f32.mrb[0].mxu0
      %v771 = vadd.f32 %v682, %v770
      %v772 = vpop.f32.mrb[0].mxu0
      %773 = vmatprep.mubr.bf16.mxu0 0
      %774 = vmatmul.mubr.bf16.gmra.mrb[0].mxu0 %v725
      %v775 = vpop.f32.mrb[0].mxu0
      %v776 = vadd.f32 %v687, %v775
      %v777 = vpop.f32.mrb[0].mxu0
      %v778 = vpop.f32.mrb[0].mxu0
      %v779 = vadd.f32 %v690, %v778
      %v780 = vpop.f32.mrb[0].mxu0
      %781 = vmatprep.mubr.bf16.mxu0 0
      %782 = vmatmul.mubr.bf16.gmra.mrb[0].mxu0 %v728
      %v783 = vpop.f32.mrb[0].mxu0
      %v784 = vadd.f32 %v695, %v783
      %v785 = vpop.f32.mrb[0].mxu0
      %v786 = vpop.f32.mrb[0].mxu0
      %v787 = vadd.f32 %v698, %v786
      %v788 = vpop.f32.mrb[0].mxu0
      %789 = vmatprep.mubr.bf16.mxu0 0
      %790 = vmatmul.mubr.bf16.gmra.mrb[0].mxu0 %v731
      %v791 = vpop.f32.mrb[0].mxu0
      %v792 = vadd.f32 %v703, %v791
      %v793 = vpop.f32.mrb[0].mxu0
      %v794 = vpop.f32.mrb[0].mxu0
      %v795 = vadd.f32 %v706, %v794
      %v796 = vpop.f32.mrb[0].mxu0
      %797 = vdwg.mxu0
      %v798 = vpack.c.bf16 %v771, %v768
      %v799 = vpack.c.bf16 %v779, %v776
      %v800 = vpack.c.bf16 %v787, %v784
      %v801 = vpack.c.bf16 %v795, %v792
      %v806 = vunpack.c.l.b16 %v798
      %v807 = vunpack.c.h.b16 %v798
      %v808 = vunpack.c.l.b16 %v799
      %v809 = vunpack.c.h.b16 %v799
      %v810 = vunpack.c.l.b16 %v800
      %v811 = vunpack.c.h.b16 %v800
      %v812 = vunpack.c.l.b16 %v801
      %v813 = vunpack.c.h.b16 %v801
      %v814 = vpack.c.b16 %v806, %v806
      %v815 = vpack.c.b16 %v807, %v807
      %v816 = vpack.c.b16 %v808, %v808
      %v817 = vpack.c.b16 %v809, %v809
      %v818 = vpack.c.b16 %v810, %v810
      %v819 = vpack.c.b16 %v811, %v811
      %v820 = vpack.c.b16 %v812, %v812
      %v821 = vpack.c.b16 %v813, %v813
      %830 = vst.msk [vmem:[%s276 + $0x20] sm:$0xf] %vm531, %v814
      %831 = vst.msk [vmem:[%s276 + $0x24] sm:$0xf] %vm531, %v815
      %832 = vst.msk [vmem:[%s276 + $0x28] sm:$0xf] %vm531, %v816
      %833 = vst.msk [vmem:[%s276 + $0x2c] sm:$0xf] %vm531, %v817
      %834 = vst.msk [vmem:[%s276 + $0x30] sm:$0xf] %vm531, %v818
      %835 = vst.msk [vmem:[%s276 + $0x34] sm:$0xf] %vm531, %v819
      %836 = vst.msk [vmem:[%s276 + $0x38] sm:$0xf] %vm531, %v820
      %837 = vst.msk [vmem:[%s276 + $0x3c] sm:$0xf] %vm531, %v821
      %v838 = vsel %vm540, %v768, 0.0
      %v839 = vsel %vm540, %v771, 0.0
      %v840 = vadd.f32 %v838, %v839
      %v841 = vsel %vm540, %v776, 0.0
      %v842 = vadd.f32 %v840, %v841
      %v843 = vsel %vm540, %v779, 0.0
      %v844 = vadd.f32 %v842, %v843
      %v845 = vsel %vm540, %v784, 0.0
      %v846 = vadd.f32 %v844, %v845
      %v847 = vsel %vm540, %v787, 0.0
      %v848 = vadd.f32 %v846, %v847
      %v849 = vsel %vm540, %v792, 0.0
      %v850 = vadd.f32 %v848, %v849
      %v851 = vsel %vm540, %v795, 0.0
      %v852 = vadd.f32 %v850, %v851
      %v853 = vrot.slane %v852, 4
      %v854 = vadd.f32 %v852, %v853
      %v855 = vrot.slane %v854, 2
      %v856 = vadd.f32 %v854, %v855
      %v857 = vrot.slane %v856, 1
      %v858 = vadd.f32 %v856, %v857
      %v859 = vmul.f32 %v768, %v768
      %v860 = vmul.f32 %v771, %v771
      %v861 = vmul.f32 %v776, %v776
      %v862 = vmul.f32 %v779, %v779
      %v863 = vmul.f32 %v784, %v784
      %v864 = vmul.f32 %v787, %v787
      %v865 = vmul.f32 %v792, %v792
      %v866 = vmul.f32 %v795, %v795
      %v867 = vsel %vm540, %v859, 0.0
      %v868 = vsel %vm540, %v860, 0.0
      %v869 = vadd.f32 %v867, %v868
      %v870 = vsel %vm540, %v861, 0.0
      %v871 = vadd.f32 %v869, %v870
      %v872 = vsel %vm540, %v862, 0.0
      %v873 = vadd.f32 %v871, %v872
      %v874 = vsel %vm540, %v863, 0.0
      %v875 = vadd.f32 %v873, %v874
      %v876 = vsel %vm540, %v864, 0.0
      %v877 = vadd.f32 %v875, %v876
      %v878 = vsel %vm540, %v865, 0.0
      %v879 = vadd.f32 %v877, %v878
      %v880 = vsel %vm540, %v866, 0.0
      %v881 = vadd.f32 %v879, %v880
      %v882 = vrot.slane %v881, 4
      %v883 = vadd.f32 %v881, %v882
      %v884 = vrot.slane %v883, 2
      %v885 = vadd.f32 %v883, %v884
      %v886 = vrot.slane %v885, 1
      %v887 = vadd.f32 %v885, %v886
      %v888 = vadd.f32 %v561, %v858
      %v889 = vadd.f32 %v590, %v887
      %vm890 = vcmask 57344
      %891 = vst.msk [vmem:[%s283] sm:$0x1] %vm890, %v888
      %892 = vst.msk [vmem:[%s290] sm:$0x1] %vm890, %v889
      %p893 = scmp.lt.s32.totalorder %s20, 1
      %s894 = scalar_select %p893, %s20, 1
      %p895 = scmp.lt.s32.totalorder %s21, 1
      %s896 = scalar_select %p895, %s21, 1
      %s897 = smul.addr %s896, 16
      %s898 = smul.addr %s894, 32
      %s899 = sadd.s32 %s897, %s898
      %s900 = smul.addr %s899, 4
      %s901 = scalar_lea.vmem %s2, %s900
      %p902 = scmp.lt.s32.totalorder %s20, 1
      %s903 = scalar_select %p902, %s20, 1
      %p904 = scmp.lt.s32.totalorder %s21, 1
      %s905 = scalar_select %p904, %s21, 1
      %s906 = smul.addr %s903, 2
      %s907 = sadd.s32 %s905, %s906
      %s908 = scalar_lea.vmem %s3, %s907
      %p909 = scmp.lt.s32.totalorder %s20, 1
      %s910 = scalar_select %p909, %s20, 1
      %p911 = scmp.lt.s32.totalorder %s21, 1
      %s912 = scalar_select %p911, %s21, 1
      %s913 = smul.addr %s910, 2
      %s914 = sadd.s32 %s912, %s913
      %s915 = scalar_lea.vmem %s4, %s914
      // Predicated region
      $region29: #{upblock_forward.4} parent=27 // pred_check
        %p916 = pneg %p102
      $region30: #{upblock_forward.4} parent=27 // pred_check_branch
        %918 = sbr.rel (%p916) target = $region32
      $region31: #{upblock_forward.4} parent=27 // pred_region
        _
      $region32: #{upblock_forward.4} parent=27 // pred_fallthru
        _
      // Predicated region
      $region33: #{upblock_forward.4} parent=27 // pred_check
        %p919 = pneg %p130
      $region34: #{upblock_forward.4} parent=27 // pred_check_branch
        %921 = sbr.rel (%p919) target = $region36
      $region35: #{upblock_forward.4} parent=27 // pred_region
        _
      $region36: #{upblock_forward.4} parent=27 // pred_fallthru
        _
      // Predicated region
      $region37: #{upblock_forward.4} parent=27 // pred_check
        %p922 = pneg %p158
      $region38: #{upblock_forward.4} parent=27 // pred_check_branch
        %924 = sbr.rel (%p922) target = $region40
      $region39: #{upblock_forward.4} parent=27 // pred_region
        _
      $region40: #{upblock_forward.4} parent=27 // pred_fallthru
        _
    $region28: #{upblock_forward.4} parent=5 // pred_fallthru
      _
    %p925 = scmp.le.s32.totalorder 2, %s11
    // Predicated region
    $region41: #{upblock_forward.4} parent=5 // pred_check
      %p926 = pneg %p925
    $region42: #{upblock_forward.4} parent=5 // pred_check_branch
      %928 = sbr.rel (%p926) target = $region44
    $region43: #{upblock_forward.4} parent=5 // pred_region
      %s929 = ssub.s32 %s11, 2
      // Predicated region
      $region45: #{upblock_forward.4} parent=43 // pred_check
        %p930 = pneg %p108
      $region46: #{upblock_forward.4} parent=43 // pred_check_branch
        %932 = sbr.rel (%p930) target = $region48
      $region47: #{upblock_forward.4} parent=43 // pred_region
        %p933 = scmp.lt.s32.totalorder %s22, 1
        %s934 = scalar_select %p933, %s22, 1
        %p935 = scmp.lt.s32.totalorder %s23, 1
        %s936 = scalar_select %p935, %s23, 1
        %s937 = smul.addr %s936, 16
        %s938 = smul.addr %s934, 32
        %s939 = sadd.s32 %s937, %s938
        %s940 = smul.addr %s939, 4
        %s941 = scalar_lea.vmem %s2, %s940
      $region48: #{upblock_forward.4} parent=43 // pred_fallthru
        _
      // Predicated region
      $region49: #{upblock_forward.4} parent=43 // pred_check
        %p942 = pneg %p136
      $region50: #{upblock_forward.4} parent=43 // pred_check_branch
        %944 = sbr.rel (%p942) target = $region52
      $region51: #{upblock_forward.4} parent=43 // pred_region
        %p945 = scmp.lt.s32.totalorder %s22, 1
        %s946 = scalar_select %p945, %s22, 1
        %p947 = scmp.lt.s32.totalorder %s23, 1
        %s948 = scalar_select %p947, %s23, 1
        %s949 = smul.addr %s946, 2
        %s950 = sadd.s32 %s948, %s949
        %s951 = scalar_lea.vmem %s3, %s950
      $region52: #{upblock_forward.4} parent=43 // pred_fallthru
        _
      // Predicated region
      $region53: #{upblock_forward.4} parent=43 // pred_check
        %p952 = pneg %p164
      $region54: #{upblock_forward.4} parent=43 // pred_check_branch
        %954 = sbr.rel (%p952) target = $region56
      $region55: #{upblock_forward.4} parent=43 // pred_region
        %p955 = scmp.lt.s32.totalorder %s22, 1
        %s956 = scalar_select %p955, %s22, 1
        %p957 = scmp.lt.s32.totalorder %s23, 1
        %s958 = scalar_select %p957, %s23, 1
        %s959 = smul.addr %s956, 2
        %s960 = sadd.s32 %s958, %s959
        %s961 = scalar_lea.vmem %s4, %s960
      $region56: #{upblock_forward.4} parent=43 // pred_fallthru
        _
    $region44: #{upblock_forward.4} parent=5 // pred_fallthru
      _
  $region6: #{upblock_forward.4} parent=0 // loop_footer
    %s15 = sadd.s32 1, %s11
  $region7: #{upblock_forward.4} parent=0 // loop_footer_branch
    %10 = sbr.rel target = $region3
  $region8: #{upblock_forward.4} parent=0 // loop_exit
    _

// kernel: upblock_forward.5
$region0: #{upblock_forward.5}
  #allocation0 [shape = 'u32[]', space=smem, size = 0x4, offset = 0x4, fixed_abs, tag = 'smem constant byte address 0x4 - core index']
  #allocation1 [shape = 'u32[144,128]{1,0:T(1,128)}', space=vmem, size = 0x12000, scoped, tag = 'internal scratch']
  %s0 = inlined_call_operand.vmem [shape: bf16[4,160,12], index: 0, kind: input, shape index: {}]
  %s1 = inlined_call_operand.vmem [shape: bf16[3,12,4], index: 1, kind: input, shape index: {}]
  %s2 = inlined_call_operand.vmem [shape: bf16[4,128,4], index: 2, kind: output, shape index: {0}]
  %s3 = inlined_call_operand.vmem [shape: f32[4,1,4], index: 3, kind: output, shape index: {1}]
  %s4 = inlined_call_operand.vmem [shape: f32[4,1,4], index: 4, kind: output, shape index: {2}]
  %5 = xla_tuple %s2, %s3, %s4
  %s6 = sld [smem:[#allocation0]]
  $region57: #{upblock_forward.5} parent=0
    _
  %s8 = ssub.s32 1, %s6
  %s9 = scalar_select 0, %s8, %s6
  loop: start=0, step=1, limit=6
  $region2: #{upblock_forward.5} parent=0 // loop_pre_header
    _
  $region3: #{upblock_forward.5} parent=0 // loop_header
    %s11 = sphi 0, %s15
    %p12 = scmp.ge.s32.totalorder %s11, 6
    %s21 = sphi 0, %s23
    %s24 = sphi 0, %s21
    %s25 = sphi 0, %s24
    %s41 = sphi 0, %s25
    %s45 = sphi 0, %s45
    %s47 = sphi 0, %s45
    %s48 = sphi 0, %s47
    %s62 = sphi 0, %s48
    %s68 = sphi 0, %s70
    %s71 = sphi 0, %s68
    %s72 = sphi 0, %s71
    %s88 = sphi 0, %s72
    %s94 = sphi 0, %s96
    %s97 = sphi 0, %s94
    %s98 = sphi 0, %s97
    %s114 = sphi 0, %s98
    %s120 = sphi 0, %s122
    %s123 = sphi 0, %s120
    %s124 = sphi 0, %s123
    %s140 = sphi 0, %s124
  $region4: #{upblock_forward.5} parent=0 // loop_header_branch
    %14 = sbr.rel (%p12) target = $region8
  $region5: #{upblock_forward.5} parent=0 // loop_body
    %s16 = ssub.s32 %s11, 1
    %s17 = ssub.s32 %s11, 2
    %s18 = sadd.s32 %s11, 1
    %s19 = ssub.s32 %s11, %s18
    %p20 = scmp.eq.s32.totalorder %s19, 0
    %s22 = sadd.s32 %s21, 1
    %s23 = scalar_select %p20, %s21, %s22
    %p26 = pneg %p20
    %p27 = scmp.eq.s32.totalorder %s11, 3
    %p28 = por %p26, %p27
    %p29 = scmp.ne.s32.totalorder %s21, %s24
    %p30 = scmp.eq.s32.totalorder %s11, 0
    %p31 = por %p29, %p30
    %p32 = scmp.ne.s32.totalorder %s21, %s24
    %p33 = scmp.eq.s32.totalorder %s16, 3
    %p34 = por %p32, %p33
    %p35 = scmp.ne.s32.totalorder %s24, %s25
    %p36 = scmp.eq.s32.totalorder %s16, 0
    %p37 = por %p35, %p36
    %p38 = scmp.ne.s32.totalorder %s24, %s25
    %p39 = scmp.eq.s32.totalorder %s17, 3
    %p40 = por %p38, %p39
    %p42 = scmp.ne.s32.totalorder %s25, %s41
    %p43 = scmp.eq.s32.totalorder %s17, 0
    %p44 = por %p42, %p43
    %s46 = sadd.s32 %s45, 1
    %p49 = scmp.eq.s32.totalorder %s11, 3
    %p50 = scmp.ne.s32.totalorder %s45, %s47
    %p51 = scmp.eq.s32.totalorder %s11, 0
    %p52 = por %p50, %p51
    %p53 = scmp.ne.s32.totalorder %s45, %s47
    %p54 = scmp.eq.s32.totalorder %s16, 3
    %p55 = por %p53, %p54
    %p56 = scmp.ne.s32.totalorder %s47, %s48
    %p57 = scmp.eq.s32.totalorder %s16, 0
    %p58 = por %p56, %p57
    %p59 = scmp.ne.s32.totalorder %s47, %s48
    %p60 = scmp.eq.s32.totalorder %s17, 3
    %p61 = por %p59, %p60
    %p63 = scmp.ne.s32.totalorder %s48, %s62
    %p64 = scmp.eq.s32.totalorder %s17, 0
    %p65 = por %p63, %p64
    %s66 = ssub.s32 %s11, %s18
    %p67 = scmp.eq.s32.totalorder %s66, 0
    %s69 = sadd.s32 %s68, 1
    %s70 = scalar_select %p67, %s68, %s69
    %p73 = pneg %p67
    %p74 = scmp.eq.s32.totalorder %s11, 3
    %p75 = por %p73, %p74
    %p76 = scmp.ne.s32.totalorder %s68, %s71
    %p77 = scmp.eq.s32.totalorder %s11, 0
    %p78 = por %p76, %p77
    %p79 = scmp.ne.s32.totalorder %s68, %s71
    %p80 = scmp.eq.s32.totalorder %s16, 3
    %p81 = por %p79, %p80
    %p82 = scmp.ne.s32.totalorder %s71, %s72
    %p83 = scmp.eq.s32.totalorder %s16, 0
    %p84 = por %p82, %p83
    %p85 = scmp.ne.s32.totalorder %s71, %s72
    %p86 = scmp.eq.s32.totalorder %s17, 3
    %p87 = por %p85, %p86
    %p89 = scmp.ne.s32.totalorder %s72, %s88
    %p90 = scmp.eq.s32.totalorder %s17, 0
    %p91 = por %p89, %p90
    %s92 = ssub.s32 %s11, %s18
    %p93 = scmp.eq.s32.totalorder %s92, 0
    %s95 = sadd.s32 %s94, 1
    %s96 = scalar_select %p93, %s94, %s95
    %p99 = pneg %p93
    %p100 = scmp.eq.s32.totalorder %s11, 3
    %p101 = por %p99, %p100
    %p102 = scmp.ne.s32.totalorder %s94, %s97
    %p103 = scmp.eq.s32.totalorder %s11, 0
    %p104 = por %p102, %p103
    %p105 = scmp.ne.s32.totalorder %s94, %s97
    %p106 = scmp.eq.s32.totalorder %s16, 3
    %p107 = por %p105, %p106
    %p108 = scmp.ne.s32.totalorder %s97, %s98
    %p109 = scmp.eq.s32.totalorder %s16, 0
    %p110 = por %p108, %p109
    %p111 = scmp.ne.s32.totalorder %s97, %s98
    %p112 = scmp.eq.s32.totalorder %s17, 3
    %p113 = por %p111, %p112
    %p115 = scmp.ne.s32.totalorder %s98, %s114
    %p116 = scmp.eq.s32.totalorder %s17, 0
    %p117 = por %p115, %p116
    %s118 = ssub.s32 %s11, %s18
    %p119 = scmp.eq.s32.totalorder %s118, 0
    %s121 = sadd.s32 %s120, 1
    %s122 = scalar_select %p119, %s120, %s121
    %p125 = pneg %p119
    %p126 = scmp.eq.s32.totalorder %s11, 3
    %p127 = por %p125, %p126
    %p128 = scmp.ne.s32.totalorder %s120, %s123
    %p129 = scmp.eq.s32.totalorder %s11, 0
    %p130 = por %p128, %p129
    %p131 = scmp.ne.s32.totalorder %s120, %s123
    %p132 = scmp.eq.s32.totalorder %s16, 3
    %p133 = por %p131, %p132
    %p134 = scmp.ne.s32.totalorder %s123, %s124
    %p135 = scmp.eq.s32.totalorder %s16, 0
    %p136 = por %p134, %p135
    %p137 = scmp.ne.s32.totalorder %s123, %s124
    %p138 = scmp.eq.s32.totalorder %s17, 3
    %p139 = por %p137, %p138
    %p141 = scmp.ne.s32.totalorder %s124, %s140
    %p142 = scmp.eq.s32.totalorder %s17, 0
    %p143 = por %p141, %p142
    %p144 = scmp.le.s32.totalorder 1, %s11
    %p145 = scmp.lt.s32.totalorder %s11, 5
    %p146 = pnand %p144, %p145
    %p147 = pneg %p146
    // Predicated region
    $region9: #{upblock_forward.5} parent=5 // pred_check
      _
    $region10: #{upblock_forward.5} parent=5 // pred_check_branch
      %149 = sbr.rel (%p146) target = $region12
    $region11: #{upblock_forward.5} parent=5 // pred_region
      %s150 = ssub.s32 %s11, 1
      // Predicated region
      $region13: #{upblock_forward.5} parent=11 // pred_check
        %p151 = pneg %p58
      $region14: #{upblock_forward.5} parent=11 // pred_check_branch
        %153 = sbr.rel (%p151) target = $region16
      $region15: #{upblock_forward.5} parent=11 // pred_region
        _
      $region16: #{upblock_forward.5} parent=11 // pred_fallthru
        _
    $region12: #{upblock_forward.5} parent=5 // pred_fallthru
      _
    %p154 = scmp.lt.s32.totalorder %s11, 4
    // Predicated region
    $region17: #{upblock_forward.5} parent=5 // pred_check
      %p155 = pneg %p154
    $region18: #{upblock_forward.5} parent=5 // pred_check_branch
      %157 = sbr.rel (%p155) target = $region20
    $region19: #{upblock_forward.5} parent=5 // pred_region
      // Predicated region
      $region21: #{upblock_forward.5} parent=19 // pred_check
        %p158 = pneg %p31
      $region22: #{upblock_forward.5} parent=19 // pred_check_branch
        %160 = sbr.rel (%p158) target = $region24
      $region23: #{upblock_forward.5} parent=19 // pred_region
        %p161 = scmp.lt.s32.totalorder %s11, 3
        %s162 = scalar_select %p161, %s11, 3
        %s163 = smul.addr %s162, 20
        %s164 = smul.addr %s163, 4
        %s165 = scalar_lea.vmem %s0, %s164
      $region24: #{upblock_forward.5} parent=19 // pred_fallthru
        _
    $region20: #{upblock_forward.5} parent=5 // pred_fallthru
      _
    %p166 = scmp.le.s32.totalorder 1, %s11
    %p167 = scmp.lt.s32.totalorder %s11, 5
    %p168 = pnand %p166, %p167
    %p169 = pneg %p168
    // Predicated region
    $region25: #{upblock_forward.5} parent=5 // pred_check
      _
    $region26: #{upblock_forward.5} parent=5 // pred_check_branch
      %171 = sbr.rel (%p168) target = $region28
    $region27: #{upblock_forward.5} parent=5 // pred_region
      %s172 = ssub.s32 %s11, 1
      %p173 = scmp.lt.s32.totalorder %s16, 3
      %s174 = scalar_select %p173, %s16, 3
      %s175 = smul.addr %s174, 20
      %s176 = smul.addr %s175, 4
      %s177 = scalar_lea.vmem %s0, %s176
      %p178 = pneg %p37
      %p179 = pneg %p34
      %p180 = pneg %p58
      %p181 = pneg %p55
      %p182 = pneg %p84
      %p183 = pneg %p81
      %p184 = scmp.lt.s32.totalorder %s16, 3
      %s185 = scalar_select %p184, %s16, 3
      %s186 = smul.addr %s185, 16
      %s187 = smul.addr %s186, 4
      %s188 = scalar_lea.vmem %s2, %s187
      %p189 = pneg %p110
      %p190 = pneg %p107
      %p191 = scmp.lt.s32.totalorder %s16, 3
      %s192 = scalar_select %p191, %s16, 3
      %s193 = scalar_lea.vmem %s3, %s192
      %p194 = pneg %p136
      %p195 = pneg %p133
      %p196 = scmp.lt.s32.totalorder %s16, 3
      %s197 = scalar_select %p196, %s16, 3
      %s198 = scalar_lea.vmem %s4, %s197
      %p199 = scmp.lt.s32.totalorder %s16, 3
      %s200 = scalar_select %p199, %s16, 3
      %s201 = smul.addr %s200, 20
      %s202 = smul.addr %s201, 4
      %s203 = scalar_lea.vmem %s0, %s202
      %p204 = scmp.lt.s32.totalorder %s16, 3
      %s205 = scalar_select %p204, %s16, 3
      %s206 = smul.addr %s205, 16
      %s207 = smul.addr %s206, 4
      %s208 = scalar_lea.vmem %s2, %s207
      %p209 = scmp.lt.s32.totalorder %s16, 3
      %s210 = scalar_select %p209, %s16, 3
      %s211 = scalar_lea.vmem %s3, %s210
      %p212 = scmp.lt.s32.totalorder %s16, 3
      %s213 = scalar_select %p212, %s16, 3
      %s214 = scalar_lea.vmem %s4, %s213
      %v216 = vld [vmem:[%s203] sm:$0xf]
      %v217 = vld [vmem:[%s203 + $0x4] sm:$0xf]
      %v218 = vld [vmem:[%s203 + $0x8] sm:$0xf]
      %v219 = vld [vmem:[%s203 + $0xc] sm:$0xf]
      %v220 = vld [vmem:[%s203 + $0x10] sm:$0xf]
      %v221 = vld [vmem:[%s203 + $0x14] sm:$0xf]
      %v222 = vld [vmem:[%s203 + $0x18] sm:$0xf]
      %v223 = vld [vmem:[%s203 + $0x1c] sm:$0xf]
      %v224 = vld [vmem:[%s203 + $0x20] sm:$0xf]
      %v225 = vld [vmem:[%s203 + $0x24] sm:$0xf]
      %v226 = vld [vmem:[%s203 + $0x28] sm:$0xf]
      %v227 = vld [vmem:[%s203 + $0x2c] sm:$0xf]
      %v228 = vld [vmem:[%s203 + $0x30] sm:$0xf]
      %v229 = vld [vmem:[%s203 + $0x34] sm:$0xf]
      %v230 = vld [vmem:[%s203 + $0x38] sm:$0xf]
      %v231 = vld [vmem:[%s203 + $0x3c] sm:$0xf]
      %v232 = vld [vmem:[%s203 + $0x40] sm:$0xf]
      %v233 = vld [vmem:[%s203 + $0x44] sm:$0xf]
      %v234 = vld [vmem:[%s203 + $0x48] sm:$0xf]
      %v235 = vld [vmem:[%s203 + $0x4c] sm:$0xf]
      %v236 = vunpack.c.l.bf16 %v216
      %v237 = vunpack.c.l.bf16 %v217
      %v238 = vunpack.c.l.bf16 %v218
      %v239 = vunpack.c.l.bf16 %v219
      %v240 = vunpack.c.l.bf16 %v220
      %v241 = vunpack.c.l.bf16 %v221
      %v242 = vunpack.c.l.bf16 %v222
      %v243 = vunpack.c.l.bf16 %v223
      %v244 = vunpack.c.l.bf16 %v224
      %v245 = vunpack.c.l.bf16 %v225
      %v246 = vunpack.c.l.bf16 %v226
      %v247 = vunpack.c.l.bf16 %v227
      %v248 = vunpack.c.l.bf16 %v228
      %v249 = vunpack.c.l.bf16 %v229
      %v250 = vunpack.c.l.bf16 %v230
      %v251 = vunpack.c.l.bf16 %v231
      %v252 = vunpack.c.l.bf16 %v232
      %v253 = vunpack.c.l.bf16 %v233
      %v254 = vunpack.c.l.bf16 %v234
      %v255 = vunpack.c.l.bf16 %v235
      %v256 = vmul.f32 %v236, 0.5
      %v257 = vmul.f32 %v237, 0.5
      %v258 = vmul.f32 %v238, 0.5
      %v259 = vmul.f32 %v239, 0.5
      %v260 = vmul.f32 %v240, 0.5
      %v261 = vmul.f32 %v241, 0.5
      %v262 = vmul.f32 %v242, 0.5
      %v263 = vmul.f32 %v243, 0.5
      %v264 = vmul.f32 %v244, 0.5
      %v265 = vmul.f32 %v245, 0.5
      %v266 = vmul.f32 %v246, 0.5
      %v267 = vmul.f32 %v247, 0.5
      %v268 = vmul.f32 %v248, 0.5
      %v269 = vmul.f32 %v249, 0.5
      %v270 = vmul.f32 %v250, 0.5
      %v271 = vmul.f32 %v251, 0.5
      %v272 = vmul.f32 %v252, 0.5
      %v273 = vmul.f32 %v253, 0.5
      %v274 = vmul.f32 %v254, 0.5
      %v275 = vmul.f32 %v255, 0.5
      %v276 = vmul.f32 %v236, 0.70710677
      %v277 = vmul.f32 %v237, 0.70710677
      %v278 = vmul.f32 %v238, 0.70710677
      %v279 = vmul.f32 %v239, 0.70710677
      %v280 = vmul.f32 %v240, 0.70710677
      %v281 = vmul.f32 %v241, 0.70710677
      %v282 = vmul.f32 %v242, 0.70710677
      %v283 = vmul.f32 %v243, 0.70710677
      %v284 = vmul.f32 %v244, 0.70710677
      %v285 = vmul.f32 %v245, 0.70710677
      %v286 = vmul.f32 %v246, 0.70710677
      %v287 = vmul.f32 %v247, 0.70710677
      %v288 = vmul.f32 %v248, 0.70710677
      %v289 = vmul.f32 %v249, 0.70710677
      %v290 = vmul.f32 %v250, 0.70710677
      %v291 = vmul.f32 %v251, 0.70710677
      %v292 = vmul.f32 %v252, 0.70710677
      %v293 = vmul.f32 %v253, 0.70710677
      %v294 = vmul.f32 %v254, 0.70710677
      %v295 = vmul.f32 %v255, 0.70710677
      %v296 = verf.f32.pop %v276
      %v297 = verf.f32.pop %v277
      %v298 = verf.f32.pop %v278
      %v299 = verf.f32.pop %v279
      %v300 = verf.f32.pop %v280
      %v301 = verf.f32.pop %v281
      %v302 = verf.f32.pop %v282
      %v303 = verf.f32.pop %v283
      %v304 = verf.f32.pop %v284
      %v305 = verf.f32.pop %v285
      %v306 = verf.f32.pop %v286
      %v307 = verf.f32.pop %v287
      %v308 = verf.f32.pop %v288
      %v309 = verf.f32.pop %v289
      %v310 = verf.f32.pop %v290
      %v311 = verf.f32.pop %v291
      %v312 = verf.f32.pop %v292
      %v313 = verf.f32.pop %v293
      %v314 = verf.f32.pop %v294
      %v315 = verf.f32.pop %v295
      %v316 = vadd.f32 %v296, 1.0
      %v317 = vadd.f32 %v297, 1.0
      %v318 = vadd.f32 %v298, 1.0
      %v319 = vadd.f32 %v299, 1.0
      %v320 = vadd.f32 %v300, 1.0
      %v321 = vadd.f32 %v301, 1.0
      %v322 = vadd.f32 %v302, 1.0
      %v323 = vadd.f32 %v303, 1.0
      %v324 = vadd.f32 %v304, 1.0
      %v325 = vadd.f32 %v305, 1.0
      %v326 = vadd.f32 %v306, 1.0
      %v327 = vadd.f32 %v307, 1.0
      %v328 = vadd.f32 %v308, 1.0
      %v329 = vadd.f32 %v309, 1.0
      %v330 = vadd.f32 %v310, 1.0
      %v331 = vadd.f32 %v311, 1.0
      %v332 = vadd.f32 %v312, 1.0
      %v333 = vadd.f32 %v313, 1.0
      %v334 = vadd.f32 %v314, 1.0
      %v335 = vadd.f32 %v315, 1.0
      %v336 = vmul.f32 %v256, %v316
      %v337 = vmul.f32 %v257, %v317
      %v338 = vmul.f32 %v258, %v318
      %v339 = vmul.f32 %v259, %v319
      %v340 = vmul.f32 %v260, %v320
      %v341 = vmul.f32 %v261, %v321
      %v342 = vmul.f32 %v262, %v322
      %v343 = vmul.f32 %v263, %v323
      %v344 = vmul.f32 %v264, %v324
      %v345 = vmul.f32 %v265, %v325
      %v346 = vmul.f32 %v266, %v326
      %v347 = vmul.f32 %v267, %v327
      %v348 = vmul.f32 %v268, %v328
      %v349 = vmul.f32 %v269, %v329
      %v350 = vmul.f32 %v270, %v330
      %v351 = vmul.f32 %v271, %v331
      %v352 = vmul.f32 %v272, %v332
      %v353 = vmul.f32 %v273, %v333
      %v354 = vmul.f32 %v274, %v334
      %v355 = vmul.f32 %v275, %v335
      %v356 = vpack.c.bf16 %v337, %v336
      %v357 = vpack.c.bf16 %v339, %v338
      %v358 = vpack.c.bf16 %v341, %v340
      %v359 = vpack.c.bf16 %v343, %v342
      %v360 = vpack.c.bf16 %v345, %v344
      %v361 = vpack.c.bf16 %v347, %v346
      %v362 = vpack.c.bf16 %v349, %v348
      %v363 = vpack.c.bf16 %v351, %v350
      %v364 = vpack.c.bf16 %v353, %v352
      %v365 = vpack.c.bf16 %v355, %v354
      %v366 = vld [vmem:[%s1] sm:$0xf]
      %v367 = vld [vmem:[%s1 + $0x4] sm:$0x3]
      %s368 = scalar_lea.vmem %s1, 8
      %v369 = vld [vmem:[%s368] sm:$0xf]
      %v370 = vld [vmem:[%s368 + $0x4] sm:$0x3]
      %v373 = vunpack.c.l.b16 %v369
      %v374 = vunpack.c.l.b16 %v370
      %v375 = vpack.c.b16 %v374, %v373
      %vm376 = vcmask 97280
      %v378 = vsel %vm376, %v357, 0
      %v381 = vsel %vm376, %v358, 0
      %v384 = vsel %vm376, %v359, 0
      %v387 = vsel %vm376, %v360, 0
      %v390 = vsel %vm376, %v361, 0
      %v393 = vsel %vm376, %v362, 0
      %v396 = vsel %vm376, %v363, 0
      %v399 = vsel %vm376, %v364, 0
      %vm401 = vcmask 1045504
      %v403 = vsel %vm401, %v375, 0
      %405 = vmatprep.subr.bf16.mxu0 0
      %406 = vmatpush1.bf16.msra.mxu0 %v403
      %407 = vmatprep.subr.bf16.mxu0 0
      %408 = vmatpush1.bf16.msra.mxu0 0
      %409 = vmatprep.subr.bf16.mxu0 0
      %410 = vmatpush1.bf16.msra.mxu0 0
      %411 = vmatprep.subr.bf16.mxu0 0
      %412 = vmatpush1.bf16.msra.mxu0 0
      %413 = vmatprep.subr.bf16.mxu0 0
      %414 = vmatpush1.bf16.msra.mxu0 0
      %415 = vmatprep.subr.bf16.mxu0 0
      %416 = vmatpush1.bf16.msra.mxu0 0
      %417 = vmatprep.subr.bf16.mxu0 0
      %418 = vmatpush1.bf16.msra.mxu0 0
      %419 = vmatprep.subr.bf16.mxu0 0
      %420 = vmatpush1.bf16.msra.mxu0 0
      %421 = vmatprep.subr.bf16.mxu0 0
      %422 = vmatpush1.bf16.msra.mxu0 0
      %423 = vmatprep.subr.bf16.mxu0 0
      %424 = vmatpush1.bf16.msra.mxu0 0
      %425 = vmatprep.subr.bf16.mxu0 0
      %426 = vmatpush1.bf16.msra.mxu0 0
      %427 = vmatprep.subr.bf16.mxu0 0
      %428 = vmatpush1.bf16.msra.mxu0 0
      %429 = vmatprep.subr.bf16.mxu0 0
      %430 = vmatpush1.bf16.msra.mxu0 0
      %431 = vmatprep.subr.bf16.mxu0 0
      %432 = vmatpush1.bf16.msra.mxu0 0
      %433 = vmatprep.subr.bf16.mxu0 0
      %434 = vmatpush1.bf16.msra.mxu0 0
      %435 = vmatprep.subr.bf16.mxu0 0
      %436 = vmatpush1.bf16.msra.mxu0 0
      %437 = vmatprep.mubr.bf16.mxu0 0
      %438 = vmatmul.mubr.bf16.gmra.mrb[0].mxu0 %v378
      %v439 = vpop.f32.mrb[0].mxu0
      %v440 = vadd.f32 0.0, %v439
      %v441 = vpop.f32.mrb[0].mxu0
      %v442 = vpop.f32.mrb[0].mxu0
      %v443 = vadd.f32 0.0, %v442
      %v444 = vpop.f32.mrb[0].mxu0
      %445 = vmatprep.mubr.bf16.mxu0 0
      %446 = vmatmul.mubr.bf16.gmra.mrb[0].mxu0 %v381
      %v447 = vpop.f32.mrb[0].mxu0
      %v448 = vadd.f32 0.0, %v447
      %v449 = vpop.f32.mrb[0].mxu0
      %v450 = vpop.f32.mrb[0].mxu0
      %v451 = vadd.f32 0.0, %v450
      %v452 = vpop.f32.mrb[0].mxu0
      %453 = vmatprep.mubr.bf16.mxu0 0
      %454 = vmatmul.mubr.bf16.gmra.mrb[0].mxu0 %v384
      %v455 = vpop.f32.mrb[0].mxu0
      %v456 = vadd.f32 0.0, %v455
      %v457 = vpop.f32.mrb[0].mxu0
      %v458 = vpop.f32.mrb[0].mxu0
      %v459 = vadd.f32 0.0, %v458
      %v460 = vpop.f32.mrb[0].mxu0
      %461 = vmatprep.mubr.bf16.mxu0 0
      %462 = vmatmul.mubr.bf16.gmra.mrb[0].mxu0 %v387
      %v463 = vpop.f32.mrb[0].mxu0
      %v464 = vadd.f32 0.0, %v463
      %v465 = vpop.f32.mrb[0].mxu0
      %v466 = vpop.f32.mrb[0].mxu0
      %v467 = vadd.f32 0.0, %v466
      %v468 = vpop.f32.mrb[0].mxu0
      %469 = vmatprep.mubr.bf16.mxu0 0
      %470 = vmatmul.mubr.bf16.gmra.mrb[0].mxu0 %v390
      %v471 = vpop.f32.mrb[0].mxu0
      %v472 = vadd.f32 0.0, %v471
      %v473 = vpop.f32.mrb[0].mxu0
      %v474 = vpop.f32.mrb[0].mxu0
      %v475 = vadd.f32 0.0, %v474
      %v476 = vpop.f32.mrb[0].mxu0
      %477 = vmatprep.mubr.bf16.mxu0 0
      %478 = vmatmul.mubr.bf16.gmra.mrb[0].mxu0 %v393
      %v479 = vpop.f32.mrb[0].mxu0
      %v480 = vadd.f32 0.0, %v479
      %v481 = vpop.f32.mrb[0].mxu0
      %v482 = vpop.f32.mrb[0].mxu0
      %v483 = vadd.f32 0.0, %v482
      %v484 = vpop.f32.mrb[0].mxu0
      %485 = vmatprep.mubr.bf16.mxu0 0
      %486 = vmatmul.mubr.bf16.gmra.mrb[0].mxu0 %v396
      %v487 = vpop.f32.mrb[0].mxu0
      %v488 = vadd.f32 0.0, %v487
      %v489 = vpop.f32.mrb[0].mxu0
      %v490 = vpop.f32.mrb[0].mxu0
      %v491 = vadd.f32 0.0, %v490
      %v492 = vpop.f32.mrb[0].mxu0
      %493 = vmatprep.mubr.bf16.mxu0 0
      %494 = vmatmul.mubr.bf16.gmra.mrb[0].mxu0 %v399
      %v495 = vpop.f32.mrb[0].mxu0
      %v496 = vadd.f32 0.0, %v495
      %v497 = vpop.f32.mrb[0].mxu0
      %v498 = vpop.f32.mrb[0].mxu0
      %v499 = vadd.f32 0.0, %v498
      %v500 = vpop.f32.mrb[0].mxu0
      %501 = vdwg.mxu0
      %v504 = vunpack.c.l.b16 %v366
      %v505 = vunpack.c.l.b16 %v367
      %v506 = vpack.c.b16 %v505, %v504
      %v508 = vsel %vm376, %v356, 0
      %v511 = vsel %vm401, %v506, 0
      %513 = vmatprep.subr.bf16.mxu0 0
      %514 = vmatpush1.bf16.msra.mxu0 %v511
      %515 = vmatprep.subr.bf16.mxu0 0
      %516 = vmatpush1.bf16.msra.mxu0 0
      %517 = vmatprep.subr.bf16.mxu0 0
      %518 = vmatpush1.bf16.msra.mxu0 0
      %519 = vmatprep.subr.bf16.mxu0 0
      %520 = vmatpush1.bf16.msra.mxu0 0
      %521 = vmatprep.subr.bf16.mxu0 0
      %522 = vmatpush1.bf16.msra.mxu0 0
      %523 = vmatprep.subr.bf16.mxu0 0
      %524 = vmatpush1.bf16.msra.mxu0 0
      %525 = vmatprep.subr.bf16.mxu0 0
      %526 = vmatpush1.bf16.msra.mxu0 0
      %527 = vmatprep.subr.bf16.mxu0 0
      %528 = vmatpush1.bf16.msra.mxu0 0
      %529 = vmatprep.subr.bf16.mxu0 0
      %530 = vmatpush1.bf16.msra.mxu0 0
      %531 = vmatprep.subr.bf16.mxu0 0
      %532 = vmatpush1.bf16.msra.mxu0 0
      %533 = vmatprep.subr.bf16.mxu0 0
      %534 = vmatpush1.bf16.msra.mxu0 0
      %535 = vmatprep.subr.bf16.mxu0 0
      %536 = vmatpush1.bf16.msra.mxu0 0
      %537 = vmatprep.subr.bf16.mxu0 0
      %538 = vmatpush1.bf16.msra.mxu0 0
      %539 = vmatprep.subr.bf16.mxu0 0
      %540 = vmatpush1.bf16.msra.mxu0 0
      %541 = vmatprep.subr.bf16.mxu0 0
      %542 = vmatpush1.bf16.msra.mxu0 0
      %543 = vmatprep.subr.bf16.mxu0 0
      %544 = vmatpush1.bf16.msra.mxu0 0
      %545 = vmatprep.mubr.bf16.mxu0 0
      %546 = vmatmul.mubr.bf16.gmra.mrb[0].mxu0 %v508
      %v547 = vpop.f32.mrb[0].mxu0
      %v548 = vadd.f32 %v440, %v547
      %v549 = vpop.f32.mrb[0].mxu0
      %v550 = vpop.f32.mrb[0].mxu0
      %v551 = vadd.f32 %v443, %v550
      %v552 = vpop.f32.mrb[0].mxu0
      %553 = vmatprep.mubr.bf16.mxu0 0
      %554 = vmatmul.mubr.bf16.gmra.mrb[0].mxu0 %v378
      %v555 = vpop.f32.mrb[0].mxu0
      %v556 = vadd.f32 %v448, %v555
      %v557 = vpop.f32.mrb[0].mxu0
      %v558 = vpop.f32.mrb[0].mxu0
      %v559 = vadd.f32 %v451, %v558
      %v560 = vpop.f32.mrb[0].mxu0
      %561 = vmatprep.mubr.bf16.mxu0 0
      %562 = vmatmul.mubr.bf16.gmra.mrb[0].mxu0 %v381
      %v563 = vpop.f32.mrb[0].mxu0
      %v564 = vadd.f32 %v456, %v563
      %v565 = vpop.f32.mrb[0].mxu0
      %v566 = vpop.f32.mrb[0].mxu0
      %v567 = vadd.f32 %v459, %v566
      %v568 = vpop.f32.mrb[0].mxu0
      %569 = vmatprep.mubr.bf16.mxu0 0
      %570 = vmatmul.mubr.bf16.gmra.mrb[0].mxu0 %v384
      %v571 = vpop.f32.mrb[0].mxu0
      %v572 = vadd.f32 %v464, %v571
      %v573 = vpop.f32.mrb[0].mxu0
      %v574 = vpop.f32.mrb[0].mxu0
      %v575 = vadd.f32 %v467, %v574
      %v576 = vpop.f32.mrb[0].mxu0
      %577 = vmatprep.mubr.bf16.mxu0 0
      %578 = vmatmul.mubr.bf16.gmra.mrb[0].mxu0 %v387
      %v579 = vpop.f32.mrb[0].mxu0
      %v580 = vadd.f32 %v472, %v579
      %v581 = vpop.f32.mrb[0].mxu0
      %v582 = vpop.f32.mrb[0].mxu0
      %v583 = vadd.f32 %v475, %v582
      %v584 = vpop.f32.mrb[0].mxu0
      %585 = vmatprep.mubr.bf16.mxu0 0
      %586 = vmatmul.mubr.bf16.gmra.mrb[0].mxu0 %v390
      %v587 = vpop.f32.mrb[0].mxu0
      %v588 = vadd.f32 %v480, %v587
      %v589 = vpop.f32.mrb[0].mxu0
      %v590 = vpop.f32.mrb[0].mxu0
      %v591 = vadd.f32 %v483, %v590
      %v592 = vpop.f32.mrb[0].mxu0
      %593 = vmatprep.mubr.bf16.mxu0 0
      %594 = vmatmul.mubr.bf16.gmra.mrb[0].mxu0 %v393
      %v595 = vpop.f32.mrb[0].mxu0
      %v596 = vadd.f32 %v488, %v595
      %v597 = vpop.f32.mrb[0].mxu0
      %v598 = vpop.f32.mrb[0].mxu0
      %v599 = vadd.f32 %v491, %v598
      %v600 = vpop.f32.mrb[0].mxu0
      %601 = vmatprep.mubr.bf16.mxu0 0
      %602 = vmatmul.mubr.bf16.gmra.mrb[0].mxu0 %v396
      %v603 = vpop.f32.mrb[0].mxu0
      %v604 = vadd.f32 %v496, %v603
      %v605 = vpop.f32.mrb[0].mxu0
      %v606 = vpop.f32.mrb[0].mxu0
      %v607 = vadd.f32 %v499, %v606
      %v608 = vpop.f32.mrb[0].mxu0
      %609 = vdwg.mxu0
      %s610 = scalar_lea.vmem %s1, 16
      %v611 = vld [vmem:[%s610] sm:$0xf]
      %v612 = vld [vmem:[%s610 + $0x4] sm:$0x3]
      %v615 = vunpack.c.l.b16 %v611
      %v616 = vunpack.c.l.b16 %v612
      %v617 = vpack.c.b16 %v616, %v615
      %v619 = vsel %vm376, %v365, 0
      %v622 = vsel %vm401, %v617, 0
      %624 = vmatprep.subr.bf16.mxu0 0
      %625 = vmatpush1.bf16.msra.mxu0 %v622
      %626 = vmatprep.subr.bf16.mxu0 0
      %627 = vmatpush1.bf16.msra.mxu0 0
      %628 = vmatprep.subr.bf16.mxu0 0
      %629 = vmatpush1.bf16.msra.mxu0 0
      %630 = vmatprep.subr.bf16.mxu0 0
      %631 = vmatpush1.bf16.msra.mxu0 0
      %632 = vmatprep.subr.bf16.mxu0 0
      %633 = vmatpush1.bf16.msra.mxu0 0
      %634 = vmatprep.subr.bf16.mxu0 0
      %635 = vmatpush1.bf16.msra.mxu0 0
      %636 = vmatprep.subr.bf16.mxu0 0
      %637 = vmatpush1.bf16.msra.mxu0 0
      %638 = vmatprep.subr.bf16.mxu0 0
      %639 = vmatpush1.bf16.msra.mxu0 0
      %640 = vmatprep.subr.bf16.mxu0 0
      %641 = vmatpush1.bf16.msra.mxu0 0
      %642 = vmatprep.subr.bf16.mxu0 0
      %643 = vmatpush1.bf16.msra.mxu0 0
      %644 = vmatprep.subr.bf16.mxu0 0
      %645 = vmatpush1.bf16.msra.mxu0 0
      %646 = vmatprep.subr.bf16.mxu0 0
      %647 = vmatpush1.bf16.msra.mxu0 0
      %648 = vmatprep.subr.bf16.mxu0 0
      %649 = vmatpush1.bf16.msra.mxu0 0
      %650 = vmatprep.subr.bf16.mxu0 0
      %651 = vmatpush1.bf16.msra.mxu0 0
      %652 = vmatprep.subr.bf16.mxu0 0
      %653 = vmatpush1.bf16.msra.mxu0 0
      %654 = vmatprep.subr.bf16.mxu0 0
      %655 = vmatpush1.bf16.msra.mxu0 0
      %656 = vmatprep.mubr.bf16.mxu0 0
      %657 = vmatmul.mubr.bf16.gmra.mrb[0].mxu0 %v381
      %v658 = vpop.f32.mrb[0].mxu0
      %v659 = vadd.f32 0.0, %v658
      %v660 = vpop.f32.mrb[0].mxu0
      %v661 = vpop.f32.mrb[0].mxu0
      %v662 = vadd.f32 0.0, %v661
      %v663 = vpop.f32.mrb[0].mxu0
      %664 = vmatprep.mubr.bf16.mxu0 0
      %665 = vmatmul.mubr.bf16.gmra.mrb[0].mxu0 %v384
      %v666 = vpop.f32.mrb[0].mxu0
      %v667 = vadd.f32 0.0, %v666
      %v668 = vpop.f32.mrb[0].mxu0
      %v669 = vpop.f32.mrb[0].mxu0
      %v670 = vadd.f32 0.0, %v669
      %v671 = vpop.f32.mrb[0].mxu0
      %672 = vmatprep.mubr.bf16.mxu0 0
      %673 = vmatmul.mubr.bf16.gmra.mrb[0].mxu0 %v387
      %v674 = vpop.f32.mrb[0].mxu0
      %v675 = vadd.f32 0.0, %v674
      %v676 = vpop.f32.mrb[0].mxu0
      %v677 = vpop.f32.mrb[0].mxu0
      %v678 = vadd.f32 0.0, %v677
      %v679 = vpop.f32.mrb[0].mxu0
      %680 = vmatprep.mubr.bf16.mxu0 0
      %681 = vmatmul.mubr.bf16.gmra.mrb[0].mxu0 %v390
      %v682 = vpop.f32.mrb[0].mxu0
      %v683 = vadd.f32 0.0, %v682
      %v684 = vpop.f32.mrb[0].mxu0
      %v685 = vpop.f32.mrb[0].mxu0
      %v686 = vadd.f32 0.0, %v685
      %v687 = vpop.f32.mrb[0].mxu0
      %688 = vmatprep.mubr.bf16.mxu0 0
      %689 = vmatmul.mubr.bf16.gmra.mrb[0].mxu0 %v393
      %v690 = vpop.f32.mrb[0].mxu0
      %v691 = vadd.f32 0.0, %v690
      %v692 = vpop.f32.mrb[0].mxu0
      %v693 = vpop.f32.mrb[0].mxu0
      %v694 = vadd.f32 0.0, %v693
      %v695 = vpop.f32.mrb[0].mxu0
      %696 = vmatprep.mubr.bf16.mxu0 0
      %697 = vmatmul.mubr.bf16.gmra.mrb[0].mxu0 %v396
      %v698 = vpop.f32.mrb[0].mxu0
      %v699 = vadd.f32 0.0, %v698
      %v700 = vpop.f32.mrb[0].mxu0
      %v701 = vpop.f32.mrb[0].mxu0
      %v702 = vadd.f32 0.0, %v701
      %v703 = vpop.f32.mrb[0].mxu0
      %704 = vmatprep.mubr.bf16.mxu0 0
      %705 = vmatmul.mubr.bf16.gmra.mrb[0].mxu0 %v399
      %v706 = vpop.f32.mrb[0].mxu0
      %v707 = vadd.f32 0.0, %v706
      %v708 = vpop.f32.mrb[0].mxu0
      %v709 = vpop.f32.mrb[0].mxu0
      %v710 = vadd.f32 0.0, %v709
      %v711 = vpop.f32.mrb[0].mxu0
      %712 = vmatprep.mubr.bf16.mxu0 0
      %713 = vmatmul.mubr.bf16.gmra.mrb[0].mxu0 %v619
      %v714 = vpop.f32.mrb[0].mxu0
      %v715 = vadd.f32 0.0, %v714
      %v716 = vpop.f32.mrb[0].mxu0
      %v717 = vpop.f32.mrb[0].mxu0
      %v718 = vadd.f32 0.0, %v717
      %v719 = vpop.f32.mrb[0].mxu0
      %720 = vdwg.mxu0
      %v721 = vadd.f32 %v548, %v659
      %v722 = vadd.f32 %v551, %v662
      %v723 = vadd.f32 %v556, %v667
      %v724 = vadd.f32 %v559, %v670
      %v725 = vadd.f32 %v564, %v675
      %v726 = vadd.f32 %v567, %v678
      %v727 = vadd.f32 %v572, %v683
      %v728 = vadd.f32 %v575, %v686
      %v729 = vadd.f32 %v580, %v691
      %v730 = vadd.f32 %v583, %v694
      %v731 = vadd.f32 %v588, %v699
      %v732 = vadd.f32 %v591, %v702
      %v733 = vadd.f32 %v596, %v707
      %v734 = vadd.f32 %v599, %v710
      %v735 = vadd.f32 %v604, %v715
      %v736 = vadd.f32 %v607, %v718
      %v737 = vpack.c.bf16 %v722, %v721
      %v738 = vpack.c.bf16 %v724, %v723
      %v739 = vpack.c.bf16 %v726, %v725
      %v740 = vpack.c.bf16 %v728, %v727
      %v741 = vpack.c.bf16 %v730, %v729
      %v742 = vpack.c.bf16 %v732, %v731
      %v743 = vpack.c.bf16 %v734, %v733
      %v744 = vpack.c.bf16 %v736, %v735
      %v753 = vunpack.c.l.b16 %v737
      %v754 = vunpack.c.h.b16 %v737
      %v755 = vunpack.c.l.b16 %v738
      %v756 = vunpack.c.h.b16 %v738
      %v757 = vunpack.c.l.b16 %v739
      %v758 = vunpack.c.h.b16 %v739
      %v759 = vunpack.c.l.b16 %v740
      %v760 = vunpack.c.h.b16 %v740
      %v761 = vunpack.c.l.b16 %v741
      %v762 = vunpack.c.h.b16 %v741
      %v763 = vunpack.c.l.b16 %v742
      %v764 = vunpack.c.h.b16 %v742
      %v765 = vunpack.c.l.b16 %v743
      %v766 = vunpack.c.h.b16 %v743
      %v767 = vunpack.c.l.b16 %v744
      %v768 = vunpack.c.h.b16 %v744
      %v769 = vpack.c.b16 %v753, %v753
      %v770 = vpack.c.b16 %v754, %v754
      %v771 = vpack.c.b16 %v755, %v755
      %v772 = vpack.c.b16 %v756, %v756
      %v773 = vpack.c.b16 %v757, %v757
      %v774 = vpack.c.b16 %v758, %v758
      %v775 = vpack.c.b16 %v759, %v759
      %v776 = vpack.c.b16 %v760, %v760
      %v777 = vpack.c.b16 %v761, %v761
      %v778 = vpack.c.b16 %v762, %v762
      %v779 = vpack.c.b16 %v763, %v763
      %v780 = vpack.c.b16 %v764, %v764
      %v781 = vpack.c.b16 %v765, %v765
      %v782 = vpack.c.b16 %v766, %v766
      %v783 = vpack.c.b16 %v767, %v767
      %v784 = vpack.c.b16 %v768, %v768
      %vm801 = vcmask 27648
      %802 = vst.msk [vmem:[%s208] sm:$0xf] %vm801, %v769
      %803 = vst.msk [vmem:[%s208 + $0x4] sm:$0xf] %vm801, %v770
      %804 = vst.msk [vmem:[%s208 + $0x8] sm:$0xf] %vm801, %v771
      %805 = vst.msk [vmem:[%s208 + $0xc] sm:$0xf] %vm801, %v772
      %806 = vst.msk [vmem:[%s208 + $0x10] sm:$0xf] %vm801, %v773
      %807 = vst.msk [vmem:[%s208 + $0x14] sm:$0xf] %vm801, %v774
      %808 = vst.msk [vmem:[%s208 + $0x18] sm:$0xf] %vm801, %v775
      %809 = vst.msk [vmem:[%s208 + $0x1c] sm:$0xf] %vm801, %v776
      %810 = vst.msk [vmem:[%s208 + $0x20] sm:$0xf] %vm801, %v777
      %811 = vst.msk [vmem:[%s208 + $0x24] sm:$0xf] %vm801, %v778
      %812 = vst.msk [vmem:[%s208 + $0x28] sm:$0xf] %vm801, %v779
      %813 = vst.msk [vmem:[%s208 + $0x2c] sm:$0xf] %vm801, %v780
      %814 = vst.msk [vmem:[%s208 + $0x30] sm:$0xf] %vm801, %v781
      %815 = vst.msk [vmem:[%s208 + $0x34] sm:$0xf] %vm801, %v782
      %816 = vst.msk [vmem:[%s208 + $0x38] sm:$0xf] %vm801, %v783
      %817 = vst.msk [vmem:[%s208 + $0x3c] sm:$0xf] %vm801, %v784
      %vm818 = vcmask 31744
      %v819 = vsel %vm818, %v721, 0.0
      %v820 = vsel %vm818, %v722, 0.0
      %v821 = vadd.f32 %v819, %v820
      %v822 = vsel %vm818, %v723, 0.0
      %v823 = vadd.f32 %v821, %v822
      %v824 = vsel %vm818, %v724, 0.0
      %v825 = vadd.f32 %v823, %v824
      %v826 = vsel %vm818, %v725, 0.0
      %v827 = vadd.f32 %v825, %v826
      %v828 = vsel %vm818, %v726, 0.0
      %v829 = vadd.f32 %v827, %v828
      %v830 = vsel %vm818, %v727, 0.0
      %v831 = vadd.f32 %v829, %v830
      %v832 = vsel %vm818, %v728, 0.0
      %v833 = vadd.f32 %v831, %v832
      %v834 = vsel %vm818, %v729, 0.0
      %v835 = vadd.f32 %v833, %v834
      %v836 = vsel %vm818, %v730, 0.0
      %v837 = vadd.f32 %v835, %v836
      %v838 = vsel %vm818, %v731, 0.0
      %v839 = vadd.f32 %v837, %v838
      %v840 = vsel %vm818, %v732, 0.0
      %v841 = vadd.f32 %v839, %v840
      %v842 = vsel %vm818, %v733, 0.0
      %v843 = vadd.f32 %v841, %v842
      %v844 = vsel %vm818, %v734, 0.0
      %v845 = vadd.f32 %v843, %v844
      %v846 = vsel %vm818, %v735, 0.0
      %v847 = vadd.f32 %v845, %v846
      %v848 = vsel %vm818, %v736, 0.0
      %v849 = vadd.f32 %v847, %v848
      %v850 = vrot.slane %v849, 4
      %v851 = vadd.f32 %v849, %v850
      %v852 = vrot.slane %v851, 2
      %v853 = vadd.f32 %v851, %v852
      %v854 = vrot.slane %v853, 1
      %v855 = vadd.f32 %v853, %v854
      %vm856 = vcmask 24576
      %857 = vst.msk [vmem:[%s211] sm:$0x1] %vm856, %v855
      %v858 = vmul.f32 %v721, %v721
      %v859 = vmul.f32 %v722, %v722
      %v860 = vmul.f32 %v723, %v723
      %v861 = vmul.f32 %v724, %v724
      %v862 = vmul.f32 %v725, %v725
      %v863 = vmul.f32 %v726, %v726
      %v864 = vmul.f32 %v727, %v727
      %v865 = vmul.f32 %v728, %v728
      %v866 = vmul.f32 %v729, %v729
      %v867 = vmul.f32 %v730, %v730
      %v868 = vmul.f32 %v731, %v731
      %v869 = vmul.f32 %v732, %v732
      %v870 = vmul.f32 %v733, %v733
      %v871 = vmul.f32 %v734, %v734
      %v872 = vmul.f32 %v735, %v735
      %v873 = vmul.f32 %v736, %v736
      %v874 = vsel %vm818, %v858, 0.0
      %v875 = vsel %vm818, %v859, 0.0
      %v876 = vadd.f32 %v874, %v875
      %v877 = vsel %vm818, %v860, 0.0
      %v878 = vadd.f32 %v876, %v877
      %v879 = vsel %vm818, %v861, 0.0
      %v880 = vadd.f32 %v878, %v879
      %v881 = vsel %vm818, %v862, 0.0
      %v882 = vadd.f32 %v880, %v881
      %v883 = vsel %vm818, %v863, 0.0
      %v884 = vadd.f32 %v882, %v883
      %v885 = vsel %vm818, %v864, 0.0
      %v886 = vadd.f32 %v884, %v885
      %v887 = vsel %vm818, %v865, 0.0
      %v888 = vadd.f32 %v886, %v887
      %v889 = vsel %vm818, %v866, 0.0
      %v890 = vadd.f32 %v888, %v889
      %v891 = vsel %vm818, %v867, 0.0
      %v892 = vadd.f32 %v890, %v891
      %v893 = vsel %vm818, %v868, 0.0
      %v894 = vadd.f32 %v892, %v893
      %v895 = vsel %vm818, %v869, 0.0
      %v896 = vadd.f32 %v894, %v895
      %v897 = vsel %vm818, %v870, 0.0
      %v898 = vadd.f32 %v896, %v897
      %v899 = vsel %vm818, %v871, 0.0
      %v900 = vadd.f32 %v898, %v899
      %v901 = vsel %vm818, %v872, 0.0
      %v902 = vadd.f32 %v900, %v901
      %v903 = vsel %vm818, %v873, 0.0
      %v904 = vadd.f32 %v902, %v903
      %v905 = vrot.slane %v904, 4
      %v906 = vadd.f32 %v904, %v905
      %v907 = vrot.slane %v906, 2
      %v908 = vadd.f32 %v906, %v907
      %v909 = vrot.slane %v908, 1
      %v910 = vadd.f32 %v908, %v909
      %911 = vst.msk [vmem:[%s214] sm:$0x1] %vm856, %v910
      %p912 = scmp.lt.s32.totalorder %s16, 3
      %s913 = scalar_select %p912, %s16, 3
      %s914 = smul.addr %s913, 16
      %s915 = smul.addr %s914, 4
      %s916 = scalar_lea.vmem %s2, %s915
      %p917 = scmp.lt.s32.totalorder %s16, 3
      %s918 = scalar_select %p917, %s16, 3
      %s919 = scalar_lea.vmem %s3, %s918
      %p920 = scmp.lt.s32.totalorder %s16, 3
      %s921 = scalar_select %p920, %s16, 3
      %s922 = scalar_lea.vmem %s4, %s921
      // Predicated region
      $region29: #{upblock_forward.5} parent=27 // pred_check
        %p923 = pneg %p81
      $region30: #{upblock_forward.5} parent=27 // pred_check_branch
        %925 = sbr.rel (%p923) target = $region32
      $region31: #{upblock_forward.5} parent=27 // pred_region
        _
      $region32: #{upblock_forward.5} parent=27 // pred_fallthru
        _
      // Predicated region
      $region33: #{upblock_forward.5} parent=27 // pred_check
        %p926 = pneg %p107
      $region34: #{upblock_forward.5} parent=27 // pred_check_branch
        %928 = sbr.rel (%p926) target = $region36
      $region35: #{upblock_forward.5} parent=27 // pred_region
        _
      $region36: #{upblock_forward.5} parent=27 // pred_fallthru
        _
      // Predicated region
      $region37: #{upblock_forward.5} parent=27 // pred_check
        %p929 = pneg %p133
      $region38: #{upblock_forward.5} parent=27 // pred_check_branch
        %931 = sbr.rel (%p929) target = $region40
      $region39: #{upblock_forward.5} parent=27 // pred_region
        _
      $region40: #{upblock_forward.5} parent=27 // pred_fallthru
        _
    $region28: #{upblock_forward.5} parent=5 // pred_fallthru
      _
    %p932 = scmp.le.s32.totalorder 2, %s11
    // Predicated region
    $region41: #{upblock_forward.5} parent=5 // pred_check
      %p933 = pneg %p932
    $region42: #{upblock_forward.5} parent=5 // pred_check_branch
      %935 = sbr.rel (%p933) target = $region44
    $region43: #{upblock_forward.5} parent=5 // pred_region
      %s936 = ssub.s32 %s11, 2
      // Predicated region
      $region45: #{upblock_forward.5} parent=43 // pred_check
        %p937 = pneg %p87
      $region46: #{upblock_forward.5} parent=43 // pred_check_branch
        %939 = sbr.rel (%p937) target = $region48
      $region47: #{upblock_forward.5} parent=43 // pred_region
        %p940 = scmp.lt.s32.totalorder %s17, 3
        %s941 = scalar_select %p940, %s17, 3
        %s942 = smul.addr %s941, 16
        %s943 = smul.addr %s942, 4
        %s944 = scalar_lea.vmem %s2, %s943
      $region48: #{upblock_forward.5} parent=43 // pred_fallthru
        _
      // Predicated region
      $region49: #{upblock_forward.5} parent=43 // pred_check
        %p945 = pneg %p113
      $region50: #{upblock_forward.5} parent=43 // pred_check_branch
        %947 = sbr.rel (%p945) target = $region52
      $region51: #{upblock_forward.5} parent=43 // pred_region
        %p948 = scmp.lt.s32.totalorder %s17, 3
        %s949 = scalar_select %p948, %s17, 3
        %s950 = scalar_lea.vmem %s3, %s949
      $region52: #{upblock_forward.5} parent=43 // pred_fallthru
        _
      // Predicated region
      $region53: #{upblock_forward.5} parent=43 // pred_check
        %p951 = pneg %p139
      $region54: #{upblock_forward.5} parent=43 // pred_check_branch
        %953 = sbr.rel (%p951) target = $region56
      $region55: #{upblock_forward.5} parent=43 // pred_region
        %p954 = scmp.lt.s32.totalorder %s17, 3
        %s955 = scalar_select %p954, %s17, 3
        %s956 = scalar_lea.vmem %s4, %s955
      $region56: #{upblock_forward.5} parent=43 // pred_fallthru
        _
    $region44: #{upblock_forward.5} parent=5 // pred_fallthru
      _
  $region6: #{upblock_forward.5} parent=0 // loop_footer
    %s15 = sadd.s32 1, %s11
  $region7: #{upblock_forward.5} parent=0 // loop_footer_branch
    %10 = sbr.rel target = $region3
  $region8: #{upblock_forward.5} parent=0 // loop_exit
    _

// kernel: upblock_forward.7
$region0: #{upblock_forward.7}
  #allocation0 [shape = 'u32[]', space=smem, size = 0x4, offset = 0x4, fixed_abs, tag = 'smem constant byte address 0x4 - core index']
  #allocation1 [shape = 'u32[144,128]{1,0:T(1,128)}', space=vmem, size = 0x12000, scoped, tag = 'internal scratch']
  %s0 = inlined_call_operand.vmem [shape: bf16[512,4], index: 0, kind: input, shape index: {}]
  %s1 = inlined_call_operand.vmem [shape: bf16[512,4], index: 1, kind: input, shape index: {}]
  %s2 = inlined_call_operand.vmem [shape: bf16[512,4], index: 2, kind: input, shape index: {}]
  %s3 = inlined_call_operand.vmem [shape: f32[1,4], index: 3, kind: input, shape index: {}]
  %s4 = inlined_call_operand.vmem [shape: f32[1,4], index: 4, kind: input, shape index: {}]
  %s5 = inlined_call_operand.vmem [shape: bf16[4,4], index: 5, kind: input, shape index: {}]
  %s6 = inlined_call_operand.vmem [shape: f32[1,4], index: 6, kind: input, shape index: {}]
  %s7 = inlined_call_operand.vmem [shape: f32[512,4], index: 7, kind: output, shape index: {}]
  %s8 = sld [smem:[#allocation0]]
  $region61: #{upblock_forward.7} parent=0
    _
  %s10 = ssub.s32 1, %s8
  %s11 = scalar_select 0, %s10, %s8
  loop: start=0, step=1, limit=6
  $region2: #{upblock_forward.7} parent=0 // loop_pre_header
    _
  $region3: #{upblock_forward.7} parent=0 // loop_header
    %s13 = sphi 0, %s17
    %p14 = scmp.ge.s32.totalorder %s13, 6
    %s23 = sphi 0, %s25
    %s26 = sphi 0, %s23
    %s27 = sphi 0, %s26
    %s43 = sphi 0, %s27
    %s49 = sphi 0, %s51
    %s52 = sphi 0, %s49
    %s53 = sphi 0, %s52
    %s69 = sphi 0, %s53
    %s75 = sphi 0, %s77
    %s78 = sphi 0, %s75
    %s79 = sphi 0, %s78
    %s95 = sphi 0, %s79
    %s99 = sphi 0, %s99
    %s101 = sphi 0, %s99
    %s102 = sphi 0, %s101
    %s116 = sphi 0, %s102
    %s120 = sphi 0, %s120
    %s122 = sphi 0, %s120
    %s123 = sphi 0, %s122
    %s137 = sphi 0, %s123
    %s141 = sphi 0, %s141
    %s143 = sphi 0, %s141
    %s144 = sphi 0, %s143
    %s158 = sphi 0, %s144
    %s162 = sphi 0, %s162
    %s164 = sphi 0, %s162
    %s165 = sphi 0, %s164
    %s179 = sphi 0, %s165
    %s185 = sphi 0, %s187
    %s188 = sphi 0, %s185
    %s189 = sphi 0, %s188
    %s205 = sphi 0, %s189
  $region4: #{upblock_forward.7} parent=0 // loop_header_branch
    %16 = sbr.rel (%p14) target = $region8
  $region5: #{upblock_forward.7} parent=0 // loop_body
    %s18 = ssub.s32 %s13, 1
    %s19 = ssub.s32 %s13, 2
    %s20 = sadd.s32 %s13, 1
    %s21 = ssub.s32 %s13, %s20
    %p22 = scmp.eq.s32.totalorder %s21, 0
    %s24 = sadd.s32 %s23, 1
    %s25 = scalar_select %p22, %s23, %s24
    %p28 = pneg %p22
    %p29 = scmp.eq.s32.totalorder %s13, 3
    %p30 = por %p28, %p29
    %p31 = scmp.ne.s32.totalorder %s23, %s26
    %p32 = scmp.eq.s32.totalorder %s13, 0
    %p33 = por %p31, %p32
    %p34 = scmp.ne.s32.totalorder %s23, %s26
    %p35 = scmp.eq.s32.totalorder %s18, 3
    %p36 = por %p34, %p35
    %p37 = scmp.ne.s32.totalorder %s26, %s27
    %p38 = scmp.eq.s32.totalorder %s18, 0
    %p39 = por %p37, %p38
    %p40 = scmp.ne.s32.totalorder %s26, %s27
    %p41 = scmp.eq.s32.totalorder %s19, 3
    %p42 = por %p40, %p41
    %p44 = scmp.ne.s32.totalorder %s27, %s43
    %p45 = scmp.eq.s32.totalorder %s19, 0
    %p46 = por %p44, %p45
    %s47 = ssub.s32 %s13, %s20
    %p48 = scmp.eq.s32.totalorder %s47, 0
    %s50 = sadd.s32 %s49, 1
    %s51 = scalar_select %p48, %s49, %s50
    %p54 = pneg %p48
    %p55 = scmp.eq.s32.totalorder %s13, 3
    %p56 = por %p54, %p55
    %p57 = scmp.ne.s32.totalorder %s49, %s52
    %p58 = scmp.eq.s32.totalorder %s13, 0
    %p59 = por %p57, %p58
    %p60 = scmp.ne.s32.totalorder %s49, %s52
    %p61 = scmp.eq.s32.totalorder %s18, 3
    %p62 = por %p60, %p61
    %p63 = scmp.ne.s32.totalorder %s52, %s53
    %p64 = scmp.eq.s32.totalorder %s18, 0
    %p65 = por %p63, %p64
    %p66 = scmp.ne.s32.totalorder %s52, %s53
    %p67 = scmp.eq.s32.totalorder %s19, 3
    %p68 = por %p66, %p67
    %p70 = scmp.ne.s32.totalorder %s53, %s69
    %p71 = scmp.eq.s32.totalorder %s19, 0
    %p72 = por %p70, %p71
    %s73 = ssub.s32 %s13, %s20
    %p74 = scmp.eq.s32.totalorder %s73, 0
    %s76 = sadd.s32 %s75, 1
    %s77 = scalar_select %p74, %s75, %s76
    %p80 = pneg %p74
    %p81 = scmp.eq.s32.totalorder %s13, 3
    %p82 = por %p80, %p81
    %p83 = scmp.ne.s32.totalorder %s75, %s78
    %p84 = scmp.eq.s32.totalorder %s13, 0
    %p85 = por %p83, %p84
    %p86 = scmp.ne.s32.totalorder %s75, %s78
    %p87 = scmp.eq.s32.totalorder %s18, 3
    %p88 = por %p86, %p87
    %p89 = scmp.ne.s32.totalorder %s78, %s79
    %p90 = scmp.eq.s32.totalorder %s18, 0
    %p91 = por %p89, %p90
    %p92 = scmp.ne.s32.totalorder %s78, %s79
    %p93 = scmp.eq.s32.totalorder %s19, 3
    %p94 = por %p92, %p93
    %p96 = scmp.ne.s32.totalorder %s79, %s95
    %p97 = scmp.eq.s32.totalorder %s19, 0
    %p98 = por %p96, %p97
    %s100 = sadd.s32 %s99, 1
    %p103 = scmp.eq.s32.totalorder %s13, 3
    %p104 = scmp.ne.s32.totalorder %s99, %s101
    %p105 = scmp.eq.s32.totalorder %s13, 0
    %p106 = por %p104, %p105
    %p107 = scmp.ne.s32.totalorder %s99, %s101
    %p108 = scmp.eq.s32.totalorder %s18, 3
    %p109 = por %p107, %p108
    %p110 = scmp.ne.s32.totalorder %s101, %s102
    %p111 = scmp.eq.s32.totalorder %s18, 0
    %p112 = por %p110, %p111
    %p113 = scmp.ne.s32.totalorder %s101, %s102
    %p114 = scmp.eq.s32.totalorder %s19, 3
    %p115 = por %p113, %p114
    %p117 = scmp.ne.s32.totalorder %s102, %s116
    %p118 = scmp.eq.s32.totalorder %s19, 0
    %p119 = por %p117, %p118
    %s121 = sadd.s32 %s120, 1
    %p124 = scmp.eq.s32.totalorder %s13, 3
    %p125 = scmp.ne.s32.totalorder %s120, %s122
    %p126 = scmp.eq.s32.totalorder %s13, 0
    %p127 = por %p125, %p126
    %p128 = scmp.ne.s32.totalorder %s120, %s122
    %p129 = scmp.eq.s32.totalorder %s18, 3
    %p130 = por %p128, %p129
    %p131 = scmp.ne.s32.totalorder %s122, %s123
    %p132 = scmp.eq.s32.totalorder %s18, 0
    %p133 = por %p131, %p132
    %p134 = scmp.ne.s32.totalorder %s122, %s123
    %p135 = scmp.eq.s32.totalorder %s19, 3
    %p136 = por %p134, %p135
    %p138 = scmp.ne.s32.totalorder %s123, %s137
    %p139 = scmp.eq.s32.totalorder %s19, 0
    %p140 = por %p138, %p139
    %s142 = sadd.s32 %s141, 1
    %p145 = scmp.eq.s32.totalorder %s13, 3
    %p146 = scmp.ne.s32.totalorder %s141, %s143
    %p147 = scmp.eq.s32.totalorder %s13, 0
    %p148 = por %p146, %p147
    %p149 = scmp.ne.s32.totalorder %s141, %s143
    %p150 = scmp.eq.s32.totalorder %s18, 3
    %p151 = por %p149, %p150
    %p152 = scmp.ne.s32.totalorder %s143, %s144
    %p153 = scmp.eq.s32.totalorder %s18, 0
    %p154 = por %p152, %p153
    %p155 = scmp.ne.s32.totalorder %s143, %s144
    %p156 = scmp.eq.s32.totalorder %s19, 3
    %p157 = por %p155, %p156
    %p159 = scmp.ne.s32.totalorder %s144, %s158
    %p160 = scmp.eq.s32.totalorder %s19, 0
    %p161 = por %p159, %p160
    %s163 = sadd.s32 %s162, 1
    %p166 = scmp.eq.s32.totalorder %s13, 3
    %p167 = scmp.ne.s32.totalorder %s162, %s164
    %p168 = scmp.eq.s32.totalorder %s13, 0
    %p169 = por %p167, %p168
    %p170 = scmp.ne.s32.totalorder %s162, %s164
    %p171 = scmp.eq.s32.totalorder %s18, 3
    %p172 = por %p170, %p171
    %p173 = scmp.ne.s32.totalorder %s164, %s165
    %p174 = scmp.eq.s32.totalorder %s18, 0
    %p175 = por %p173, %p174
    %p176 = scmp.ne.s32.totalorder %s164, %s165
    %p177 = scmp.eq.s32.totalorder %s19, 3
    %p178 = por %p176, %p177
    %p180 = scmp.ne.s32.totalorder %s165, %s179
    %p181 = scmp.eq.s32.totalorder %s19, 0
    %p182 = por %p180, %p181
    %s183 = ssub.s32 %s13, %s20
    %p184 = scmp.eq.s32.totalorder %s183, 0
    %s186 = sadd.s32 %s185, 1
    %s187 = scalar_select %p184, %s185, %s186
    %p190 = pneg %p184
    %p191 = scmp.eq.s32.totalorder %s13, 3
    %p192 = por %p190, %p191
    %p193 = scmp.ne.s32.totalorder %s185, %s188
    %p194 = scmp.eq.s32.totalorder %s13, 0
    %p195 = por %p193, %p194
    %p196 = scmp.ne.s32.totalorder %s185, %s188
    %p197 = scmp.eq.s32.totalorder %s18, 3
    %p198 = por %p196, %p197
    %p199 = scmp.ne.s32.totalorder %s188, %s189
    %p200 = scmp.eq.s32.totalorder %s18, 0
    %p201 = por %p199, %p200
    %p202 = scmp.ne.s32.totalorder %s188, %s189
    %p203 = scmp.eq.s32.totalorder %s19, 3
    %p204 = por %p202, %p203
    %p206 = scmp.ne.s32.totalorder %s189, %s205
    %p207 = scmp.eq.s32.totalorder %s19, 0
    %p208 = por %p206, %p207
    %p209 = scmp.le.s32.totalorder 1, %s13
    %p210 = scmp.lt.s32.totalorder %s13, 5
    %p211 = pnand %p209, %p210
    %p212 = pneg %p211
    // Predicated region
    $region9: #{upblock_forward.7} parent=5 // pred_check
      _
    $region10: #{upblock_forward.7} parent=5 // pred_check_branch
      %214 = sbr.rel (%p211) target = $region12
    $region11: #{upblock_forward.7} parent=5 // pred_region
      %s215 = ssub.s32 %s13, 1
      // Predicated region
      $region13: #{upblock_forward.7} parent=11 // pred_check
        %p216 = pneg %p112
      $region14: #{upblock_forward.7} parent=11 // pred_check_branch
        %218 = sbr.rel (%p216) target = $region16
      $region15: #{upblock_forward.7} parent=11 // pred_region
        _
      $region16: #{upblock_forward.7} parent=11 // pred_fallthru
        _
      // Predicated region
      $region17: #{upblock_forward.7} parent=11 // pred_check
        %p219 = pneg %p133
      $region18: #{upblock_forward.7} parent=11 // pred_check_branch
        %221 = sbr.rel (%p219) target = $region20
      $region19: #{upblock_forward.7} parent=11 // pred_region
        _
      $region20: #{upblock_forward.7} parent=11 // pred_fallthru
        _
      // Predicated region
      $region21: #{upblock_forward.7} parent=11 // pred_check
        %p222 = pneg %p154
      $region22: #{upblock_forward.7} parent=11 // pred_check_branch
        %224 = sbr.rel (%p222) target = $region24
      $region23: #{upblock_forward.7} parent=11 // pred_region
        _
      $region24: #{upblock_forward.7} parent=11 // pred_fallthru
        _
      // Predicated region
      $region25: #{upblock_forward.7} parent=11 // pred_check
        %p225 = pneg %p175
      $region26: #{upblock_forward.7} parent=11 // pred_check_branch
        %227 = sbr.rel (%p225) target = $region28
      $region27: #{upblock_forward.7} parent=11 // pred_region
        _
      $region28: #{upblock_forward.7} parent=11 // pred_fallthru
        _
    $region12: #{upblock_forward.7} parent=5 // pred_fallthru
      _
    %p228 = scmp.lt.s32.totalorder %s13, 4
    // Predicated region
    $region29: #{upblock_forward.7} parent=5 // pred_check
      %p229 = pneg %p228
    $region30: #{upblock_forward.7} parent=5 // pred_check_branch
      %231 = sbr.rel (%p229) target = $region32
    $region31: #{upblock_forward.7} parent=5 // pred_region
      // Predicated region
      $region33: #{upblock_forward.7} parent=31 // pred_check
        %p232 = pneg %p33
      $region34: #{upblock_forward.7} parent=31 // pred_check_branch
        %234 = sbr.rel (%p232) target = $region36
      $region35: #{upblock_forward.7} parent=31 // pred_region
        %s235 = smul.u32 16, %s13
        %p236 = scmp.lt.s32.totalorder %s235, 63
        %s237 = scalar_select %p236, %s235, 63
        %s238 = smul.addr %s237, 4
        %s239 = scalar_lea.vmem %s0, %s238
        %s240 = smul.u32 16, %s13
      $region36: #{upblock_forward.7} parent=31 // pred_fallthru
        _
      // Predicated region
      $region37: #{upblock_forward.7} parent=31 // pred_check
        %p241 = pneg %p59
      $region38: #{upblock_forward.7} parent=31 // pred_check_branch
        %243 = sbr.rel (%p241) target = $region40
      $region39: #{upblock_forward.7} parent=31 // pred_region
        %s244 = smul.u32 16, %s13
        %p245 = scmp.lt.s32.totalorder %s244, 63
        %s246 = scalar_select %p245, %s244, 63
        %s247 = smul.addr %s246, 4
        %s248 = scalar_lea.vmem %s1, %s247
        %s249 = smul.u32 16, %s13
      $region40: #{upblock_forward.7} parent=31 // pred_fallthru
        _
      // Predicated region
      $region41: #{upblock_forward.7} parent=31 // pred_check
        %p250 = pneg %p85
      $region42: #{upblock_forward.7} parent=31 // pred_check_branch
        %252 = sbr.rel (%p250) target = $region44
      $region43: #{upblock_forward.7} parent=31 // pred_region
        %s253 = smul.u32 16, %s13
        %p254 = scmp.lt.s32.totalorder %s253, 63
        %s255 = scalar_select %p254, %s253, 63
        %s256 = smul.addr %s255, 4
        %s257 = scalar_lea.vmem %s2, %s256
        %s258 = smul.u32 16, %s13
      $region44: #{upblock_forward.7} parent=31 // pred_fallthru
        _
    $region32: #{upblock_forward.7} parent=5 // pred_fallthru
      _
    %p259 = scmp.le.s32.totalorder 1, %s13
    %p260 = scmp.lt.s32.totalorder %s13, 5
    %p261 = pnand %p259, %p260
    %p262 = pneg %p261
    // Predicated region
    $region45: #{upblock_forward.7} parent=5 // pred_check
      _
    $region46: #{upblock_forward.7} parent=5 // pred_check_branch
      %264 = sbr.rel (%p261) target = $region48
    $region47: #{upblock_forward.7} parent=5 // pred_region
      %s265 = ssub.s32 %s13, 1
      %s266 = smul.u32 16, %s18
      %p267 = scmp.lt.s32.totalorder %s266, 63
      %s268 = scalar_select %p267, %s266, 63
      %s269 = smul.addr %s268, 4
      %s270 = scalar_lea.vmem %s0, %s269
      %p271 = pneg %p39
      %p272 = pneg %p36
      %s273 = smul.u32 16, %s18
      %p274 = scmp.lt.s32.totalorder %s273, 63
      %s275 = scalar_select %p274, %s273, 63
      %s276 = smul.addr %s275, 4
      %s277 = scalar_lea.vmem %s1, %s276
      %p278 = pneg %p65
      %p279 = pneg %p62
      %s280 = smul.u32 16, %s18
      %p281 = scmp.lt.s32.totalorder %s280, 63
      %s282 = scalar_select %p281, %s280, 63
      %s283 = smul.addr %s282, 4
      %s284 = scalar_lea.vmem %s2, %s283
      %p285 = pneg %p91
      %p286 = pneg %p88
      %p287 = pneg %p112
      %p288 = pneg %p109
      %p289 = pneg %p133
      %p290 = pneg %p130
      %p291 = pneg %p154
      %p292 = pneg %p151
      %p293 = pneg %p175
      %p294 = pneg %p172
      %p295 = pneg %p201
      %p296 = pneg %p198
      %s297 = smul.u32 16, %s18
      %p298 = scmp.lt.s32.totalorder %s297, 63
      %s299 = scalar_select %p298, %s297, 63
      %s300 = smul.addr %s299, 8
      %s301 = scalar_lea.vmem %s7, %s300
      %s302 = smul.u32 16, %s18
      %p303 = scmp.lt.s32.totalorder %s302, 63
      %s304 = scalar_select %p303, %s302, 63
      %s305 = smul.addr %s304, 4
      %s306 = scalar_lea.vmem %s0, %s305
      %s307 = smul.u32 16, %s18
      %s308 = smul.u32 16, %s18
      %p309 = scmp.lt.s32.totalorder %s308, 63
      %s310 = scalar_select %p309, %s308, 63
      %s311 = smul.addr %s310, 4
      %s312 = scalar_lea.vmem %s1, %s311
      %s313 = smul.u32 16, %s18
      %s314 = smul.u32 16, %s18
      %p315 = scmp.lt.s32.totalorder %s314, 63
      %s316 = scalar_select %p315, %s314, 63
      %s317 = smul.addr %s316, 4
      %s318 = scalar_lea.vmem %s2, %s317
      %s319 = smul.u32 16, %s18
      %s320 = smul.u32 16, %s18
      %p321 = scmp.lt.s32.totalorder %s320, 63
      %s322 = scalar_select %p321, %s320, 63
      %s323 = smul.addr %s322, 8
      %s324 = scalar_lea.vmem %s7, %s323
      %s325 = smul.u32 16, %s18
      %v327 = vld [vmem:[%s306] sm:$0xf]
      %v328 = vld [vmem:[%s306 + $0x4] sm:$0xf]
      %v329 = vld [vmem:[%s306 + $0x8] sm:$0xf]
      %v330 = vld [vmem:[%s306 + $0xc] sm:$0xf]
      %v331 = vld [vmem:[%s306 + $0x10] sm:$0xf]
      %v332 = vld [vmem:[%s306 + $0x14] sm:$0xf]
      %v333 = vld [vmem:[%s306 + $0x18] sm:$0xf]
      %v334 = vld [vmem:[%s306 + $0x1c] sm:$0xf]
      %v335 = vld [vmem:[%s306 + $0x20] sm:$0xf]
      %v336 = vld [vmem:[%s306 + $0x24] sm:$0xf]
      %v337 = vld [vmem:[%s306 + $0x28] sm:$0xf]
      %v338 = vld [vmem:[%s306 + $0x2c] sm:$0xf]
      %v339 = vld [vmem:[%s306 + $0x30] sm:$0xf]
      %v340 = vld [vmem:[%s306 + $0x34] sm:$0xf]
      %v341 = vld [vmem:[%s306 + $0x38] sm:$0xf]
      %v342 = vld [vmem:[%s306 + $0x3c] sm:$0xf]
      %v343 = vunpack.c.l.bf16 %v327
      %v344 = vunpack.c.l.bf16 %v328
      %v345 = vunpack.c.l.bf16 %v329
      %v346 = vunpack.c.l.bf16 %v330
      %v347 = vunpack.c.l.bf16 %v331
      %v348 = vunpack.c.l.bf16 %v332
      %v349 = vunpack.c.l.bf16 %v333
      %v350 = vunpack.c.l.bf16 %v334
      %v351 = vunpack.c.l.bf16 %v335
      %v352 = vunpack.c.l.bf16 %v336
      %v353 = vunpack.c.l.bf16 %v337
      %v354 = vunpack.c.l.bf16 %v338
      %v355 = vunpack.c.l.bf16 %v339
      %v356 = vunpack.c.l.bf16 %v340
      %v357 = vunpack.c.l.bf16 %v341
      %v358 = vunpack.c.l.bf16 %v342
      %v359 = vld [vmem:[%s3] sm:$0x1]
      %v361 = vlaneseq
      %v362 = vshrl.u32 %v361, 7
      %v363 = vsub.s32 0, %v362
      %v364 = vrot.slane %v359, %v363
      %v366 = vmul.f32 %v343, %v364
      %v367 = vmul.f32 %v344, %v364
      %v368 = vmul.f32 %v345, %v364
      %v369 = vmul.f32 %v346, %v364
      %v370 = vmul.f32 %v347, %v364
      %v371 = vmul.f32 %v348, %v364
      %v372 = vmul.f32 %v349, %v364
      %v373 = vmul.f32 %v350, %v364
      %v374 = vmul.f32 %v351, %v364
      %v375 = vmul.f32 %v352, %v364
      %v376 = vmul.f32 %v353, %v364
      %v377 = vmul.f32 %v354, %v364
      %v378 = vmul.f32 %v355, %v364
      %v379 = vmul.f32 %v356, %v364
      %v380 = vmul.f32 %v357, %v364
      %v381 = vmul.f32 %v358, %v364
      %v382 = vld [vmem:[%s4] sm:$0x1]
      %v384 = vlaneseq
      %v385 = vshrl.u32 %v384, 7
      %v386 = vsub.s32 0, %v385
      %v387 = vrot.slane %v382, %v386
      %v389 = vadd.f32 %v366, %v387
      %v390 = vadd.f32 %v367, %v387
      %v391 = vadd.f32 %v368, %v387
      %v392 = vadd.f32 %v369, %v387
      %v393 = vadd.f32 %v370, %v387
      %v394 = vadd.f32 %v371, %v387
      %v395 = vadd.f32 %v372, %v387
      %v396 = vadd.f32 %v373, %v387
      %v397 = vadd.f32 %v374, %v387
      %v398 = vadd.f32 %v375, %v387
      %v399 = vadd.f32 %v376, %v387
      %v400 = vadd.f32 %v377, %v387
      %v401 = vadd.f32 %v378, %v387
      %v402 = vadd.f32 %v379, %v387
      %v403 = vadd.f32 %v380, %v387
      %v404 = vadd.f32 %v381, %v387
      %v405 = vld [vmem:[%s312] sm:$0xf]
      %v406 = vld [vmem:[%s312 + $0x4] sm:$0xf]
      %v407 = vld [vmem:[%s312 + $0x8] sm:$0xf]
      %v408 = vld [vmem:[%s312 + $0xc] sm:$0xf]
      %v409 = vld [vmem:[%s312 + $0x10] sm:$0xf]
      %v410 = vld [vmem:[%s312 + $0x14] sm:$0xf]
      %v411 = vld [vmem:[%s312 + $0x18] sm:$0xf]
      %v412 = vld [vmem:[%s312 + $0x1c] sm:$0xf]
      %v413 = vld [vmem:[%s312 + $0x20] sm:$0xf]
      %v414 = vld [vmem:[%s312 + $0x24] sm:$0xf]
      %v415 = vld [vmem:[%s312 + $0x28] sm:$0xf]
      %v416 = vld [vmem:[%s312 + $0x2c] sm:$0xf]
      %v417 = vld [vmem:[%s312 + $0x30] sm:$0xf]
      %v418 = vld [vmem:[%s312 + $0x34] sm:$0xf]
      %v419 = vld [vmem:[%s312 + $0x38] sm:$0xf]
      %v420 = vld [vmem:[%s312 + $0x3c] sm:$0xf]
      %v421 = vunpack.c.l.bf16 %v405
      %v422 = vunpack.c.l.bf16 %v406
      %v423 = vunpack.c.l.bf16 %v407
      %v424 = vunpack.c.l.bf16 %v408
      %v425 = vunpack.c.l.bf16 %v409
      %v426 = vunpack.c.l.bf16 %v410
      %v427 = vunpack.c.l.bf16 %v411
      %v428 = vunpack.c.l.bf16 %v412
      %v429 = vunpack.c.l.bf16 %v413
      %v430 = vunpack.c.l.bf16 %v414
      %v431 = vunpack.c.l.bf16 %v415
      %v432 = vunpack.c.l.bf16 %v416
      %v433 = vunpack.c.l.bf16 %v417
      %v434 = vunpack.c.l.bf16 %v418
      %v435 = vunpack.c.l.bf16 %v419
      %v436 = vunpack.c.l.bf16 %v420
      %v437 = vmul.f32 %v421, 0.5
      %v438 = vmul.f32 %v422, 0.5
      %v439 = vmul.f32 %v423, 0.5
      %v440 = vmul.f32 %v424, 0.5
      %v441 = vmul.f32 %v425, 0.5
      %v442 = vmul.f32 %v426, 0.5
      %v443 = vmul.f32 %v427, 0.5
      %v444 = vmul.f32 %v428, 0.5
      %v445 = vmul.f32 %v429, 0.5
      %v446 = vmul.f32 %v430, 0.5
      %v447 = vmul.f32 %v431, 0.5
      %v448 = vmul.f32 %v432, 0.5
      %v449 = vmul.f32 %v433, 0.5
      %v450 = vmul.f32 %v434, 0.5
      %v451 = vmul.f32 %v435, 0.5
      %v452 = vmul.f32 %v436, 0.5
      %v453 = vmul.f32 %v421, 0.70710677
      %v454 = vmul.f32 %v422, 0.70710677
      %v455 = vmul.f32 %v423, 0.70710677
      %v456 = vmul.f32 %v424, 0.70710677
      %v457 = vmul.f32 %v425, 0.70710677
      %v458 = vmul.f32 %v426, 0.70710677
      %v459 = vmul.f32 %v427, 0.70710677
      %v460 = vmul.f32 %v428, 0.70710677
      %v461 = vmul.f32 %v429, 0.70710677
      %v462 = vmul.f32 %v430, 0.70710677
      %v463 = vmul.f32 %v431, 0.70710677
      %v464 = vmul.f32 %v432, 0.70710677
      %v465 = vmul.f32 %v433, 0.70710677
      %v466 = vmul.f32 %v434, 0.70710677
      %v467 = vmul.f32 %v435, 0.70710677
      %v468 = vmul.f32 %v436, 0.70710677
      %v469 = verf.f32.pop %v453
      %v470 = verf.f32.pop %v454
      %v471 = verf.f32.pop %v455
      %v472 = verf.f32.pop %v456
      %v473 = verf.f32.pop %v457
      %v474 = verf.f32.pop %v458
      %v475 = verf.f32.pop %v459
      %v476 = verf.f32.pop %v460
      %v477 = verf.f32.pop %v461
      %v478 = verf.f32.pop %v462
      %v479 = verf.f32.pop %v463
      %v480 = verf.f32.pop %v464
      %v481 = verf.f32.pop %v465
      %v482 = verf.f32.pop %v466
      %v483 = verf.f32.pop %v467
      %v484 = verf.f32.pop %v468
      %v485 = vadd.f32 %v469, 1.0
      %v486 = vadd.f32 %v470, 1.0
      %v487 = vadd.f32 %v471, 1.0
      %v488 = vadd.f32 %v472, 1.0
      %v489 = vadd.f32 %v473, 1.0
      %v490 = vadd.f32 %v474, 1.0
      %v491 = vadd.f32 %v475, 1.0
      %v492 = vadd.f32 %v476, 1.0
      %v493 = vadd.f32 %v477, 1.0
      %v494 = vadd.f32 %v478, 1.0
      %v495 = vadd.f32 %v479, 1.0
      %v496 = vadd.f32 %v480, 1.0
      %v497 = vadd.f32 %v481, 1.0
      %v498 = vadd.f32 %v482, 1.0
      %v499 = vadd.f32 %v483, 1.0
      %v500 = vadd.f32 %v484, 1.0
      %v501 = vmul.f32 %v437, %v485
      %v502 = vmul.f32 %v438, %v486
      %v503 = vmul.f32 %v439, %v487
      %v504 = vmul.f32 %v440, %v488
      %v505 = vmul.f32 %v441, %v489
      %v506 = vmul.f32 %v442, %v490
      %v507 = vmul.f32 %v443, %v491
      %v508 = vmul.f32 %v444, %v492
      %v509 = vmul.f32 %v445, %v493
      %v510 = vmul.f32 %v446, %v494
      %v511 = vmul.f32 %v447, %v495
      %v512 = vmul.f32 %v448, %v496
      %v513 = vmul.f32 %v449, %v497
      %v514 = vmul.f32 %v450, %v498
      %v515 = vmul.f32 %v451, %v499
      %v516 = vmul.f32 %v452, %v500
      %v517 = vpack.c.bf16 %v502, %v501
      %v518 = vpack.c.bf16 %v504, %v503
      %v519 = vpack.c.bf16 %v506, %v505
      %v520 = vpack.c.bf16 %v508, %v507
      %v521 = vpack.c.bf16 %v510, %v509
      %v522 = vpack.c.bf16 %v512, %v511
      %v523 = vpack.c.bf16 %v514, %v513
      %v524 = vpack.c.bf16 %v516, %v515
      %v525 = vld [vmem:[%s5] sm:$0x3]
      %vm526 = vcmask 31744
      %v528 = vsel %vm526, %v517, 0
      %v531 = vsel %vm526, %v518, 0
      %v534 = vsel %vm526, %v519, 0
      %v537 = vsel %vm526, %v520, 0
      %v540 = vsel %vm526, %v521, 0
      %v543 = vsel %vm526, %v522, 0
      %v546 = vsel %vm526, %v523, 0
      %v549 = vsel %vm526, %v524, 0
      %vm551 = vcmask 1041408
      %v553 = vsel %vm551, %v525, 0
      %555 = vmatprep.subr.bf16.mxu0 0
      %556 = vmatpush1.bf16.msra.mxu0 %v553
      %557 = vmatprep.subr.bf16.mxu0 0
      %558 = vmatpush1.bf16.msra.mxu0 0
      %559 = vmatprep.subr.bf16.mxu0 0
      %560 = vmatpush1.bf16.msra.mxu0 0
      %561 = vmatprep.subr.bf16.mxu0 0
      %562 = vmatpush1.bf16.msra.mxu0 0
      %563 = vmatprep.subr.bf16.mxu0 0
      %564 = vmatpush1.bf16.msra.mxu0 0
      %565 = vmatprep.subr.bf16.mxu0 0
      %566 = vmatpush1.bf16.msra.mxu0 0
      %567 = vmatprep.subr.bf16.mxu0 0
      %568 = vmatpush1.bf16.msra.mxu0 0
      %569 = vmatprep.subr.bf16.mxu0 0
      %570 = vmatpush1.bf16.msra.mxu0 0
      %571 = vmatprep.subr.bf16.mxu0 0
      %572 = vmatpush1.bf16.msra.mxu0 0
      %573 = vmatprep.subr.bf16.mxu0 0
      %574 = vmatpush1.bf16.msra.mxu0 0
      %575 = vmatprep.subr.bf16.mxu0 0
      %576 = vmatpush1.bf16.msra.mxu0 0
      %577 = vmatprep.subr.bf16.mxu0 0
      %578 = vmatpush1.bf16.msra.mxu0 0
      %579 = vmatprep.subr.bf16.mxu0 0
      %580 = vmatpush1.bf16.msra.mxu0 0
      %581 = vmatprep.subr.bf16.mxu0 0
      %582 = vmatpush1.bf16.msra.mxu0 0
      %583 = vmatprep.subr.bf16.mxu0 0
      %584 = vmatpush1.bf16.msra.mxu0 0
      %585 = vmatprep.subr.bf16.mxu0 0
      %586 = vmatpush1.bf16.msra.mxu0 0
      %587 = vmatprep.mubr.bf16.mxu0 0
      %588 = vmatmul.mubr.bf16.gmra.mrb[0].mxu0 %v528
      %v589 = vpop.f32.mrb[0].mxu0
      %v590 = vadd.f32 0.0, %v589
      %v591 = vpop.f32.mrb[0].mxu0
      %v592 = vpop.f32.mrb[0].mxu0
      %v593 = vadd.f32 0.0, %v592
      %v594 = vpop.f32.mrb[0].mxu0
      %595 = vmatprep.mubr.bf16.mxu0 0
      %596 = vmatmul.mubr.bf16.gmra.mrb[0].mxu0 %v531
      %v597 = vpop.f32.mrb[0].mxu0
      %v598 = vadd.f32 0.0, %v597
      %v599 = vpop.f32.mrb[0].mxu0
      %v600 = vpop.f32.mrb[0].mxu0
      %v601 = vadd.f32 0.0, %v600
      %v602 = vpop.f32.mrb[0].mxu0
      %603 = vmatprep.mubr.bf16.mxu0 0
      %604 = vmatmul.mubr.bf16.gmra.mrb[0].mxu0 %v534
      %v605 = vpop.f32.mrb[0].mxu0
      %v606 = vadd.f32 0.0, %v605
      %v607 = vpop.f32.mrb[0].mxu0
      %v608 = vpop.f32.mrb[0].mxu0
      %v609 = vadd.f32 0.0, %v608
      %v610 = vpop.f32.mrb[0].mxu0
      %611 = vmatprep.mubr.bf16.mxu0 0
      %612 = vmatmul.mubr.bf16.gmra.mrb[0].mxu0 %v537
      %v613 = vpop.f32.mrb[0].mxu0
      %v614 = vadd.f32 0.0, %v613
      %v615 = vpop.f32.mrb[0].mxu0
      %v616 = vpop.f32.mrb[0].mxu0
      %v617 = vadd.f32 0.0, %v616
      %v618 = vpop.f32.mrb[0].mxu0
      %619 = vmatprep.mubr.bf16.mxu0 0
      %620 = vmatmul.mubr.bf16.gmra.mrb[0].mxu0 %v540
      %v621 = vpop.f32.mrb[0].mxu0
      %v622 = vadd.f32 0.0, %v621
      %v623 = vpop.f32.mrb[0].mxu0
      %v624 = vpop.f32.mrb[0].mxu0
      %v625 = vadd.f32 0.0, %v624
      %v626 = vpop.f32.mrb[0].mxu0
      %627 = vmatprep.mubr.bf16.mxu0 0
      %628 = vmatmul.mubr.bf16.gmra.mrb[0].mxu0 %v543
      %v629 = vpop.f32.mrb[0].mxu0
      %v630 = vadd.f32 0.0, %v629
      %v631 = vpop.f32.mrb[0].mxu0
      %v632 = vpop.f32.mrb[0].mxu0
      %v633 = vadd.f32 0.0, %v632
      %v634 = vpop.f32.mrb[0].mxu0
      %635 = vmatprep.mubr.bf16.mxu0 0
      %636 = vmatmul.mubr.bf16.gmra.mrb[0].mxu0 %v546
      %v637 = vpop.f32.mrb[0].mxu0
      %v638 = vadd.f32 0.0, %v637
      %v639 = vpop.f32.mrb[0].mxu0
      %v640 = vpop.f32.mrb[0].mxu0
      %v641 = vadd.f32 0.0, %v640
      %v642 = vpop.f32.mrb[0].mxu0
      %643 = vmatprep.mubr.bf16.mxu0 0
      %644 = vmatmul.mubr.bf16.gmra.mrb[0].mxu0 %v549
      %v645 = vpop.f32.mrb[0].mxu0
      %v646 = vadd.f32 0.0, %v645
      %v647 = vpop.f32.mrb[0].mxu0
      %v648 = vpop.f32.mrb[0].mxu0
      %v649 = vadd.f32 0.0, %v648
      %v650 = vpop.f32.mrb[0].mxu0
      %651 = vdwg.mxu0
      %v652 = vmul.f32 %v389, 0.5
      %v653 = vmul.f32 %v390, 0.5
      %v654 = vmul.f32 %v391, 0.5
      %v655 = vmul.f32 %v392, 0.5
      %v656 = vmul.f32 %v393, 0.5
      %v657 = vmul.f32 %v394, 0.5
      %v658 = vmul.f32 %v395, 0.5
      %v659 = vmul.f32 %v396, 0.5
      %v660 = vmul.f32 %v397, 0.5
      %v661 = vmul.f32 %v398, 0.5
      %v662 = vmul.f32 %v399, 0.5
      %v663 = vmul.f32 %v400, 0.5
      %v664 = vmul.f32 %v401, 0.5
      %v665 = vmul.f32 %v402, 0.5
      %v666 = vmul.f32 %v403, 0.5
      %v667 = vmul.f32 %v404, 0.5
      %v668 = vmul.f32 %v389, 0.70710677
      %v669 = vmul.f32 %v390, 0.70710677
      %v670 = vmul.f32 %v391, 0.70710677
      %v671 = vmul.f32 %v392, 0.70710677
      %v672 = vmul.f32 %v393, 0.70710677
      %v673 = vmul.f32 %v394, 0.70710677
      %v674 = vmul.f32 %v395, 0.70710677
      %v675 = vmul.f32 %v396, 0.70710677
      %v676 = vmul.f32 %v397, 0.70710677
      %v677 = vmul.f32 %v398, 0.70710677
      %v678 = vmul.f32 %v399, 0.70710677
      %v679 = vmul.f32 %v400, 0.70710677
      %v680 = vmul.f32 %v401, 0.70710677
      %v681 = vmul.f32 %v402, 0.70710677
      %v682 = vmul.f32 %v403, 0.70710677
      %v683 = vmul.f32 %v404, 0.70710677
      %v684 = verf.f32.pop %v668
      %v685 = verf.f32.pop %v669
      %v686 = verf.f32.pop %v670
      %v687 = verf.f32.pop %v671
      %v688 = verf.f32.pop %v672
      %v689 = verf.f32.pop %v673
      %v690 = verf.f32.pop %v674
      %v691 = verf.f32.pop %v675
      %v692 = verf.f32.pop %v676
      %v693 = verf.f32.pop %v677
      %v694 = verf.f32.pop %v678
      %v695 = verf.f32.pop %v679
      %v696 = verf.f32.pop %v680
      %v697 = verf.f32.pop %v681
      %v698 = verf.f32.pop %v682
      %v699 = verf.f32.pop %v683
      %v700 = vadd.f32 %v684, 1.0
      %v701 = vadd.f32 %v685, 1.0
      %v702 = vadd.f32 %v686, 1.0
      %v703 = vadd.f32 %v687, 1.0
      %v704 = vadd.f32 %v688, 1.0
      %v705 = vadd.f32 %v689, 1.0
      %v706 = vadd.f32 %v690, 1.0
      %v707 = vadd.f32 %v691, 1.0
      %v708 = vadd.f32 %v692, 1.0
      %v709 = vadd.f32 %v693, 1.0
      %v710 = vadd.f32 %v694, 1.0
      %v711 = vadd.f32 %v695, 1.0
      %v712 = vadd.f32 %v696, 1.0
      %v713 = vadd.f32 %v697, 1.0
      %v714 = vadd.f32 %v698, 1.0
      %v715 = vadd.f32 %v699, 1.0
      %v716 = vmul.f32 %v652, %v700
      %v717 = vmul.f32 %v653, %v701
      %v718 = vmul.f32 %v654, %v702
      %v719 = vmul.f32 %v655, %v703
      %v720 = vmul.f32 %v656, %v704
      %v721 = vmul.f32 %v657, %v705
      %v722 = vmul.f32 %v658, %v706
      %v723 = vmul.f32 %v659, %v707
      %v724 = vmul.f32 %v660, %v708
      %v725 = vmul.f32 %v661, %v709
      %v726 = vmul.f32 %v662, %v710
      %v727 = vmul.f32 %v663, %v711
      %v728 = vmul.f32 %v664, %v712
      %v729 = vmul.f32 %v665, %v713
      %v730 = vmul.f32 %v666, %v714
      %v731 = vmul.f32 %v667, %v715
      %v732 = vadd.f32 %v716, %v590
      %v733 = vadd.f32 %v717, %v593
      %v734 = vadd.f32 %v718, %v598
      %v735 = vadd.f32 %v719, %v601
      %v736 = vadd.f32 %v720, %v606
      %v737 = vadd.f32 %v721, %v609
      %v738 = vadd.f32 %v722, %v614
      %v739 = vadd.f32 %v723, %v617
      %v740 = vadd.f32 %v724, %v622
      %v741 = vadd.f32 %v725, %v625
      %v742 = vadd.f32 %v726, %v630
      %v743 = vadd.f32 %v727, %v633
      %v744 = vadd.f32 %v728, %v638
      %v745 = vadd.f32 %v729, %v641
      %v746 = vadd.f32 %v730, %v646
      %v747 = vadd.f32 %v731, %v649
      %v748 = vld [vmem:[%s318] sm:$0xf]
      %v749 = vld [vmem:[%s318 + $0x4] sm:$0xf]
      %v750 = vld [vmem:[%s318 + $0x8] sm:$0xf]
      %v751 = vld [vmem:[%s318 + $0xc] sm:$0xf]
      %v752 = vld [vmem:[%s318 + $0x10] sm:$0xf]
      %v753 = vld [vmem:[%s318 + $0x14] sm:$0xf]
      %v754 = vld [vmem:[%s318 + $0x18] sm:$0xf]
      %v755 = vld [vmem:[%s318 + $0x1c] sm:$0xf]
      %v756 = vld [vmem:[%s318 + $0x20] sm:$0xf]
      %v757 = vld [vmem:[%s318 + $0x24] sm:$0xf]
      %v758 = vld [vmem:[%s318 + $0x28] sm:$0xf]
      %v759 = vld [vmem:[%s318 + $0x2c] sm:$0xf]
      %v760 = vld [vmem:[%s318 + $0x30] sm:$0xf]
      %v761 = vld [vmem:[%s318 + $0x34] sm:$0xf]
      %v762 = vld [vmem:[%s318 + $0x38] sm:$0xf]
      %v763 = vld [vmem:[%s318 + $0x3c] sm:$0xf]
      %v764 = vunpack.c.l.bf16 %v748
      %v765 = vunpack.c.l.bf16 %v749
      %v766 = vunpack.c.l.bf16 %v750
      %v767 = vunpack.c.l.bf16 %v751
      %v768 = vunpack.c.l.bf16 %v752
      %v769 = vunpack.c.l.bf16 %v753
      %v770 = vunpack.c.l.bf16 %v754
      %v771 = vunpack.c.l.bf16 %v755
      %v772 = vunpack.c.l.bf16 %v756
      %v773 = vunpack.c.l.bf16 %v757
      %v774 = vunpack.c.l.bf16 %v758
      %v775 = vunpack.c.l.bf16 %v759
      %v776 = vunpack.c.l.bf16 %v760
      %v777 = vunpack.c.l.bf16 %v761
      %v778 = vunpack.c.l.bf16 %v762
      %v779 = vunpack.c.l.bf16 %v763
      %v780 = vadd.f32 %v732, %v764
      %v781 = vadd.f32 %v733, %v765
      %v782 = vadd.f32 %v734, %v766
      %v783 = vadd.f32 %v735, %v767
      %v784 = vadd.f32 %v736, %v768
      %v785 = vadd.f32 %v737, %v769
      %v786 = vadd.f32 %v738, %v770
      %v787 = vadd.f32 %v739, %v771
      %v788 = vadd.f32 %v740, %v772
      %v789 = vadd.f32 %v741, %v773
      %v790 = vadd.f32 %v742, %v774
      %v791 = vadd.f32 %v743, %v775
      %v792 = vadd.f32 %v744, %v776
      %v793 = vadd.f32 %v745, %v777
      %v794 = vadd.f32 %v746, %v778
      %v795 = vadd.f32 %v747, %v779
      %v796 = vld [vmem:[%s6] sm:$0x1]
      %v798 = vlaneseq
      %v799 = vshrl.u32 %v798, 7
      %v800 = vsub.s32 0, %v799
      %v801 = vrot.slane %v796, %v800
      %v803 = vadd.f32 %v780, %v801
      %v804 = vadd.f32 %v781, %v801
      %v805 = vadd.f32 %v782, %v801
      %v806 = vadd.f32 %v783, %v801
      %v807 = vadd.f32 %v784, %v801
      %v808 = vadd.f32 %v785, %v801
      %v809 = vadd.f32 %v786, %v801
      %v810 = vadd.f32 %v787, %v801
      %v811 = vadd.f32 %v788, %v801
      %v812 = vadd.f32 %v789, %v801
      %v813 = vadd.f32 %v790, %v801
      %v814 = vadd.f32 %v791, %v801
      %v815 = vadd.f32 %v792, %v801
      %v816 = vadd.f32 %v793, %v801
      %v817 = vadd.f32 %v794, %v801
      %v818 = vadd.f32 %v795, %v801
      %819 = vst.msk [vmem:[%s324] sm:$0xff] %vm526, %v803
      %820 = vst.msk [vmem:[%s324 + $0x8] sm:$0xff] %vm526, %v804
      %821 = vst.msk [vmem:[%s324 + $0x10] sm:$0xff] %vm526, %v805
      %822 = vst.msk [vmem:[%s324 + $0x18] sm:$0xff] %vm526, %v806
      %823 = vst.msk [vmem:[%s324 + $0x20] sm:$0xff] %vm526, %v807
      %824 = vst.msk [vmem:[%s324 + $0x28] sm:$0xff] %vm526, %v808
      %825 = vst.msk [vmem:[%s324 + $0x30] sm:$0xff] %vm526, %v809
      %826 = vst.msk [vmem:[%s324 + $0x38] sm:$0xff] %vm526, %v810
      %827 = vst.msk [vmem:[%s324 + $0x40] sm:$0xff] %vm526, %v811
      %828 = vst.msk [vmem:[%s324 + $0x48] sm:$0xff] %vm526, %v812
      %829 = vst.msk [vmem:[%s324 + $0x50] sm:$0xff] %vm526, %v813
      %830 = vst.msk [vmem:[%s324 + $0x58] sm:$0xff] %vm526, %v814
      %831 = vst.msk [vmem:[%s324 + $0x60] sm:$0xff] %vm526, %v815
      %832 = vst.msk [vmem:[%s324 + $0x68] sm:$0xff] %vm526, %v816
      %833 = vst.msk [vmem:[%s324 + $0x70] sm:$0xff] %vm526, %v817
      %834 = vst.msk [vmem:[%s324 + $0x78] sm:$0xff] %vm526, %v818
      %s835 = smul.u32 16, %s18
      %p836 = scmp.lt.s32.totalorder %s835, 63
      %s837 = scalar_select %p836, %s835, 63
      %s838 = smul.addr %s837, 8
      %s839 = scalar_lea.vmem %s7, %s838
      // Predicated region
      $region49: #{upblock_forward.7} parent=47 // pred_check
        %p840 = pneg %p198
      $region50: #{upblock_forward.7} parent=47 // pred_check_branch
        %842 = sbr.rel (%p840) target = $region52
      $region51: #{upblock_forward.7} parent=47 // pred_region
        %s843 = smul.u32 16, %s18
      $region52: #{upblock_forward.7} parent=47 // pred_fallthru
        _
    $region48: #{upblock_forward.7} parent=5 // pred_fallthru
      _
    %p844 = scmp.le.s32.totalorder 2, %s13
    // Predicated region
    $region53: #{upblock_forward.7} parent=5 // pred_check
      %p845 = pneg %p844
    $region54: #{upblock_forward.7} parent=5 // pred_check_branch
      %847 = sbr.rel (%p845) target = $region56
    $region55: #{upblock_forward.7} parent=5 // pred_region
      %s848 = ssub.s32 %s13, 2
      // Predicated region
      $region57: #{upblock_forward.7} parent=55 // pred_check
        %p849 = pneg %p204
      $region58: #{upblock_forward.7} parent=55 // pred_check_branch
        %851 = sbr.rel (%p849) target = $region60
      $region59: #{upblock_forward.7} parent=55 // pred_region
        %s852 = smul.u32 16, %s19
        %p853 = scmp.lt.s32.totalorder %s852, 63
        %s854 = scalar_select %p853, %s852, 63
        %s855 = smul.addr %s854, 8
        %s856 = scalar_lea.vmem %s7, %s855
      $region60: #{upblock_forward.7} parent=55 // pred_fallthru
        _
    $region56: #{upblock_forward.7} parent=5 // pred_fallthru
      _
  $region6: #{upblock_forward.7} parent=0 // loop_footer
    %s17 = sadd.s32 1, %s13
  $region7: #{upblock_forward.7} parent=0 // loop_footer_branch
    %12 = sbr.rel target = $region3
  $region8: #{upblock_forward.7} parent=0 // loop_exit
    _

</llo_original>
